<compile_context>
chip_gen: v7x
topology: tpu7x:2x2x1
jax: 0.10.0
libtpu: 0.0.40
codegen_flags: <defaults>
</compile_context>

<pallas_src>
import functools
import math

import numpy as np
import jax
import jax.numpy as jnp
from jax import lax
from jax.experimental import pallas as pl
from jax.experimental.pallas import tpu as pltpu


# ---------------------------------------------------------------------------
# helpers (glue, deterministic constants)
# ---------------------------------------------------------------------------
def construct_plane_grid(xbound, ybound, height):
    """Returns plane of shape (num_y, num_x, 3) -> (bH, bW, 3)."""
    num_x = int((xbound[1] - xbound[0]) / xbound[2])
    num_y = int((ybound[1] - ybound[0]) / ybound[2])
    x = np.linspace(xbound[0], xbound[1], num_x, dtype=np.float32)
    y = np.linspace(ybound[0], ybound[1], num_y, dtype=np.float32)
    yg, xg = np.meshgrid(y, x, indexing="ij")
    z = np.full_like(xg, height)
    return np.stack([xg, yg, z], axis=-1)


def _bilerp_matrix(out_size, in_size):
    """1-D bilinear interpolation matrix (align_corners=True)."""
    M = np.zeros((out_size, in_size), np.float32)
    if in_size == 1:
        M[:, 0] = 1.0
        return M
    for o in range(out_size):
        src = o * (in_size - 1) / (out_size - 1)
        i0 = min(int(np.floor(src)), in_size - 1)
        i1 = min(i0 + 1, in_size - 1)
        w1 = src - i0
        M[o, i0] += 1.0 - w1
        M[o, i1] += w1
    return M


# ---------------------------------------------------------------------------
# Kernel 1: fused UpsampleBlock (im2col conv3x3 + GN(32,C) + ReLU +
#           separable bilinear 2x upsample), whole N batch in one block.
# ---------------------------------------------------------------------------
def _upsample_block_kernel(N, H, W, Cin, Cout,
                           xpad_ref, w_ref, b_ref, g_ref, be_ref,
                           mh_ref, mw_ref, o_ref):
    OH, OW = 2 * H, 2 * W

    # im2col conv3x3: one MXU matmul with K = 9*Cin.
    cols = []
    for t in range(9):
        dy, dx = t // 3, t % 3
        cols.append(
            xpad_ref[:, dy:dy + H, dx:dx + W, :].reshape(N * H * W, Cin))
    pm = jnp.concatenate(cols, axis=1)                         # (NHW, 9*Cin)
    acc = jnp.dot(pm, w_ref[...],
                  preferred_element_type=jnp.float32)          # (NHW, Cout)
    acc = acc + b_ref[...]

    # GroupNorm(32, Cout) with Cout == 32 -> per-channel, per-sample stats.
    # TODO(synk): general grouped norm (Cout != 32) not implemented.
    x = acc.reshape(N, H * W, Cout)
    mean = jnp.mean(x, axis=1, keepdims=True)
    var = jnp.mean((x - mean) ** 2, axis=1, keepdims=True)
    x = (x - mean) * lax.rsqrt(var + 1e-5)
    x = x * g_ref[...] + be_ref[...]
    x = jnp.maximum(x, 0.0)                                    # (N, H*W, Cout)

    # Bilinear 2x upsample (align_corners=True) as two separable matmuls:
    #   up[n, oh, ow, c] = sum_{h,w} Mh[oh,h] * Mw[ow,w] * x[n,h,w,c]
    xw = x.reshape(N * H, W, Cout)
    mw = jnp.broadcast_to(mw_ref[...], (N * H, OW, W))
    y1 = lax.dot_general(mw, xw,
                         dimension_numbers=(((2,), (1,)), ((0,), (0,))),
                         preferred_element_type=jnp.float32)   # (N*H, OW, C)
    yh = y1.reshape(N, H, OW * Cout)
    mh = jnp.broadcast_to(mh_ref[...], (N, OH, H))
    y2 = lax.dot_general(mh, yh,
                         dimension_numbers=(((2,), (1,)), ((0,), (0,))),
                         preferred_element_type=jnp.float32)   # (N, OH, OW*C)
    o_ref[...] = y2.reshape(N, OH, OW, Cout).astype(o_ref.dtype)


def upsample_block(x, w, b, gamma, beta):
    """x: (N, H, W, Cin) -> (N, 2H, 2W, Cout)."""
    N, H, W, Cin = x.shape
    Cout = w.shape[-1]
    assert Cout == 32, "GroupNorm(32, C) implemented here for C == 32"
    OH, OW = 2 * H, 2 * W
    # TODO(synk): at production feature sizes express the halo via BlockSpec
    # overlap instead of a wrapper-side jnp.pad.
    xpad = jnp.pad(x, ((0, 0), (1, 1), (1, 1), (0, 0)))
    w2 = w.reshape(9 * Cin, Cout)
    mh = jnp.asarray(_bilerp_matrix(OH, H))
    mw = jnp.asarray(_bilerp_matrix(OW, W))
    kernel = functools.partial(_upsample_block_kernel, N, H, W, Cin, Cout)
    return pl.pallas_call(
        kernel,
        out_shape=jax.ShapeDtypeStruct((N, OH, OW, Cout), jnp.float32),
        grid=(1,),
        in_specs=[
            pl.BlockSpec((N, H + 2, W + 2, Cin), lambda i: (0, 0, 0, 0)),
            pl.BlockSpec((9 * Cin, Cout), lambda i: (0, 0)),
            pl.BlockSpec((1, Cout), lambda i: (0, 0)),
            pl.BlockSpec((1, 1, Cout), lambda i: (0, 0, 0)),
            pl.BlockSpec((1, 1, Cout), lambda i: (0, 0, 0)),
            pl.BlockSpec((OH, H), lambda i: (0, 0)),
            pl.BlockSpec((OW, W), lambda i: (0, 0)),
        ],
        out_specs=pl.BlockSpec((N, OH, OW, Cout), lambda i: (0, 0, 0, 0)),
        compiler_params=pltpu.CompilerParams(
            dimension_semantics=("arbitrary",)),
    )(xpad, w2, b.reshape(1, Cout), gamma.reshape(1, 1, Cout),
      beta.reshape(1, 1, Cout), mh, mw)


# ---------------------------------------------------------------------------
# Kernel 2: conv3x3 (pad=1) for outconvs -- im2col, whole batch in one block.
# ---------------------------------------------------------------------------
def _conv3x3_kernel(N, H, W, Cin, Cout, xpad_ref, w_ref, b_ref, o_ref):
    cols = []
    for t in range(9):
        dy, dx = t // 3, t % 3
        cols.append(
            xpad_ref[:, dy:dy + H, dx:dx + W, :].reshape(N * H * W, Cin))
    pm = jnp.concatenate(cols, axis=1)                         # (NHW, 9*Cin)
    acc = jnp.dot(pm, w_ref[...],
                  preferred_element_type=jnp.float32) + b_ref[...]
    o_ref[...] = acc.reshape(N, H, W, Cout).astype(o_ref.dtype)


def conv3x3(x, w, b):
    """x: (N, H, W, Cin) -> (N, H, W, Cout)."""
    N, H, W, Cin = x.shape
    Cout = w.shape[-1]
    xpad = jnp.pad(x, ((0, 0), (1, 1), (1, 1), (0, 0)))
    w2 = w.reshape(9 * Cin, Cout)
    kernel = functools.partial(_conv3x3_kernel, N, H, W, Cin, Cout)
    return pl.pallas_call(
        kernel,
        out_shape=jax.ShapeDtypeStruct((N, H, W, Cout), jnp.float32),
        grid=(1,),
        in_specs=[
            pl.BlockSpec((N, H + 2, W + 2, Cin), lambda i: (0, 0, 0, 0)),
            pl.BlockSpec((9 * Cin, Cout), lambda i: (0, 0)),
            pl.BlockSpec((1, Cout), lambda i: (0, 0)),
        ],
        out_specs=pl.BlockSpec((N, H, W, Cout), lambda i: (0, 0, 0, 0)),
        compiler_params=pltpu.CompilerParams(
            dimension_semantics=("arbitrary",)),
    )(xpad, w2, b.reshape(1, Cout))


# ---------------------------------------------------------------------------
# Kernel 3: IPM sampling -- one-hot sampling matrix @ camera features,
#           masked sum accumulated over cameras in a resident output block.
#           (get_campos + grid_sample coordinate math precomputed in XLA.)
# ---------------------------------------------------------------------------
def _ipm_kernel(P, idx_ref, wgt_ref, feat_ref, o_ref):
    cam = pl.program_id(1)
    idx = idx_ref[0, 0]                                        # (Q, 4) int32
    wgt = wgt_ref[0, 0]                                        # (Q, 4) f32
    Q = idx.shape[0]

    col = lax.broadcasted_iota(jnp.int32, (Q, P), 1)
    S = jnp.zeros((Q, P), jnp.float32)
    for t in range(4):
        S = S + jnp.where(col == idx[:, t:t + 1], wgt[:, t:t + 1], 0.0)

    sampled = jnp.dot(S, feat_ref[0, 0],
                      preferred_element_type=jnp.float32)      # (Q, Cpad)

    @pl.when(cam == 0)
    def _():
        o_ref[0] = sampled.astype(o_ref.dtype)

    @pl.when(cam != 0)
    def _():
        o_ref[0] = o_ref[0] + sampled.astype(o_ref.dtype)


def _precompute_taps(pts_hom, ego2img, img_h, img_w, cH, cW):
    """get_campos + grid_sample coordinate math, vectorized in XLA."""
    campts = jnp.einsum("bnij,qj->bnqi", ego2img, pts_hom)     # (B,ncam,Q,4)
    eps = 1e-9
    xc, yc, zc = campts[..., 0], campts[..., 1], campts[..., 2]
    mask = zc > eps
    u = xc / zc + eps
    v = yc / zc + eps
    u = (u / img_w - 0.5) * 2.0
    v = (v / img_h - 0.5) * 2.0
    mask = mask & (u > -1.0) & (u < 1.0) & (v > -1.0) & (v < 1.0)
    m = mask.astype(jnp.float32)                               # (B, ncam, Q)

    # grid_sample: bilinear, align_corners=False, padding_mode='zeros'
    ix = ((u + 1.0) * cW - 1.0) * 0.5
    iy = ((v + 1.0) * cH - 1.0) * 0.5
    ix = jnp.clip(jnp.where(jnp.isnan(ix), -2.0, ix), -2.0, cW + 1.0)
    iy = jnp.clip(jnp.where(jnp.isnan(iy), -2.0, iy), -2.0, cH + 1.0)
    x0 = jnp.floor(ix)
    y0 = jnp.floor(iy)
    wx1 = ix - x0
    wy1 = iy - y0

    idxs, wgts = [], []
    for (yy, xx, wy, wx) in ((y0, x0, 1.0 - wy1, 1.0 - wx1),
                             (y0, x0 + 1.0, 1.0 - wy1, wx1),
                             (y0 + 1.0, x0, wy1, 1.0 - wx1),
                             (y0 + 1.0, x0 + 1.0, wy1, wx1)):
        valid = ((xx >= 0.0) & (xx <= cW - 1.0) &
                 (yy >= 0.0) & (yy <= cH - 1.0)).astype(jnp.float32)
        xi = jnp.clip(xx, 0.0, cW - 1.0).astype(jnp.int32)
        yi = jnp.clip(yy, 0.0, cH - 1.0).astype(jnp.int32)
        idxs.append(yi * cW + xi)
        wgts.append(wy * wx * valid * m)                       # mask folded in
    idx = jnp.stack(idxs, axis=-1)                             # (B,ncam,Q,4)
    wgt = jnp.stack(wgts, axis=-1)                             # (B,ncam,Q,4)
    cnt = jnp.sum(m, axis=1)                                   # (B, Q)
    return idx, wgt, cnt


def ipm_project(pts_hom, ego2img, cam_feat_flat, img_shape, cH, cW):
    """pts_hom (Q,4), ego2img (B,ncam,4,4), cam_feat_flat (B,ncam,P,C) -> (B,Q,C)."""
    B, ncam, P, C = cam_feat_flat.shape
    Q = pts_hom.shape[0]
    Cpad = ((C + 127) // 128) * 128                            # lane-dense out
    feat = cam_feat_flat
    if Cpad != C:
        feat = jnp.pad(feat, ((0, 0), (0, 0), (0, 0), (0, Cpad - C)))

    idx, wgt, cnt = _precompute_taps(
        pts_hom, ego2img, float(img_shape[0]), float(img_shape[1]), cH, cW)

    kernel = functools.partial(_ipm_kernel, P)
    acc = pl.pallas_call(
        kernel,
        out_shape=jax.ShapeDtypeStruct((B, Q, Cpad), jnp.float32),
        grid=(B, ncam),
        in_specs=[
            pl.BlockSpec((1, 1, Q, 4), lambda b, c: (b, c, 0, 0)),
            pl.BlockSpec((1, 1, Q, 4), lambda b, c: (b, c, 0, 0)),
            pl.BlockSpec((1, 1, P, Cpad), lambda b, c: (b, c, 0, 0)),
        ],
        out_specs=pl.BlockSpec((1, Q, Cpad), lambda b, c: (b, 0, 0)),
        compiler_params=pltpu.CompilerParams(
            dimension_semantics=("parallel", "arbitrary")),
    )(idx, wgt, feat)

    denom = jnp.where(cnt == 0.0, 1.0, cnt)                    # masked_fill(0->1)
    return acc[:, :, :C] / denom[:, :, None]


# ---------------------------------------------------------------------------
# IPMEncoder forward (wrapper / glue)
# ---------------------------------------------------------------------------
def ipm_encoder_forward(imgs, ego2img, params, cfg):
    """imgs: (B, ncam, 3, iH, iW) float32, ego2img: (B, ncam, 4, 4)."""
    B, ncam, _, iH, iW = imgs.shape
    x = jnp.transpose(imgs.reshape(B * ncam, 3, iH, iW), (0, 2, 3, 1))  # NHWC

    # TODO(synk): stand-in for config-built img_backbone + img_neck (FPN).
    feat_hw = cfg["feat_hw"]
    feats = []
    for i, s in enumerate(cfg["zoom_size"]):
        pool = iH * s // feat_hw
        h, w = iH // pool, iW // pool
        pooled = x.reshape(B * ncam, h, pool, w, pool, 3).mean(axis=(2, 4))
        feats.append(jnp.einsum("nhwc,cd->nhwd", pooled, params["neck_w"][i])
                     + params["neck_b"][i])

    # Upsample module: per-scale UpsampleBlock chains, then sum.
    ups = []
    for i in range(len(cfg["zoom_size"])):
        t = feats[i]
        for blk in params["fscale"][i]:
            t = upsample_block(t, *blk)
        ups.append(t)
    img_feat = sum(ups)                                        # (B*ncam, cH, cW, C)
    cH, cW, C = img_feat.shape[1], img_feat.shape[2], img_feat.shape[3]

    # IPM: project BEV plane grid into every camera, sample, masked-mean.
    bev = cfg["bev_planes"]                                    # (nlvl, bH, bW, 3)
    nlvl, bH, bW, _ = bev.shape
    Q = nlvl * bH * bW
    pts = jnp.asarray(bev.reshape(Q, 3), jnp.float32)
    pts_hom = jnp.concatenate([pts, jnp.ones((Q, 1), jnp.float32)], axis=-1)
    cam_feat_flat = img_feat.reshape(B, ncam, cH * cW, C)
    proj = ipm_project(pts_hom, jnp.asarray(ego2img, jnp.float32),
                       cam_feat_flat, (iH, iW), cH, cW)        # (B, Q, C)
    proj = proj.reshape(B, nlvl, bH, bW, C)

    # concat BEV xyz (torch: cat along channel dim), then flatten(1,2):
    # channel index = c * nlvl + lvl
    bev_xyz = jnp.broadcast_to(jnp.asarray(bev, jnp.float32),
                               (B, nlvl, bH, bW, 3))
    feat = jnp.concatenate([proj, bev_xyz], axis=-1)           # (B,nlvl,bH,bW,C+3)
    feat = jnp.transpose(feat, (0, 2, 3, 4, 1)).reshape(
        B, bH, bW, (C + 3) * nlvl)

    out = conv3x3(feat, params["outconv_w"], params["outconv_b"])
    return out                                                 # (B, bH, bW, out_ch)


# ---------------------------------------------------------------------------
# deterministic parameter init + example inputs
# ---------------------------------------------------------------------------
def init_params(key, cfg):
    C = cfg["up_channels"]
    keys = jax.random.split(key, 64)
    ki = iter(keys)

    def conv_w(cin, cout):
        return jax.random.normal(next(ki), (9, cin, cout), jnp.float32) * 0.05

    params = {}
    params["neck_w"] = [jax.random.normal(next(ki), (3, C), jnp.float32) * 0.1
                        for _ in cfg["zoom_size"]]
    params["neck_b"] = [jnp.zeros((C,), jnp.float32) for _ in cfg["zoom_size"]]

    fscale = []
    for s in cfg["zoom_size"]:
        n_layers = int(math.log2(s))
        blocks = []
        for _ in range(max(n_layers, 0)):
            blocks.append((conv_w(C, C),
                           jnp.zeros((C,), jnp.float32),    # conv bias (init 0)
                           jnp.ones((C,), jnp.float32),     # GN gamma
                           jnp.zeros((C,), jnp.float32)))   # GN beta
        fscale.append(blocks)
    params["fscale"] = fscale

    nlvl = len(cfg["heights"])
    params["outconv_w"] = conv_w((C + 3) * nlvl, cfg["out_channels"])
    params["outconv_b"] = jnp.zeros((cfg["out_channels"],), jnp.float32)
    return params


def make_ego2img(B, ncam, iH, iW):
    fx = fy = 8.0
    cx, cy = iW / 2.0, iH / 2.0
    K = np.array([[fx, 0, cx, 0], [0, fy, cy, 0],
                  [0, 0, 1, 0], [0, 0, 0, 1]], np.float32)
    mats = []
    for c in range(ncam):
        yaw = 2.0 * np.pi * c / ncam
        fwd = np.array([np.cos(yaw), np.sin(yaw), 0.0])
        left = np.array([-np.sin(yaw), np.cos(yaw), 0.0])
        up = np.array([0.0, 0.0, 1.0])
        R = np.stack([-left, -up, fwd], axis=0)   # ego -> cam rotation
        t = np.array([0.0, 0.0, 1.5])
        ext = np.eye(4, dtype=np.float32)
        ext[:3, :3] = R
        ext[:3, 3] = -R @ t
        mats.append(K @ ext)
    e = np.stack(mats, 0).astype(np.float32)
    return np.broadcast_to(e, (B, ncam, 4, 4)).astype(np.float32)


if __name__ == "__main__":
    cfg = dict(
        xbound=[-8.0, 8.0, 1.0],
        ybound=[-8.0, 8.0, 1.0],
        heights=[-1.1, 0.0, 0.5, 1.1],
        zoom_size=(2, 4),
        up_channels=32,     # Upsample out_channels (GroupNorm(32, 32))
        out_channels=64,    # IPMEncoder out_channels
        feat_hw=16,         # camera feature resolution after Upsample
    )
    cfg["bev_planes"] = np.stack(
        [construct_plane_grid(cfg["xbound"], cfg["ybound"], h)
         for h in cfg["heights"]])                       # (nlvl, bH, bW, 3)

    B, ncam, iH, iW = 1, 2, 32, 32
    key = jax.random.PRNGKey(0)
    k_img, k_par = jax.random.split(key)
    imgs = jax.random.normal(k_img, (B, ncam, 3, iH, iW), jnp.float32)
    ego2img = make_ego2img(B, ncam, iH, iW)
    params = init_params(k_par, cfg)

    out = ipm_encoder_forward(imgs, ego2img, params, cfg)
    out = jax.block_until_ready(out)
    assert out.shape == (B, 16, 16, cfg["out_channels"]), out.shape
    assert bool(jnp.all(jnp.isfinite(out)))
    print("KERNEL_OK")
</pallas_src>

<mosaic_0001>
module attributes {stable_mosaic.version = 11 : i64} {
  func.func @_upsample_block_kernel(%arg0: i32, %arg1: memref<2x10x10x32xf32, #tpu.memory_space<vmem>>, %arg2: memref<288x32xf32, #tpu.memory_space<vmem>>, %arg3: memref<1x32xf32, #tpu.memory_space<vmem>>, %arg4: memref<1x1x32xf32, #tpu.memory_space<vmem>>, %arg5: memref<1x1x32xf32, #tpu.memory_space<vmem>>, %arg6: memref<16x8xf32, #tpu.memory_space<vmem>>, %arg7: memref<16x8xf32, #tpu.memory_space<vmem>>, %arg8: memref<2x16x16x32xf32, #tpu.memory_space<vmem>>) attributes {dimension_semantics = [#tpu.dimension_semantics<arbitrary>], iteration_bounds = array<i64: 1>, scalar_prefetch = 0 : i64, scratch_operands = 0 : i64, tpu.core_type = #tpu.core_type<tc>, window_params = [{pipeline_mode = #tpu.pipeline_mode<synchronous>, transform_indices = @transform_0, window_bounds = array<i64: 2, 10, 10, 32>}, {pipeline_mode = #tpu.pipeline_mode<synchronous>, transform_indices = @transform_1, window_bounds = array<i64: 288, 32>}, {pipeline_mode = #tpu.pipeline_mode<synchronous>, transform_indices = @transform_2, window_bounds = array<i64: 1, 32>}, {pipeline_mode = #tpu.pipeline_mode<synchronous>, transform_indices = @transform_3, window_bounds = array<i64: 1, 1, 32>}, {pipeline_mode = #tpu.pipeline_mode<synchronous>, transform_indices = @transform_4, window_bounds = array<i64: 1, 1, 32>}, {pipeline_mode = #tpu.pipeline_mode<synchronous>, transform_indices = @transform_5, window_bounds = array<i64: 16, 8>}, {pipeline_mode = #tpu.pipeline_mode<synchronous>, transform_indices = @transform_6, window_bounds = array<i64: 16, 8>}, {pipeline_mode = #tpu.pipeline_mode<synchronous>, transform_indices = @transform_7, window_bounds = array<i64: 2, 16, 16, 32>}]} {
    %c0 = arith.constant 0 : index
    %c0_0 = arith.constant 0 : index
    %c0_1 = arith.constant 0 : index
    %c0_2 = arith.constant 0 : index
    %0 = vector.load %arg1[%c0, %c0_0, %c0_1, %c0_2] : memref<2x10x10x32xf32, #tpu.memory_space<vmem>>, vector<2x8x8x32xf32>
    %1 = vector.shape_cast %0 : vector<2x8x8x32xf32> to vector<128x32xf32>
    %c0_3 = arith.constant 0 : index
    %c0_4 = arith.constant 0 : index
    %c1 = arith.constant 1 : index
    %c0_5 = arith.constant 0 : index
    %2 = vector.load %arg1[%c0_3, %c0_4, %c1, %c0_5] : memref<2x10x10x32xf32, #tpu.memory_space<vmem>>, vector<2x8x8x32xf32>
    %3 = vector.shape_cast %2 : vector<2x8x8x32xf32> to vector<128x32xf32>
    %c0_6 = arith.constant 0 : index
    %c0_7 = arith.constant 0 : index
    %c2 = arith.constant 2 : index
    %c0_8 = arith.constant 0 : index
    %4 = vector.load %arg1[%c0_6, %c0_7, %c2, %c0_8] : memref<2x10x10x32xf32, #tpu.memory_space<vmem>>, vector<2x8x8x32xf32>
    %5 = vector.shape_cast %4 : vector<2x8x8x32xf32> to vector<128x32xf32>
    %c0_9 = arith.constant 0 : index
    %c1_10 = arith.constant 1 : index
    %c0_11 = arith.constant 0 : index
    %c0_12 = arith.constant 0 : index
    %6 = vector.load %arg1[%c0_9, %c1_10, %c0_11, %c0_12] : memref<2x10x10x32xf32, #tpu.memory_space<vmem>>, vector<2x8x8x32xf32>
    %7 = vector.shape_cast %6 : vector<2x8x8x32xf32> to vector<128x32xf32>
    %c0_13 = arith.constant 0 : index
    %c1_14 = arith.constant 1 : index
    %c1_15 = arith.constant 1 : index
    %c0_16 = arith.constant 0 : index
    %8 = vector.load %arg1[%c0_13, %c1_14, %c1_15, %c0_16] : memref<2x10x10x32xf32, #tpu.memory_space<vmem>>, vector<2x8x8x32xf32>
    %9 = vector.shape_cast %8 : vector<2x8x8x32xf32> to vector<128x32xf32>
    %c0_17 = arith.constant 0 : index
    %c1_18 = arith.constant 1 : index
    %c2_19 = arith.constant 2 : index
    %c0_20 = arith.constant 0 : index
    %10 = vector.load %arg1[%c0_17, %c1_18, %c2_19, %c0_20] : memref<2x10x10x32xf32, #tpu.memory_space<vmem>>, vector<2x8x8x32xf32>
    %11 = vector.shape_cast %10 : vector<2x8x8x32xf32> to vector<128x32xf32>
    %c0_21 = arith.constant 0 : index
    %c2_22 = arith.constant 2 : index
    %c0_23 = arith.constant 0 : index
    %c0_24 = arith.constant 0 : index
    %12 = vector.load %arg1[%c0_21, %c2_22, %c0_23, %c0_24] : memref<2x10x10x32xf32, #tpu.memory_space<vmem>>, vector<2x8x8x32xf32>
    %13 = vector.shape_cast %12 : vector<2x8x8x32xf32> to vector<128x32xf32>
    %c0_25 = arith.constant 0 : index
    %c2_26 = arith.constant 2 : index
    %c1_27 = arith.constant 1 : index
    %c0_28 = arith.constant 0 : index
    %14 = vector.load %arg1[%c0_25, %c2_26, %c1_27, %c0_28] : memref<2x10x10x32xf32, #tpu.memory_space<vmem>>, vector<2x8x8x32xf32>
    %15 = vector.shape_cast %14 : vector<2x8x8x32xf32> to vector<128x32xf32>
    %c0_29 = arith.constant 0 : index
    %c2_30 = arith.constant 2 : index
    %c2_31 = arith.constant 2 : index
    %c0_32 = arith.constant 0 : index
    %16 = vector.load %arg1[%c0_29, %c2_30, %c2_31, %c0_32] : memref<2x10x10x32xf32, #tpu.memory_space<vmem>>, vector<2x8x8x32xf32>
    %17 = vector.shape_cast %16 : vector<2x8x8x32xf32> to vector<128x32xf32>
    %18 = tpu.concatenate %1, %3, %5, %7, %9, %11, %13, %15, %17 in 1 : vector<128x32xf32>, vector<128x32xf32>, vector<128x32xf32>, vector<128x32xf32>, vector<128x32xf32>, vector<128x32xf32>, vector<128x32xf32>, vector<128x32xf32>, vector<128x32xf32> -> vector<128x288xf32>
    %c0_33 = arith.constant 0 : index
    %c0_34 = arith.constant 0 : index
    %19 = vector.load %arg2[%c0_33, %c0_34] : memref<288x32xf32, #tpu.memory_space<vmem>>, vector<288x32xf32>
    %cst = arith.constant dense<0.000000e+00> : vector<128x32xf32>
    %20 = tpu.matmul %18, %19, %cst {dimension_numbers = #tpu.dot_dimension_numbers<[1], [0], [0], [1], [0, 0, 1, 1], [], []>} : vector<128x288xf32>, vector<288x32xf32>, vector<128x32xf32> -> vector<128x32xf32>
    %c0_35 = arith.constant 0 : index
    %c0_36 = arith.constant 0 : index
    %21 = vector.load %arg3[%c0_35, %c0_36] : memref<1x32xf32, #tpu.memory_space<vmem>>, vector<1x32xf32>
    %22 = vector.broadcast %21 : vector<1x32xf32> to vector<128x32xf32>
    %23 = arith.addf %20, %22 : vector<128x32xf32>
    %24 = vector.shape_cast %23 : vector<128x32xf32> to vector<2x64x32xf32>
    %cst_37 = arith.constant dense<0.000000e+00> : vector<2x32xf32>
    %25 = vector.multi_reduction <add>, %24, %cst_37 [1] : vector<2x64x32xf32> to vector<2x32xf32>
    %26 = vector.shape_cast %25 : vector<2x32xf32> to vector<2x1x32xf32>
    %cst_38 = arith.constant 6.400000e+01 : f32
    %27 = vector.broadcast %cst_38 : f32 to vector<2x1x32xf32>
    %28 = arith.divf %26, %27 : vector<2x1x32xf32>
    %29 = vector.broadcast %28 : vector<2x1x32xf32> to vector<2x64x32xf32>
    %30 = arith.subf %24, %29 : vector<2x64x32xf32>
    %31 = arith.mulf %30, %30 : vector<2x64x32xf32>
    %cst_39 = arith.constant dense<0.000000e+00> : vector<2x32xf32>
    %32 = vector.multi_reduction <add>, %31, %cst_39 [1] : vector<2x64x32xf32> to vector<2x32xf32>
    %33 = vector.shape_cast %32 : vector<2x32xf32> to vector<2x1x32xf32>
    %cst_40 = arith.constant 6.400000e+01 : f32
    %34 = vector.broadcast %cst_40 : f32 to vector<2x1x32xf32>
    %35 = arith.divf %33, %34 : vector<2x1x32xf32>
    %36 = vector.broadcast %28 : vector<2x1x32xf32> to vector<2x64x32xf32>
    %37 = arith.subf %24, %36 : vector<2x64x32xf32>
    %cst_41 = arith.constant 9.99999974E-6 : f32
    %38 = vector.broadcast %cst_41 : f32 to vector<2x1x32xf32>
    %39 = arith.addf %35, %38 : vector<2x1x32xf32>
    %40 = math.rsqrt %39 : vector<2x1x32xf32>
    %41 = vector.broadcast %40 : vector<2x1x32xf32> to vector<2x64x32xf32>
    %42 = arith.mulf %37, %41 : vector<2x64x32xf32>
    %c0_42 = arith.constant 0 : index
    %c0_43 = arith.constant 0 : index
    %c0_44 = arith.constant 0 : index
    %43 = vector.load %arg4[%c0_42, %c0_43, %c0_44] : memref<1x1x32xf32, #tpu.memory_space<vmem>>, vector<1x1x32xf32>
    %44 = vector.broadcast %43 : vector<1x1x32xf32> to vector<2x64x32xf32>
    %45 = arith.mulf %42, %44 : vector<2x64x32xf32>
    %c0_45 = arith.constant 0 : index
    %c0_46 = arith.constant 0 : index
    %c0_47 = arith.constant 0 : index
    %46 = vector.load %arg5[%c0_45, %c0_46, %c0_47] : memref<1x1x32xf32, #tpu.memory_space<vmem>>, vector<1x1x32xf32>
    %47 = vector.broadcast %46 : vector<1x1x32xf32> to vector<2x64x32xf32>
    %48 = arith.addf %45, %47 : vector<2x64x32xf32>
    %cst_48 = arith.constant 0.000000e+00 : f32
    %49 = vector.broadcast %cst_48 : f32 to vector<2x64x32xf32>
    %50 = arith.maximumf %48, %49 : vector<2x64x32xf32>
    %51 = vector.shape_cast %50 : vector<2x64x32xf32> to vector<16x8x32xf32>
    %c0_49 = arith.constant 0 : index
    %c0_50 = arith.constant 0 : index
    %52 = vector.load %arg7[%c0_49, %c0_50] : memref<16x8xf32, #tpu.memory_space<vmem>>, vector<16x8xf32>
    %53 = vector.shape_cast %52 : vector<16x8xf32> to vector<1x16x8xf32>
    %54 = vector.broadcast %53 : vector<1x16x8xf32> to vector<16x16x8xf32>
    %cst_51 = arith.constant dense<0.000000e+00> : vector<16x16x32xf32>
    %55 = tpu.matmul %54, %51, %cst_51 {dimension_numbers = #tpu.dot_dimension_numbers<[2], [1], [1], [2], [0, 0, 0, 1, 1, 2], [0], [0]>} : vector<16x16x8xf32>, vector<16x8x32xf32>, vector<16x16x32xf32> -> vector<16x16x32xf32>
    %56 = vector.shape_cast %55 : vector<16x16x32xf32> to vector<2x8x512xf32>
    %c0_52 = arith.constant 0 : index
    %c0_53 = arith.constant 0 : index
    %57 = vector.load %arg6[%c0_52, %c0_53] : memref<16x8xf32, #tpu.memory_space<vmem>>, vector<16x8xf32>
    %58 = vector.shape_cast %57 : vector<16x8xf32> to vector<1x16x8xf32>
    %59 = vector.broadcast %58 : vector<1x16x8xf32> to vector<2x16x8xf32>
    %cst_54 = arith.constant dense<0.000000e+00> : vector<2x16x512xf32>
    %60 = tpu.matmul %59, %56, %cst_54 {dimension_numbers = #tpu.dot_dimension_numbers<[2], [1], [1], [2], [0, 0, 0, 1, 1, 2], [0], [0]>} : vector<2x16x8xf32>, vector<2x8x512xf32>, vector<2x16x512xf32> -> vector<2x16x512xf32>
    %61 = vector.shape_cast %60 : vector<2x16x512xf32> to vector<2x16x16x32xf32>
    %c0_55 = arith.constant 0 : index
    %c0_56 = arith.constant 0 : index
    %c0_57 = arith.constant 0 : index
    %c0_58 = arith.constant 0 : index
    %62 = vector.load %arg8[%c0_55, %c0_56, %c0_57, %c0_58] : memref<2x16x16x32xf32, #tpu.memory_space<vmem>>, vector<2x16x16x32xf32>
    tpu.vector_store %arg8[%c0_55, %c0_56, %c0_57, %c0_58], %61 {strides = array<i32>} : memref<2x16x16x32xf32, #tpu.memory_space<vmem>>, vector<2x16x16x32xf32>,
    return
  }
  func.func @transform_0(%arg0: i32) -> (i32, i32, i32, i32) {
    %c0_i32 = arith.constant 0 : i32
    %c0_i32_0 = arith.constant 0 : i32
    %c0_i32_1 = arith.constant 0 : i32
    %c0_i32_2 = arith.constant 0 : i32
    %c0_i32_3 = arith.constant 0 : i32
    return %c0_i32, %c0_i32_0, %c0_i32_1, %c0_i32_2 : i32, i32, i32, i32
  }
  func.func @transform_1(%arg0: i32) -> (i32, i32) {
    %c0_i32 = arith.constant 0 : i32
    %c0_i32_0 = arith.constant 0 : i32
    %c0_i32_1 = arith.constant 0 : i32
    return %c0_i32, %c0_i32_0 : i32, i32
  }
  func.func @transform_2(%arg0: i32) -> (i32, i32) {
    %c0_i32 = arith.constant 0 : i32
    %c0_i32_0 = arith.constant 0 : i32
    %c0_i32_1 = arith.constant 0 : i32
    return %c0_i32, %c0_i32_0 : i32, i32
  }
  func.func @transform_3(%arg0: i32) -> (i32, i32, i32) {
    %c0_i32 = arith.constant 0 : i32
    %c0_i32_0 = arith.constant 0 : i32
    %c0_i32_1 = arith.constant 0 : i32
    %c0_i32_2 = arith.constant 0 : i32
    return %c0_i32, %c0_i32_0, %c0_i32_1 : i32, i32, i32
  }
  func.func @transform_4(%arg0: i32) -> (i32, i32, i32) {
    %c0_i32 = arith.constant 0 : i32
    %c0_i32_0 = arith.constant 0 : i32
    %c0_i32_1 = arith.constant 0 : i32
    %c0_i32_2 = arith.constant 0 : i32
    return %c0_i32, %c0_i32_0, %c0_i32_1 : i32, i32, i32
  }
  func.func @transform_5(%arg0: i32) -> (i32, i32) {
    %c0_i32 = arith.constant 0 : i32
    %c0_i32_0 = arith.constant 0 : i32
    %c0_i32_1 = arith.constant 0 : i32
    return %c0_i32, %c0_i32_0 : i32, i32
  }
  func.func @transform_6(%arg0: i32) -> (i32, i32) {
    %c0_i32 = arith.constant 0 : i32
    %c0_i32_0 = arith.constant 0 : i32
    %c0_i32_1 = arith.constant 0 : i32
    return %c0_i32, %c0_i32_0 : i32, i32
  }
  func.func @transform_7(%arg0: i32) -> (i32, i32, i32, i32) {
    %c0_i32 = arith.constant 0 : i32
    %c0_i32_0 = arith.constant 0 : i32
    %c0_i32_1 = arith.constant 0 : i32
    %c0_i32_2 = arith.constant 0 : i32
    %c0_i32_3 = arith.constant 0 : i32
    return %c0_i32, %c0_i32_0, %c0_i32_1, %c0_i32_2 : i32, i32, i32, i32
  }
}

</mosaic_0001>

<llo_original>
// kernel: tpu_custom_call.1
$region0: #{tpu_custom_call.1}
  #allocation0 [shape = 'u32[]', space=smem, size = 0x4, offset = 0x4, fixed_abs, tag = 'smem constant byte address 0x4 - core index']
  #allocation1 [shape = 'u32[144,128]{1,0:T(1,128)}', space=vmem, size = 0x12000, scoped, tag = 'internal scratch']
  %s0 = inlined_call_operand.vmem [shape: f32[2,10,10,32], index: 0, kind: input, shape index: {}]
  %s1 = inlined_call_operand.vmem [shape: f32[288,32], index: 1, kind: input, shape index: {}]
  %s2 = inlined_call_operand.vmem [shape: f32[1,32], index: 2, kind: input, shape index: {}]
  %s3 = inlined_call_operand.vmem [shape: f32[1,1,32], index: 3, kind: input, shape index: {}]
  %s4 = inlined_call_operand.vmem [shape: f32[1,1,32], index: 4, kind: input, shape index: {}]
  %s5 = inlined_call_operand.vmem [shape: f32[16,8], index: 5, kind: input, shape index: {}]
  %s6 = inlined_call_operand.vmem [shape: f32[16,8], index: 6, kind: input, shape index: {}]
  %s7 = inlined_call_operand.hbm [shape: f32[2,16,16,32], index: 7, kind: output, shape index: {}]
  %s8 = sld [smem:[#allocation0]]
  $region38: #{tpu_custom_call.1} parent=0
    _
  %s10 = ssub.s32 1, %s8
  %s11 = scalar_select 0, %s10, %s8
  $region1: #{tpu_custom_call.1} parent=0
    #allocation2 [shape = 'u8[262144]{0}', space=vmem, size = 0x40000, scoped, tag = 'output window, operand 0, single buffered']
    #allocation3 [shape = 's32[1]{0}', space=sflag, size = 0x4, scoped, tag = 'scoped memory for tpu_custom_call.1']
    %12 = vsyncpa [#allocation3], 0
    // Predicated region
    $region2: #{tpu_custom_call.1} parent=1 // pred_check
      _
    $region3: #{tpu_custom_call.1} parent=1 // pred_check_branch
      %14 = sbr.rel (0) target = $region5
    $region4: #{tpu_custom_call.1} parent=1 // pred_region
      _
    $region5: #{tpu_custom_call.1} parent=1 // pred_fallthru
      _
    // Predicated region
    $region6: #{tpu_custom_call.1} parent=1 // pred_check
      _
    $region7: #{tpu_custom_call.1} parent=1 // pred_check_branch
      %16 = sbr.rel (0) target = $region9
    $region8: #{tpu_custom_call.1} parent=1 // pred_region
      _
    $region9: #{tpu_custom_call.1} parent=1 // pred_fallthru
      _
    // Predicated region
    $region10: #{tpu_custom_call.1} parent=1 // pred_check
      _
    $region11: #{tpu_custom_call.1} parent=1 // pred_check_branch
      %18 = sbr.rel (0) target = $region13
    $region12: #{tpu_custom_call.1} parent=1 // pred_region
      _
    $region13: #{tpu_custom_call.1} parent=1 // pred_fallthru
      _
    // Predicated region
    $region14: #{tpu_custom_call.1} parent=1 // pred_check
      _
    $region15: #{tpu_custom_call.1} parent=1 // pred_check_branch
      %20 = sbr.rel (0) target = $region17
    $region16: #{tpu_custom_call.1} parent=1 // pred_region
      _
    $region17: #{tpu_custom_call.1} parent=1 // pred_fallthru
      _
    // Predicated region
    $region18: #{tpu_custom_call.1} parent=1 // pred_check
      _
    $region19: #{tpu_custom_call.1} parent=1 // pred_check_branch
      %22 = sbr.rel (0) target = $region21
    $region20: #{tpu_custom_call.1} parent=1 // pred_region
      _
    $region21: #{tpu_custom_call.1} parent=1 // pred_fallthru
      _
    // Predicated region
    $region22: #{tpu_custom_call.1} parent=1 // pred_check
      _
    $region23: #{tpu_custom_call.1} parent=1 // pred_check_branch
      %24 = sbr.rel (0) target = $region25
    $region24: #{tpu_custom_call.1} parent=1 // pred_region
      _
    $region25: #{tpu_custom_call.1} parent=1 // pred_fallthru
      _
    // Predicated region
    $region26: #{tpu_custom_call.1} parent=1 // pred_check
      _
    $region27: #{tpu_custom_call.1} parent=1 // pred_check_branch
      %26 = sbr.rel (0) target = $region29
    $region28: #{tpu_custom_call.1} parent=1 // pred_region
      _
    $region29: #{tpu_custom_call.1} parent=1 // pred_fallthru
      _
    %v27 = vld [vmem:[%s0] sm:$0xff]
    %v28 = vld [vmem:[%s0 + $0x10] sm:$0xff]
    %v29 = vld [vmem:[%s0 + $0x20] sm:$0xff]
    %v30 = vld [vmem:[%s0 + $0x30] sm:$0xff]
    %v31 = vld [vmem:[%s0 + $0x40] sm:$0xff]
    %v32 = vld [vmem:[%s0 + $0x50] sm:$0xff]
    %v33 = vld [vmem:[%s0 + $0x60] sm:$0xff]
    %v34 = vld [vmem:[%s0 + $0x70] sm:$0xff]
    %v35 = vld [vmem:[%s0 + $0xa0] sm:$0xff]
    %v36 = vld [vmem:[%s0 + $0xb0] sm:$0xff]
    %v37 = vld [vmem:[%s0 + $0xc0] sm:$0xff]
    %v38 = vld [vmem:[%s0 + $0xd0] sm:$0xff]
    %v39 = vld [vmem:[%s0 + $0xe0] sm:$0xff]
    %v40 = vld [vmem:[%s0 + $0xf0] sm:$0xff]
    %v41 = vld [vmem:[%s0 + $0x100] sm:$0xff]
    %v42 = vld [vmem:[%s0 + $0x110] sm:$0xff]
    %v43 = vld [vmem:[%s0 + $0x1] sm:$0xff]
    %v44 = vld [vmem:[%s0 + $0x11] sm:$0xff]
    %v45 = vld [vmem:[%s0 + $0x21] sm:$0xff]
    %v46 = vld [vmem:[%s0 + $0x31] sm:$0xff]
    %v47 = vld [vmem:[%s0 + $0x41] sm:$0xff]
    %v48 = vld [vmem:[%s0 + $0x51] sm:$0xff]
    %v49 = vld [vmem:[%s0 + $0x61] sm:$0xff]
    %v50 = vld [vmem:[%s0 + $0x71] sm:$0xff]
    %v51 = vld [vmem:[%s0 + $0xa1] sm:$0xff]
    %v52 = vld [vmem:[%s0 + $0xb1] sm:$0xff]
    %v53 = vld [vmem:[%s0 + $0xc1] sm:$0xff]
    %v54 = vld [vmem:[%s0 + $0xd1] sm:$0xff]
    %v55 = vld [vmem:[%s0 + $0xe1] sm:$0xff]
    %v56 = vld [vmem:[%s0 + $0xf1] sm:$0xff]
    %v57 = vld [vmem:[%s0 + $0x101] sm:$0xff]
    %v58 = vld [vmem:[%s0 + $0x111] sm:$0xff]
    %v59 = vld [vmem:[%s0 + $0x2] sm:$0xff]
    %v60 = vld [vmem:[%s0 + $0x12] sm:$0xff]
    %v61 = vld [vmem:[%s0 + $0x22] sm:$0xff]
    %v62 = vld [vmem:[%s0 + $0x32] sm:$0xff]
    %v63 = vld [vmem:[%s0 + $0x42] sm:$0xff]
    %v64 = vld [vmem:[%s0 + $0x52] sm:$0xff]
    %v65 = vld [vmem:[%s0 + $0x62] sm:$0xff]
    %v66 = vld [vmem:[%s0 + $0x72] sm:$0xff]
    %v67 = vld [vmem:[%s0 + $0xa2] sm:$0xff]
    %v68 = vld [vmem:[%s0 + $0xb2] sm:$0xff]
    %v69 = vld [vmem:[%s0 + $0xc2] sm:$0xff]
    %v70 = vld [vmem:[%s0 + $0xd2] sm:$0xff]
    %v71 = vld [vmem:[%s0 + $0xe2] sm:$0xff]
    %v72 = vld [vmem:[%s0 + $0xf2] sm:$0xff]
    %v73 = vld [vmem:[%s0 + $0x102] sm:$0xff]
    %v74 = vld [vmem:[%s0 + $0x112] sm:$0xff]
    %s75 = scalar_lea.vmem %s0, 16
    %v76 = vld [vmem:[%s75] sm:$0xff]
    %v77 = vld [vmem:[%s75 + $0x10] sm:$0xff]
    %v78 = vld [vmem:[%s75 + $0x20] sm:$0xff]
    %v79 = vld [vmem:[%s75 + $0x30] sm:$0xff]
    %v80 = vld [vmem:[%s75 + $0x40] sm:$0xff]
    %v81 = vld [vmem:[%s75 + $0x50] sm:$0xff]
    %v82 = vld [vmem:[%s75 + $0x60] sm:$0xff]
    %v83 = vld [vmem:[%s75 + $0x70] sm:$0xff]
    %v84 = vld [vmem:[%s75 + $0xa0] sm:$0xff]
    %v85 = vld [vmem:[%s75 + $0xb0] sm:$0xff]
    %v86 = vld [vmem:[%s75 + $0xc0] sm:$0xff]
    %v87 = vld [vmem:[%s75 + $0xd0] sm:$0xff]
    %v88 = vld [vmem:[%s75 + $0xe0] sm:$0xff]
    %v89 = vld [vmem:[%s75 + $0xf0] sm:$0xff]
    %v90 = vld [vmem:[%s75 + $0x100] sm:$0xff]
    %v91 = vld [vmem:[%s75 + $0x110] sm:$0xff]
    %v92 = vld [vmem:[%s75 + $0x1] sm:$0xff]
    %v93 = vld [vmem:[%s75 + $0x11] sm:$0xff]
    %v94 = vld [vmem:[%s75 + $0x21] sm:$0xff]
    %v95 = vld [vmem:[%s75 + $0x31] sm:$0xff]
    %v96 = vld [vmem:[%s75 + $0x41] sm:$0xff]
    %v97 = vld [vmem:[%s75 + $0x51] sm:$0xff]
    %v98 = vld [vmem:[%s75 + $0x61] sm:$0xff]
    %v99 = vld [vmem:[%s75 + $0x71] sm:$0xff]
    %v100 = vld [vmem:[%s75 + $0xa1] sm:$0xff]
    %v101 = vld [vmem:[%s75 + $0xb1] sm:$0xff]
    %v102 = vld [vmem:[%s75 + $0xc1] sm:$0xff]
    %v103 = vld [vmem:[%s75 + $0xd1] sm:$0xff]
    %v104 = vld [vmem:[%s75 + $0xe1] sm:$0xff]
    %v105 = vld [vmem:[%s75 + $0xf1] sm:$0xff]
    %v106 = vld [vmem:[%s75 + $0x101] sm:$0xff]
    %v107 = vld [vmem:[%s75 + $0x111] sm:$0xff]
    %v108 = vld [vmem:[%s75 + $0x2] sm:$0xff]
    %v109 = vld [vmem:[%s75 + $0x12] sm:$0xff]
    %v110 = vld [vmem:[%s75 + $0x22] sm:$0xff]
    %v111 = vld [vmem:[%s75 + $0x32] sm:$0xff]
    %v112 = vld [vmem:[%s75 + $0x42] sm:$0xff]
    %v113 = vld [vmem:[%s75 + $0x52] sm:$0xff]
    %v114 = vld [vmem:[%s75 + $0x62] sm:$0xff]
    %v115 = vld [vmem:[%s75 + $0x72] sm:$0xff]
    %v116 = vld [vmem:[%s75 + $0xa2] sm:$0xff]
    %v117 = vld [vmem:[%s75 + $0xb2] sm:$0xff]
    %v118 = vld [vmem:[%s75 + $0xc2] sm:$0xff]
    %v119 = vld [vmem:[%s75 + $0xd2] sm:$0xff]
    %v120 = vld [vmem:[%s75 + $0xe2] sm:$0xff]
    %v121 = vld [vmem:[%s75 + $0xf2] sm:$0xff]
    %v122 = vld [vmem:[%s75 + $0x102] sm:$0xff]
    %v123 = vld [vmem:[%s75 + $0x112] sm:$0xff]
    %s124 = scalar_lea.vmem %s0, 32
    %v125 = vld [vmem:[%s124] sm:$0xff]
    %v126 = vld [vmem:[%s124 + $0x10] sm:$0xff]
    %v127 = vld [vmem:[%s124 + $0x20] sm:$0xff]
    %v128 = vld [vmem:[%s124 + $0x30] sm:$0xff]
    %v129 = vld [vmem:[%s124 + $0x40] sm:$0xff]
    %v130 = vld [vmem:[%s124 + $0x50] sm:$0xff]
    %v131 = vld [vmem:[%s124 + $0x60] sm:$0xff]
    %v132 = vld [vmem:[%s124 + $0x70] sm:$0xff]
    %v133 = vld [vmem:[%s124 + $0xa0] sm:$0xff]
    %v134 = vld [vmem:[%s124 + $0xb0] sm:$0xff]
    %v135 = vld [vmem:[%s124 + $0xc0] sm:$0xff]
    %v136 = vld [vmem:[%s124 + $0xd0] sm:$0xff]
    %v137 = vld [vmem:[%s124 + $0xe0] sm:$0xff]
    %v138 = vld [vmem:[%s124 + $0xf0] sm:$0xff]
    %v139 = vld [vmem:[%s124 + $0x100] sm:$0xff]
    %v140 = vld [vmem:[%s124 + $0x110] sm:$0xff]
    %v141 = vld [vmem:[%s124 + $0x1] sm:$0xff]
    %v142 = vld [vmem:[%s124 + $0x11] sm:$0xff]
    %v143 = vld [vmem:[%s124 + $0x21] sm:$0xff]
    %v144 = vld [vmem:[%s124 + $0x31] sm:$0xff]
    %v145 = vld [vmem:[%s124 + $0x41] sm:$0xff]
    %v146 = vld [vmem:[%s124 + $0x51] sm:$0xff]
    %v147 = vld [vmem:[%s124 + $0x61] sm:$0xff]
    %v148 = vld [vmem:[%s124 + $0x71] sm:$0xff]
    %v149 = vld [vmem:[%s124 + $0xa1] sm:$0xff]
    %v150 = vld [vmem:[%s124 + $0xb1] sm:$0xff]
    %v151 = vld [vmem:[%s124 + $0xc1] sm:$0xff]
    %v152 = vld [vmem:[%s124 + $0xd1] sm:$0xff]
    %v153 = vld [vmem:[%s124 + $0xe1] sm:$0xff]
    %v154 = vld [vmem:[%s124 + $0xf1] sm:$0xff]
    %v155 = vld [vmem:[%s124 + $0x101] sm:$0xff]
    %v156 = vld [vmem:[%s124 + $0x111] sm:$0xff]
    %v157 = vld [vmem:[%s124 + $0x2] sm:$0xff]
    %v158 = vld [vmem:[%s124 + $0x12] sm:$0xff]
    %v159 = vld [vmem:[%s124 + $0x22] sm:$0xff]
    %v160 = vld [vmem:[%s124 + $0x32] sm:$0xff]
    %v161 = vld [vmem:[%s124 + $0x42] sm:$0xff]
    %v162 = vld [vmem:[%s124 + $0x52] sm:$0xff]
    %v163 = vld [vmem:[%s124 + $0x62] sm:$0xff]
    %v164 = vld [vmem:[%s124 + $0x72] sm:$0xff]
    %v165 = vld [vmem:[%s124 + $0xa2] sm:$0xff]
    %v166 = vld [vmem:[%s124 + $0xb2] sm:$0xff]
    %v167 = vld [vmem:[%s124 + $0xc2] sm:$0xff]
    %v168 = vld [vmem:[%s124 + $0xd2] sm:$0xff]
    %v169 = vld [vmem:[%s124 + $0xe2] sm:$0xff]
    %v170 = vld [vmem:[%s124 + $0xf2] sm:$0xff]
    %v171 = vld [vmem:[%s124 + $0x102] sm:$0xff]
    %v172 = vld [vmem:[%s124 + $0x112] sm:$0xff]
    %189 = vrot.lane.b32.xlu0 %v43, 32
    %v190 = vpop.permute.xlu0 %189
    %191 = vrot.lane.b32.xlu0 %v44, 32
    %v192 = vpop.permute.xlu0 %191
    %193 = vrot.lane.b32.xlu0 %v45, 32
    %v194 = vpop.permute.xlu0 %193
    %195 = vrot.lane.b32.xlu0 %v46, 32
    %v196 = vpop.permute.xlu0 %195
    %197 = vrot.lane.b32.xlu0 %v47, 32
    %v198 = vpop.permute.xlu0 %197
    %199 = vrot.lane.b32.xlu0 %v48, 32
    %v200 = vpop.permute.xlu0 %199
    %201 = vrot.lane.b32.xlu0 %v49, 32
    %v202 = vpop.permute.xlu0 %201
    %203 = vrot.lane.b32.xlu0 %v50, 32
    %v204 = vpop.permute.xlu0 %203
    %205 = vrot.lane.b32.xlu0 %v51, 32
    %v206 = vpop.permute.xlu0 %205
    %207 = vrot.lane.b32.xlu0 %v52, 32
    %v208 = vpop.permute.xlu0 %207
    %209 = vrot.lane.b32.xlu0 %v53, 32
    %v210 = vpop.permute.xlu0 %209
    %211 = vrot.lane.b32.xlu0 %v54, 32
    %v212 = vpop.permute.xlu0 %211
    %213 = vrot.lane.b32.xlu0 %v55, 32
    %v214 = vpop.permute.xlu0 %213
    %215 = vrot.lane.b32.xlu0 %v56, 32
    %v216 = vpop.permute.xlu0 %215
    %217 = vrot.lane.b32.xlu0 %v57, 32
    %v218 = vpop.permute.xlu0 %217
    %219 = vrot.lane.b32.xlu0 %v58, 32
    %v220 = vpop.permute.xlu0 %219
    %253 = vrot.lane.b32.xlu0 %v59, 64
    %v254 = vpop.permute.xlu0 %253
    %255 = vrot.lane.b32.xlu0 %v60, 64
    %v256 = vpop.permute.xlu0 %255
    %257 = vrot.lane.b32.xlu0 %v61, 64
    %v258 = vpop.permute.xlu0 %257
    %259 = vrot.lane.b32.xlu0 %v62, 64
    %v260 = vpop.permute.xlu0 %259
    %261 = vrot.lane.b32.xlu0 %v63, 64
    %v262 = vpop.permute.xlu0 %261
    %263 = vrot.lane.b32.xlu0 %v64, 64
    %v264 = vpop.permute.xlu0 %263
    %265 = vrot.lane.b32.xlu0 %v65, 64
    %v266 = vpop.permute.xlu0 %265
    %267 = vrot.lane.b32.xlu0 %v66, 64
    %v268 = vpop.permute.xlu0 %267
    %269 = vrot.lane.b32.xlu0 %v67, 64
    %v270 = vpop.permute.xlu0 %269
    %271 = vrot.lane.b32.xlu0 %v68, 64
    %v272 = vpop.permute.xlu0 %271
    %273 = vrot.lane.b32.xlu0 %v69, 64
    %v274 = vpop.permute.xlu0 %273
    %275 = vrot.lane.b32.xlu0 %v70, 64
    %v276 = vpop.permute.xlu0 %275
    %277 = vrot.lane.b32.xlu0 %v71, 64
    %v278 = vpop.permute.xlu0 %277
    %279 = vrot.lane.b32.xlu0 %v72, 64
    %v280 = vpop.permute.xlu0 %279
    %281 = vrot.lane.b32.xlu0 %v73, 64
    %v282 = vpop.permute.xlu0 %281
    %283 = vrot.lane.b32.xlu0 %v74, 64
    %v284 = vpop.permute.xlu0 %283
    %317 = vrot.lane.b32.xlu0 %v76, 96
    %v318 = vpop.permute.xlu0 %317
    %319 = vrot.lane.b32.xlu0 %v77, 96
    %v320 = vpop.permute.xlu0 %319
    %321 = vrot.lane.b32.xlu0 %v78, 96
    %v322 = vpop.permute.xlu0 %321
    %323 = vrot.lane.b32.xlu0 %v79, 96
    %v324 = vpop.permute.xlu0 %323
    %325 = vrot.lane.b32.xlu0 %v80, 96
    %v326 = vpop.permute.xlu0 %325
    %327 = vrot.lane.b32.xlu0 %v81, 96
    %v328 = vpop.permute.xlu0 %327
    %329 = vrot.lane.b32.xlu0 %v82, 96
    %v330 = vpop.permute.xlu0 %329
    %331 = vrot.lane.b32.xlu0 %v83, 96
    %v332 = vpop.permute.xlu0 %331
    %333 = vrot.lane.b32.xlu0 %v84, 96
    %v334 = vpop.permute.xlu0 %333
    %335 = vrot.lane.b32.xlu0 %v85, 96
    %v336 = vpop.permute.xlu0 %335
    %337 = vrot.lane.b32.xlu0 %v86, 96
    %v338 = vpop.permute.xlu0 %337
    %339 = vrot.lane.b32.xlu0 %v87, 96
    %v340 = vpop.permute.xlu0 %339
    %341 = vrot.lane.b32.xlu0 %v88, 96
    %v342 = vpop.permute.xlu0 %341
    %343 = vrot.lane.b32.xlu0 %v89, 96
    %v344 = vpop.permute.xlu0 %343
    %345 = vrot.lane.b32.xlu0 %v90, 96
    %v346 = vpop.permute.xlu0 %345
    %347 = vrot.lane.b32.xlu0 %v91, 96
    %v348 = vpop.permute.xlu0 %347
    %381 = vrot.lane.b32.xlu0 %v108, 32
    %v382 = vpop.permute.xlu0 %381
    %383 = vrot.lane.b32.xlu0 %v109, 32
    %v384 = vpop.permute.xlu0 %383
    %385 = vrot.lane.b32.xlu0 %v110, 32
    %v386 = vpop.permute.xlu0 %385
    %387 = vrot.lane.b32.xlu0 %v111, 32
    %v388 = vpop.permute.xlu0 %387
    %389 = vrot.lane.b32.xlu0 %v112, 32
    %v390 = vpop.permute.xlu0 %389
    %391 = vrot.lane.b32.xlu0 %v113, 32
    %v392 = vpop.permute.xlu0 %391
    %393 = vrot.lane.b32.xlu0 %v114, 32
    %v394 = vpop.permute.xlu0 %393
    %395 = vrot.lane.b32.xlu0 %v115, 32
    %v396 = vpop.permute.xlu0 %395
    %397 = vrot.lane.b32.xlu0 %v116, 32
    %v398 = vpop.permute.xlu0 %397
    %399 = vrot.lane.b32.xlu0 %v117, 32
    %v400 = vpop.permute.xlu0 %399
    %401 = vrot.lane.b32.xlu0 %v118, 32
    %v402 = vpop.permute.xlu0 %401
    %403 = vrot.lane.b32.xlu0 %v119, 32
    %v404 = vpop.permute.xlu0 %403
    %405 = vrot.lane.b32.xlu0 %v120, 32
    %v406 = vpop.permute.xlu0 %405
    %407 = vrot.lane.b32.xlu0 %v121, 32
    %v408 = vpop.permute.xlu0 %407
    %409 = vrot.lane.b32.xlu0 %v122, 32
    %v410 = vpop.permute.xlu0 %409
    %411 = vrot.lane.b32.xlu0 %v123, 32
    %v412 = vpop.permute.xlu0 %411
    %445 = vrot.lane.b32.xlu0 %v125, 64
    %v446 = vpop.permute.xlu0 %445
    %447 = vrot.lane.b32.xlu0 %v126, 64
    %v448 = vpop.permute.xlu0 %447
    %449 = vrot.lane.b32.xlu0 %v127, 64
    %v450 = vpop.permute.xlu0 %449
    %451 = vrot.lane.b32.xlu0 %v128, 64
    %v452 = vpop.permute.xlu0 %451
    %453 = vrot.lane.b32.xlu0 %v129, 64
    %v454 = vpop.permute.xlu0 %453
    %455 = vrot.lane.b32.xlu0 %v130, 64
    %v456 = vpop.permute.xlu0 %455
    %457 = vrot.lane.b32.xlu0 %v131, 64
    %v458 = vpop.permute.xlu0 %457
    %459 = vrot.lane.b32.xlu0 %v132, 64
    %v460 = vpop.permute.xlu0 %459
    %461 = vrot.lane.b32.xlu0 %v133, 64
    %v462 = vpop.permute.xlu0 %461
    %463 = vrot.lane.b32.xlu0 %v134, 64
    %v464 = vpop.permute.xlu0 %463
    %465 = vrot.lane.b32.xlu0 %v135, 64
    %v466 = vpop.permute.xlu0 %465
    %467 = vrot.lane.b32.xlu0 %v136, 64
    %v468 = vpop.permute.xlu0 %467
    %469 = vrot.lane.b32.xlu0 %v137, 64
    %v470 = vpop.permute.xlu0 %469
    %471 = vrot.lane.b32.xlu0 %v138, 64
    %v472 = vpop.permute.xlu0 %471
    %473 = vrot.lane.b32.xlu0 %v139, 64
    %v474 = vpop.permute.xlu0 %473
    %475 = vrot.lane.b32.xlu0 %v140, 64
    %v476 = vpop.permute.xlu0 %475
    %509 = vrot.lane.b32.xlu0 %v141, 96
    %v510 = vpop.permute.xlu0 %509
    %511 = vrot.lane.b32.xlu0 %v142, 96
    %v512 = vpop.permute.xlu0 %511
    %513 = vrot.lane.b32.xlu0 %v143, 96
    %v514 = vpop.permute.xlu0 %513
    %515 = vrot.lane.b32.xlu0 %v144, 96
    %v516 = vpop.permute.xlu0 %515
    %517 = vrot.lane.b32.xlu0 %v145, 96
    %v518 = vpop.permute.xlu0 %517
    %519 = vrot.lane.b32.xlu0 %v146, 96
    %v520 = vpop.permute.xlu0 %519
    %521 = vrot.lane.b32.xlu0 %v147, 96
    %v522 = vpop.permute.xlu0 %521
    %523 = vrot.lane.b32.xlu0 %v148, 96
    %v524 = vpop.permute.xlu0 %523
    %525 = vrot.lane.b32.xlu0 %v149, 96
    %v526 = vpop.permute.xlu0 %525
    %527 = vrot.lane.b32.xlu0 %v150, 96
    %v528 = vpop.permute.xlu0 %527
    %529 = vrot.lane.b32.xlu0 %v151, 96
    %v530 = vpop.permute.xlu0 %529
    %531 = vrot.lane.b32.xlu0 %v152, 96
    %v532 = vpop.permute.xlu0 %531
    %533 = vrot.lane.b32.xlu0 %v153, 96
    %v534 = vpop.permute.xlu0 %533
    %535 = vrot.lane.b32.xlu0 %v154, 96
    %v536 = vpop.permute.xlu0 %535
    %537 = vrot.lane.b32.xlu0 %v155, 96
    %v538 = vpop.permute.xlu0 %537
    %539 = vrot.lane.b32.xlu0 %v156, 96
    %v540 = vpop.permute.xlu0 %539
    %vm557 = vcmask 261120
    %v558 = vsel %vm557, %v27, %v190
    %v559 = vsel %vm557, %v28, %v192
    %v560 = vsel %vm557, %v29, %v194
    %v561 = vsel %vm557, %v30, %v196
    %v562 = vsel %vm557, %v31, %v198
    %v563 = vsel %vm557, %v32, %v200
    %v564 = vsel %vm557, %v33, %v202
    %v565 = vsel %vm557, %v34, %v204
    %v566 = vsel %vm557, %v35, %v206
    %v567 = vsel %vm557, %v36, %v208
    %v568 = vsel %vm557, %v37, %v210
    %v569 = vsel %vm557, %v38, %v212
    %v570 = vsel %vm557, %v39, %v214
    %v571 = vsel %vm557, %v40, %v216
    %v572 = vsel %vm557, %v41, %v218
    %v573 = vsel %vm557, %v42, %v220
    %vm574 = vcmask 523264
    %v575 = vsel %vm574, %v558, %v254
    %v576 = vsel %vm574, %v559, %v256
    %v577 = vsel %vm574, %v560, %v258
    %v578 = vsel %vm574, %v561, %v260
    %v579 = vsel %vm574, %v562, %v262
    %v580 = vsel %vm574, %v563, %v264
    %v581 = vsel %vm574, %v564, %v266
    %v582 = vsel %vm574, %v565, %v268
    %v583 = vsel %vm574, %v566, %v270
    %v584 = vsel %vm574, %v567, %v272
    %v585 = vsel %vm574, %v568, %v274
    %v586 = vsel %vm574, %v569, %v276
    %v587 = vsel %vm574, %v570, %v278
    %v588 = vsel %vm574, %v571, %v280
    %v589 = vsel %vm574, %v572, %v282
    %v590 = vsel %vm574, %v573, %v284
    %vm591 = vcmask 785408
    %v592 = vsel %vm591, %v575, %v318
    %v593 = vsel %vm591, %v576, %v320
    %v594 = vsel %vm591, %v577, %v322
    %v595 = vsel %vm591, %v578, %v324
    %v596 = vsel %vm591, %v579, %v326
    %v597 = vsel %vm591, %v580, %v328
    %v598 = vsel %vm591, %v581, %v330
    %v599 = vsel %vm591, %v582, %v332
    %v600 = vsel %vm591, %v583, %v334
    %v601 = vsel %vm591, %v584, %v336
    %v602 = vsel %vm591, %v585, %v338
    %v603 = vsel %vm591, %v586, %v340
    %v604 = vsel %vm591, %v587, %v342
    %v605 = vsel %vm591, %v588, %v344
    %v606 = vsel %vm591, %v589, %v346
    %v607 = vsel %vm591, %v590, %v348
    %v608 = vsel %vm557, %v92, %v382
    %v609 = vsel %vm557, %v93, %v384
    %v610 = vsel %vm557, %v94, %v386
    %v611 = vsel %vm557, %v95, %v388
    %v612 = vsel %vm557, %v96, %v390
    %v613 = vsel %vm557, %v97, %v392
    %v614 = vsel %vm557, %v98, %v394
    %v615 = vsel %vm557, %v99, %v396
    %v616 = vsel %vm557, %v100, %v398
    %v617 = vsel %vm557, %v101, %v400
    %v618 = vsel %vm557, %v102, %v402
    %v619 = vsel %vm557, %v103, %v404
    %v620 = vsel %vm557, %v104, %v406
    %v621 = vsel %vm557, %v105, %v408
    %v622 = vsel %vm557, %v106, %v410
    %v623 = vsel %vm557, %v107, %v412
    %v624 = vsel %vm574, %v608, %v446
    %v625 = vsel %vm574, %v609, %v448
    %v626 = vsel %vm574, %v610, %v450
    %v627 = vsel %vm574, %v611, %v452
    %v628 = vsel %vm574, %v612, %v454
    %v629 = vsel %vm574, %v613, %v456
    %v630 = vsel %vm574, %v614, %v458
    %v631 = vsel %vm574, %v615, %v460
    %v632 = vsel %vm574, %v616, %v462
    %v633 = vsel %vm574, %v617, %v464
    %v634 = vsel %vm574, %v618, %v466
    %v635 = vsel %vm574, %v619, %v468
    %v636 = vsel %vm574, %v620, %v470
    %v637 = vsel %vm574, %v621, %v472
    %v638 = vsel %vm574, %v622, %v474
    %v639 = vsel %vm574, %v623, %v476
    %v640 = vsel %vm591, %v624, %v510
    %v641 = vsel %vm591, %v625, %v512
    %v642 = vsel %vm591, %v626, %v514
    %v643 = vsel %vm591, %v627, %v516
    %v644 = vsel %vm591, %v628, %v518
    %v645 = vsel %vm591, %v629, %v520
    %v646 = vsel %vm591, %v630, %v522
    %v647 = vsel %vm591, %v631, %v524
    %v648 = vsel %vm591, %v632, %v526
    %v649 = vsel %vm591, %v633, %v528
    %v650 = vsel %vm591, %v634, %v530
    %v651 = vsel %vm591, %v635, %v532
    %v652 = vsel %vm591, %v636, %v534
    %v653 = vsel %vm591, %v637, %v536
    %v654 = vsel %vm591, %v638, %v538
    %v655 = vsel %vm591, %v639, %v540
    %v656 = vld [vmem:[%s1] sm:$0xff]
    %v657 = vld [vmem:[%s1 + $0x8] sm:$0xff]
    %v658 = vld [vmem:[%s1 + $0x10] sm:$0xff]
    %v659 = vld [vmem:[%s1 + $0x18] sm:$0xff]
    %v660 = vld [vmem:[%s1 + $0x20] sm:$0xff]
    %v661 = vld [vmem:[%s1 + $0x28] sm:$0xff]
    %v662 = vld [vmem:[%s1 + $0x30] sm:$0xff]
    %v663 = vld [vmem:[%s1 + $0x38] sm:$0xff]
    %v664 = vld [vmem:[%s1 + $0x40] sm:$0xff]
    %v665 = vld [vmem:[%s1 + $0x48] sm:$0xff]
    %v666 = vld [vmem:[%s1 + $0x50] sm:$0xff]
    %v667 = vld [vmem:[%s1 + $0x58] sm:$0xff]
    %v668 = vld [vmem:[%s1 + $0x60] sm:$0xff]
    %v669 = vld [vmem:[%s1 + $0x68] sm:$0xff]
    %v670 = vld [vmem:[%s1 + $0x70] sm:$0xff]
    %v671 = vld [vmem:[%s1 + $0x78] sm:$0xff]
    %v672 = vld [vmem:[%s1 + $0x80] sm:$0xff]
    %v673 = vld [vmem:[%s1 + $0x88] sm:$0xff]
    %v674 = vld [vmem:[%s1 + $0x90] sm:$0xff]
    %v675 = vld [vmem:[%s1 + $0x98] sm:$0xff]
    %v676 = vld [vmem:[%s1 + $0xa0] sm:$0xff]
    %v677 = vld [vmem:[%s1 + $0xa8] sm:$0xff]
    %v678 = vld [vmem:[%s1 + $0xb0] sm:$0xff]
    %v679 = vld [vmem:[%s1 + $0xb8] sm:$0xff]
    %v680 = vld [vmem:[%s1 + $0xc0] sm:$0xff]
    %v681 = vld [vmem:[%s1 + $0xc8] sm:$0xff]
    %v682 = vld [vmem:[%s1 + $0xd0] sm:$0xff]
    %v683 = vld [vmem:[%s1 + $0xd8] sm:$0xff]
    %v684 = vld [vmem:[%s1 + $0xe0] sm:$0xff]
    %v685 = vld [vmem:[%s1 + $0xe8] sm:$0xff]
    %v686 = vld [vmem:[%s1 + $0xf0] sm:$0xff]
    %v687 = vld [vmem:[%s1 + $0xf8] sm:$0xff]
    %v688 = vld [vmem:[%s1 + $0x100] sm:$0xff]
    %v689 = vld [vmem:[%s1 + $0x108] sm:$0xff]
    %v690 = vld [vmem:[%s1 + $0x110] sm:$0xff]
    %v691 = vld [vmem:[%s1 + $0x118] sm:$0xff]
    %v692 = vld [vmem:[%s2] sm:$0x1]
    %v694 = vlaneseq
    %v695 = vshrl.u32 %v694, 7
    %v696 = vsub.s32 0, %v695
    %v697 = vrot.slane %v692, %v696
    %v700 = vsel %vm557, %v157, 0
    %v703 = vsel %vm557, %v158, 0
    %v706 = vsel %vm557, %v159, 0
    %v709 = vsel %vm557, %v160, 0
    %v712 = vsel %vm557, %v161, 0
    %v715 = vsel %vm557, %v162, 0
    %v718 = vsel %vm557, %v163, 0
    %v721 = vsel %vm557, %v164, 0
    %v724 = vsel %vm557, %v165, 0
    %v727 = vsel %vm557, %v166, 0
    %v730 = vsel %vm557, %v167, 0
    %v733 = vsel %vm557, %v168, 0
    %v736 = vsel %vm557, %v169, 0
    %v739 = vsel %vm557, %v170, 0
    %v742 = vsel %vm557, %v171, 0
    %v745 = vsel %vm557, %v172, 0
    %747 = vmatprep.subr.mxu0 0.0
    %748 = vmatpush1.msra.mxu0 %v656
    %749 = vmatprep.subr.mxu0 0.0
    %750 = vmatpush1.msra.mxu0 %v657
    %751 = vmatprep.subr.mxu0 0.0
    %752 = vmatpush1.msra.mxu0 %v658
    %753 = vmatprep.subr.mxu0 0.0
    %754 = vmatpush1.msra.mxu0 %v659
    %755 = vmatprep.subr.mxu0 0.0
    %756 = vmatpush1.msra.mxu0 %v660
    %757 = vmatprep.subr.mxu0 0.0
    %758 = vmatpush1.msra.mxu0 %v661
    %759 = vmatprep.subr.mxu0 0.0
    %760 = vmatpush1.msra.mxu0 %v662
    %761 = vmatprep.subr.mxu0 0.0
    %762 = vmatpush1.msra.mxu0 %v663
    %763 = vmatprep.subr.mxu0 0.0
    %764 = vmatpush1.msra.mxu0 %v664
    %765 = vmatprep.subr.mxu0 0.0
    %766 = vmatpush1.msra.mxu0 %v665
    %767 = vmatprep.subr.mxu0 0.0
    %768 = vmatpush1.msra.mxu0 %v666
    %769 = vmatprep.subr.mxu0 0.0
    %770 = vmatpush1.msra.mxu0 %v667
    %771 = vmatprep.subr.mxu0 0.0
    %772 = vmatpush1.msra.mxu0 %v668
    %773 = vmatprep.subr.mxu0 0.0
    %774 = vmatpush1.msra.mxu0 %v669
    %775 = vmatprep.subr.mxu0 0.0
    %776 = vmatpush1.msra.mxu0 %v670
    %777 = vmatprep.subr.mxu0 0.0
    %778 = vmatpush1.msra.mxu0 %v671
    %779 = vmatprep.subr.mxu0 0.0
    %780 = vmatpush1.msra.mxu0 %v672
    %781 = vmatprep.subr.mxu0 0.0
    %782 = vmatpush1.msra.mxu0 %v673
    %783 = vmatprep.subr.mxu0 0.0
    %784 = vmatpush1.msra.mxu0 %v674
    %785 = vmatprep.subr.mxu0 0.0
    %786 = vmatpush1.msra.mxu0 %v675
    %787 = vmatprep.subr.mxu0 0.0
    %788 = vmatpush1.msra.mxu0 %v676
    %789 = vmatprep.subr.mxu0 0.0
    %790 = vmatpush1.msra.mxu0 %v677
    %791 = vmatprep.subr.mxu0 0.0
    %792 = vmatpush1.msra.mxu0 %v678
    %793 = vmatprep.subr.mxu0 0.0
    %794 = vmatpush1.msra.mxu0 %v679
    %795 = vmatprep.subr.mxu0 0.0
    %796 = vmatpush1.msra.mxu0 %v680
    %797 = vmatprep.subr.mxu0 0.0
    %798 = vmatpush1.msra.mxu0 %v681
    %799 = vmatprep.subr.mxu0 0.0
    %800 = vmatpush1.msra.mxu0 %v682
    %801 = vmatprep.subr.mxu0 0.0
    %802 = vmatpush1.msra.mxu0 %v683
    %803 = vmatprep.subr.mxu0 0.0
    %804 = vmatpush1.msra.mxu0 %v684
    %805 = vmatprep.subr.mxu0 0.0
    %806 = vmatpush1.msra.mxu0 %v685
    %807 = vmatprep.subr.mxu0 0.0
    %808 = vmatpush1.msra.mxu0 %v686
    %809 = vmatprep.subr.mxu0 0.0
    %810 = vmatpush1.msra.mxu0 %v687
    %811 = vmatprep.mubr.f32.mxu0 %v640
    %812 = vmatmul.mubr.f32.gmra.mrb[0].mxu0 %v592
    %v813 = vpop.f32.mrb[0].mxu0
    %v814 = vadd.f32 %v697, %v813
    %v815 = vpop.f32.mrb[0].mxu0
    %816 = vmatprep.mubr.f32.mxu0 %v641
    %817 = vmatmul.mubr.f32.gmra.mrb[0].mxu0 %v593
    %v818 = vpop.f32.mrb[0].mxu0
    %v819 = vadd.f32 %v697, %v818
    %v820 = vpop.f32.mrb[0].mxu0
    %821 = vmatprep.mubr.f32.mxu0 %v642
    %822 = vmatmul.mubr.f32.gmra.mrb[0].mxu0 %v594
    %v823 = vpop.f32.mrb[0].mxu0
    %v824 = vadd.f32 %v697, %v823
    %v825 = vpop.f32.mrb[0].mxu0
    %826 = vmatprep.mubr.f32.mxu0 %v643
    %827 = vmatmul.mubr.f32.gmra.mrb[0].mxu0 %v595
    %v828 = vpop.f32.mrb[0].mxu0
    %v829 = vadd.f32 %v697, %v828
    %v830 = vpop.f32.mrb[0].mxu0
    %831 = vmatprep.mubr.f32.mxu0 %v644
    %832 = vmatmul.mubr.f32.gmra.mrb[0].mxu0 %v596
    %v833 = vpop.f32.mrb[0].mxu0
    %v834 = vadd.f32 %v697, %v833
    %v835 = vpop.f32.mrb[0].mxu0
    %836 = vmatprep.mubr.f32.mxu0 %v645
    %837 = vmatmul.mubr.f32.gmra.mrb[0].mxu0 %v597
    %v838 = vpop.f32.mrb[0].mxu0
    %v839 = vadd.f32 %v697, %v838
    %v840 = vpop.f32.mrb[0].mxu0
    %841 = vmatprep.mubr.f32.mxu0 %v646
    %842 = vmatmul.mubr.f32.gmra.mrb[0].mxu0 %v598
    %v843 = vpop.f32.mrb[0].mxu0
    %v844 = vadd.f32 %v697, %v843
    %v845 = vpop.f32.mrb[0].mxu0
    %846 = vmatprep.mubr.f32.mxu0 %v647
    %847 = vmatmul.mubr.f32.gmra.mrb[0].mxu0 %v599
    %v848 = vpop.f32.mrb[0].mxu0
    %v849 = vadd.f32 %v697, %v848
    %v850 = vpop.f32.mrb[0].mxu0
    %851 = vmatprep.mubr.f32.mxu0 %v648
    %852 = vmatmul.mubr.f32.gmra.mrb[0].mxu0 %v600
    %v853 = vpop.f32.mrb[0].mxu0
    %v854 = vadd.f32 %v697, %v853
    %v855 = vpop.f32.mrb[0].mxu0
    %856 = vmatprep.mubr.f32.mxu0 %v649
    %857 = vmatmul.mubr.f32.gmra.mrb[0].mxu0 %v601
    %v858 = vpop.f32.mrb[0].mxu0
    %v859 = vadd.f32 %v697, %v858
    %v860 = vpop.f32.mrb[0].mxu0
    %861 = vmatprep.mubr.f32.mxu0 %v650
    %862 = vmatmul.mubr.f32.gmra.mrb[0].mxu0 %v602
    %v863 = vpop.f32.mrb[0].mxu0
    %v864 = vadd.f32 %v697, %v863
    %v865 = vpop.f32.mrb[0].mxu0
    %866 = vmatprep.mubr.f32.mxu0 %v651
    %867 = vmatmul.mubr.f32.gmra.mrb[0].mxu0 %v603
    %v868 = vpop.f32.mrb[0].mxu0
    %v869 = vadd.f32 %v697, %v868
    %v870 = vpop.f32.mrb[0].mxu0
    %871 = vmatprep.mubr.f32.mxu0 %v652
    %872 = vmatmul.mubr.f32.gmra.mrb[0].mxu0 %v604
    %v873 = vpop.f32.mrb[0].mxu0
    %v874 = vadd.f32 %v697, %v873
    %v875 = vpop.f32.mrb[0].mxu0
    %876 = vmatprep.mubr.f32.mxu0 %v653
    %877 = vmatmul.mubr.f32.gmra.mrb[0].mxu0 %v605
    %v878 = vpop.f32.mrb[0].mxu0
    %v879 = vadd.f32 %v697, %v878
    %v880 = vpop.f32.mrb[0].mxu0
    %881 = vmatprep.mubr.f32.mxu0 %v654
    %882 = vmatmul.mubr.f32.gmra.mrb[0].mxu0 %v606
    %v883 = vpop.f32.mrb[0].mxu0
    %v884 = vadd.f32 %v697, %v883
    %v885 = vpop.f32.mrb[0].mxu0
    %886 = vmatprep.mubr.f32.mxu0 %v655
    %887 = vmatmul.mubr.f32.gmra.mrb[0].mxu0 %v607
    %v888 = vpop.f32.mrb[0].mxu0
    %v889 = vadd.f32 %v697, %v888
    %v890 = vpop.f32.mrb[0].mxu0
    %891 = vdwg.mxu0
    %892 = vmatprep.subr.mxu0 0.0
    %893 = vmatpush1.msra.mxu0 %v688
    %894 = vmatprep.subr.mxu0 0.0
    %895 = vmatpush1.msra.mxu0 %v689
    %896 = vmatprep.subr.mxu0 0.0
    %897 = vmatpush1.msra.mxu0 %v690
    %898 = vmatprep.subr.mxu0 0.0
    %899 = vmatpush1.msra.mxu0 %v691
    %900 = vmatprep.subr.mxu0 0.0
    %901 = vmatpush1.msra.mxu0 0.0
    %902 = vmatprep.subr.mxu0 0.0
    %903 = vmatpush1.msra.mxu0 0.0
    %904 = vmatprep.subr.mxu0 0.0
    %905 = vmatpush1.msra.mxu0 0.0
    %906 = vmatprep.subr.mxu0 0.0
    %907 = vmatpush1.msra.mxu0 0.0
    %908 = vmatprep.subr.mxu0 0.0
    %909 = vmatpush1.msra.mxu0 0.0
    %910 = vmatprep.subr.mxu0 0.0
    %911 = vmatpush1.msra.mxu0 0.0
    %912 = vmatprep.subr.mxu0 0.0
    %913 = vmatpush1.msra.mxu0 0.0
    %914 = vmatprep.subr.mxu0 0.0
    %915 = vmatpush1.msra.mxu0 0.0
    %916 = vmatprep.subr.mxu0 0.0
    %917 = vmatpush1.msra.mxu0 0.0
    %918 = vmatprep.subr.mxu0 0.0
    %919 = vmatpush1.msra.mxu0 0.0
    %920 = vmatprep.subr.mxu0 0.0
    %921 = vmatpush1.msra.mxu0 0.0
    %922 = vmatprep.subr.mxu0 0.0
    %923 = vmatpush1.msra.mxu0 0.0
    %924 = vmatprep.subr.mxu0 0.0
    %925 = vmatpush1.msra.mxu0 0.0
    %926 = vmatprep.subr.mxu0 0.0
    %927 = vmatpush1.msra.mxu0 0.0
    %928 = vmatprep.subr.mxu0 0.0
    %929 = vmatpush1.msra.mxu0 0.0
    %930 = vmatprep.subr.mxu0 0.0
    %931 = vmatpush1.msra.mxu0 0.0
    %932 = vmatprep.subr.mxu0 0.0
    %933 = vmatpush1.msra.mxu0 0.0
    %934 = vmatprep.subr.mxu0 0.0
    %935 = vmatpush1.msra.mxu0 0.0
    %936 = vmatprep.subr.mxu0 0.0
    %937 = vmatpush1.msra.mxu0 0.0
    %938 = vmatprep.subr.mxu0 0.0
    %939 = vmatpush1.msra.mxu0 0.0
    %940 = vmatprep.subr.mxu0 0.0
    %941 = vmatpush1.msra.mxu0 0.0
    %942 = vmatprep.subr.mxu0 0.0
    %943 = vmatpush1.msra.mxu0 0.0
    %944 = vmatprep.subr.mxu0 0.0
    %945 = vmatpush1.msra.mxu0 0.0
    %946 = vmatprep.subr.mxu0 0.0
    %947 = vmatpush1.msra.mxu0 0.0
    %948 = vmatprep.subr.mxu0 0.0
    %949 = vmatpush1.msra.mxu0 0.0
    %950 = vmatprep.subr.mxu0 0.0
    %951 = vmatpush1.msra.mxu0 0.0
    %952 = vmatprep.subr.mxu0 0.0
    %953 = vmatpush1.msra.mxu0 0.0
    %954 = vmatprep.subr.mxu0 0.0
    %955 = vmatpush1.msra.mxu0 0.0
    %956 = vmatprep.mubr.f32.mxu0 0.0
    %957 = vmatmul.mubr.f32.gmra.mrb[0].mxu0 %v700
    %v958 = vpop.f32.mrb[0].mxu0
    %v959 = vadd.f32 %v814, %v958
    %v960 = vpop.f32.mrb[0].mxu0
    %961 = vmatprep.mubr.f32.mxu0 0.0
    %962 = vmatmul.mubr.f32.gmra.mrb[0].mxu0 %v703
    %v963 = vpop.f32.mrb[0].mxu0
    %v964 = vadd.f32 %v819, %v963
    %v965 = vpop.f32.mrb[0].mxu0
    %966 = vmatprep.mubr.f32.mxu0 0.0
    %967 = vmatmul.mubr.f32.gmra.mrb[0].mxu0 %v706
    %v968 = vpop.f32.mrb[0].mxu0
    %v969 = vadd.f32 %v824, %v968
    %v970 = vpop.f32.mrb[0].mxu0
    %971 = vmatprep.mubr.f32.mxu0 0.0
    %972 = vmatmul.mubr.f32.gmra.mrb[0].mxu0 %v709
    %v973 = vpop.f32.mrb[0].mxu0
    %v974 = vadd.f32 %v829, %v973
    %v975 = vpop.f32.mrb[0].mxu0
    %976 = vmatprep.mubr.f32.mxu0 0.0
    %977 = vmatmul.mubr.f32.gmra.mrb[0].mxu0 %v712
    %v978 = vpop.f32.mrb[0].mxu0
    %v979 = vadd.f32 %v834, %v978
    %v980 = vpop.f32.mrb[0].mxu0
    %981 = vmatprep.mubr.f32.mxu0 0.0
    %982 = vmatmul.mubr.f32.gmra.mrb[0].mxu0 %v715
    %v983 = vpop.f32.mrb[0].mxu0
    %v984 = vadd.f32 %v839, %v983
    %v985 = vpop.f32.mrb[0].mxu0
    %986 = vmatprep.mubr.f32.mxu0 0.0
    %987 = vmatmul.mubr.f32.gmra.mrb[0].mxu0 %v718
    %v988 = vpop.f32.mrb[0].mxu0
    %v989 = vadd.f32 %v844, %v988
    %v990 = vpop.f32.mrb[0].mxu0
    %991 = vmatprep.mubr.f32.mxu0 0.0
    %992 = vmatmul.mubr.f32.gmra.mrb[0].mxu0 %v721
    %v993 = vpop.f32.mrb[0].mxu0
    %v994 = vadd.f32 %v849, %v993
    %v995 = vpop.f32.mrb[0].mxu0
    %996 = vmatprep.mubr.f32.mxu0 0.0
    %997 = vmatmul.mubr.f32.gmra.mrb[0].mxu0 %v724
    %v998 = vpop.f32.mrb[0].mxu0
    %v999 = vadd.f32 %v854, %v998
    %v1000 = vpop.f32.mrb[0].mxu0
    %1001 = vmatprep.mubr.f32.mxu0 0.0
    %1002 = vmatmul.mubr.f32.gmra.mrb[0].mxu0 %v727
    %v1003 = vpop.f32.mrb[0].mxu0
    %v1004 = vadd.f32 %v859, %v1003
    %v1005 = vpop.f32.mrb[0].mxu0
    %1006 = vmatprep.mubr.f32.mxu0 0.0
    %1007 = vmatmul.mubr.f32.gmra.mrb[0].mxu0 %v730
    %v1008 = vpop.f32.mrb[0].mxu0
    %v1009 = vadd.f32 %v864, %v1008
    %v1010 = vpop.f32.mrb[0].mxu0
    %1011 = vmatprep.mubr.f32.mxu0 0.0
    %1012 = vmatmul.mubr.f32.gmra.mrb[0].mxu0 %v733
    %v1013 = vpop.f32.mrb[0].mxu0
    %v1014 = vadd.f32 %v869, %v1013
    %v1015 = vpop.f32.mrb[0].mxu0
    %1016 = vmatprep.mubr.f32.mxu0 0.0
    %1017 = vmatmul.mubr.f32.gmra.mrb[0].mxu0 %v736
    %v1018 = vpop.f32.mrb[0].mxu0
    %v1019 = vadd.f32 %v874, %v1018
    %v1020 = vpop.f32.mrb[0].mxu0
    %1021 = vmatprep.mubr.f32.mxu0 0.0
    %1022 = vmatmul.mubr.f32.gmra.mrb[0].mxu0 %v739
    %v1023 = vpop.f32.mrb[0].mxu0
    %v1024 = vadd.f32 %v879, %v1023
    %v1025 = vpop.f32.mrb[0].mxu0
    %1026 = vmatprep.mubr.f32.mxu0 0.0
    %1027 = vmatmul.mubr.f32.gmra.mrb[0].mxu0 %v742
    %v1028 = vpop.f32.mrb[0].mxu0
    %v1029 = vadd.f32 %v884, %v1028
    %v1030 = vpop.f32.mrb[0].mxu0
    %1031 = vmatprep.mubr.f32.mxu0 0.0
    %1032 = vmatmul.mubr.f32.gmra.mrb[0].mxu0 %v745
    %v1033 = vpop.f32.mrb[0].mxu0
    %v1034 = vadd.f32 %v889, %v1033
    %v1035 = vpop.f32.mrb[0].mxu0
    %1036 = vdwg.mxu0
    %v1037 = vsel %vm557, %v959, 0.0
    %v1038 = vsel %vm557, %v964, 0.0
    %v1039 = vadd.f32 %v1037, %v1038
    %v1040 = vsel %vm557, %v969, 0.0
    %v1041 = vadd.f32 %v1039, %v1040
    %v1042 = vsel %vm557, %v974, 0.0
    %v1043 = vadd.f32 %v1041, %v1042
    %v1044 = vsel %vm557, %v979, 0.0
    %v1045 = vadd.f32 %v1043, %v1044
    %v1046 = vsel %vm557, %v984, 0.0
    %v1047 = vadd.f32 %v1045, %v1046
    %v1048 = vsel %vm557, %v989, 0.0
    %v1049 = vadd.f32 %v1047, %v1048
    %v1050 = vsel %vm557, %v994, 0.0
    %v1051 = vadd.f32 %v1049, %v1050
    %v1052 = vrot.slane %v1051, 4
    %v1053 = vadd.f32 %v1051, %v1052
    %v1054 = vrot.slane %v1053, 2
    %v1055 = vadd.f32 %v1053, %v1054
    %v1056 = vrot.slane %v1055, 1
    %v1057 = vadd.f32 %v1055, %v1056
    %v1058 = vsel %vm557, %v999, 0.0
    %v1059 = vsel %vm557, %v1004, 0.0
    %v1060 = vadd.f32 %v1058, %v1059
    %v1061 = vsel %vm557, %v1009, 0.0
    %v1062 = vadd.f32 %v1060, %v1061
    %v1063 = vsel %vm557, %v1014, 0.0
    %v1064 = vadd.f32 %v1062, %v1063
    %v1065 = vsel %vm557, %v1019, 0.0
    %v1066 = vadd.f32 %v1064, %v1065
    %v1067 = vsel %vm557, %v1024, 0.0
    %v1068 = vadd.f32 %v1066, %v1067
    %v1069 = vsel %vm557, %v1029, 0.0
    %v1070 = vadd.f32 %v1068, %v1069
    %v1071 = vsel %vm557, %v1034, 0.0
    %v1072 = vadd.f32 %v1070, %v1071
    %v1073 = vrot.slane %v1072, 4
    %v1074 = vadd.f32 %v1072, %v1073
    %v1075 = vrot.slane %v1074, 2
    %v1076 = vadd.f32 %v1074, %v1075
    %v1077 = vrot.slane %v1076, 1
    %v1078 = vadd.f32 %v1076, %v1077
    %v1079 = vrcp.pop 64.0
    %v1080 = vmul.f32 %v1057, %v1079
    %v1081 = vmul.f32 %v1078, %v1079
    %v1082 = vsub.f32 %v959, %v1080
    %v1083 = vsub.f32 %v964, %v1080
    %v1084 = vsub.f32 %v969, %v1080
    %v1085 = vsub.f32 %v974, %v1080
    %v1086 = vsub.f32 %v979, %v1080
    %v1087 = vsub.f32 %v984, %v1080
    %v1088 = vsub.f32 %v989, %v1080
    %v1089 = vsub.f32 %v994, %v1080
    %v1090 = vsub.f32 %v999, %v1081
    %v1091 = vsub.f32 %v1004, %v1081
    %v1092 = vsub.f32 %v1009, %v1081
    %v1093 = vsub.f32 %v1014, %v1081
    %v1094 = vsub.f32 %v1019, %v1081
    %v1095 = vsub.f32 %v1024, %v1081
    %v1096 = vsub.f32 %v1029, %v1081
    %v1097 = vsub.f32 %v1034, %v1081
    %v1098 = vmul.f32 %v1082, %v1082
    %v1099 = vmul.f32 %v1083, %v1083
    %v1100 = vmul.f32 %v1084, %v1084
    %v1101 = vmul.f32 %v1085, %v1085
    %v1102 = vmul.f32 %v1086, %v1086
    %v1103 = vmul.f32 %v1087, %v1087
    %v1104 = vmul.f32 %v1088, %v1088
    %v1105 = vmul.f32 %v1089, %v1089
    %v1106 = vmul.f32 %v1090, %v1090
    %v1107 = vmul.f32 %v1091, %v1091
    %v1108 = vmul.f32 %v1092, %v1092
    %v1109 = vmul.f32 %v1093, %v1093
    %v1110 = vmul.f32 %v1094, %v1094
    %v1111 = vmul.f32 %v1095, %v1095
    %v1112 = vmul.f32 %v1096, %v1096
    %v1113 = vmul.f32 %v1097, %v1097
    %v1114 = vsel %vm557, %v1098, 0.0
    %v1115 = vsel %vm557, %v1099, 0.0
    %v1116 = vadd.f32 %v1114, %v1115
    %v1117 = vsel %vm557, %v1100, 0.0
    %v1118 = vadd.f32 %v1116, %v1117
    %v1119 = vsel %vm557, %v1101, 0.0
    %v1120 = vadd.f32 %v1118, %v1119
    %v1121 = vsel %vm557, %v1102, 0.0
    %v1122 = vadd.f32 %v1120, %v1121
    %v1123 = vsel %vm557, %v1103, 0.0
    %v1124 = vadd.f32 %v1122, %v1123
    %v1125 = vsel %vm557, %v1104, 0.0
    %v1126 = vadd.f32 %v1124, %v1125
    %v1127 = vsel %vm557, %v1105, 0.0
    %v1128 = vadd.f32 %v1126, %v1127
    %v1129 = vrot.slane %v1128, 4
    %v1130 = vadd.f32 %v1128, %v1129
    %v1131 = vrot.slane %v1130, 2
    %v1132 = vadd.f32 %v1130, %v1131
    %v1133 = vrot.slane %v1132, 1
    %v1134 = vadd.f32 %v1132, %v1133
    %v1135 = vsel %vm557, %v1106, 0.0
    %v1136 = vsel %vm557, %v1107, 0.0
    %v1137 = vadd.f32 %v1135, %v1136
    %v1138 = vsel %vm557, %v1108, 0.0
    %v1139 = vadd.f32 %v1137, %v1138
    %v1140 = vsel %vm557, %v1109, 0.0
    %v1141 = vadd.f32 %v1139, %v1140
    %v1142 = vsel %vm557, %v1110, 0.0
    %v1143 = vadd.f32 %v1141, %v1142
    %v1144 = vsel %vm557, %v1111, 0.0
    %v1145 = vadd.f32 %v1143, %v1144
    %v1146 = vsel %vm557, %v1112, 0.0
    %v1147 = vadd.f32 %v1145, %v1146
    %v1148 = vsel %vm557, %v1113, 0.0
    %v1149 = vadd.f32 %v1147, %v1148
    %v1150 = vrot.slane %v1149, 4
    %v1151 = vadd.f32 %v1149, %v1150
    %v1152 = vrot.slane %v1151, 2
    %v1153 = vadd.f32 %v1151, %v1152
    %v1154 = vrot.slane %v1153, 1
    %v1155 = vadd.f32 %v1153, %v1154
    %v1156 = vmul.f32 %v1134, %v1079
    %v1157 = vmul.f32 %v1155, %v1079
    %v1158 = vadd.f32 %v1156, 1e-05
    %v1159 = vadd.f32 %v1157, 1e-05
    %v1160 = vrsqrt.pop %v1158
    %v1161 = vrsqrt.pop %v1159
    %v1162 = vmul.f32 %v1082, %v1160
    %v1163 = vmul.f32 %v1083, %v1160
    %v1164 = vmul.f32 %v1084, %v1160
    %v1165 = vmul.f32 %v1085, %v1160
    %v1166 = vmul.f32 %v1086, %v1160
    %v1167 = vmul.f32 %v1087, %v1160
    %v1168 = vmul.f32 %v1088, %v1160
    %v1169 = vmul.f32 %v1089, %v1160
    %v1170 = vmul.f32 %v1090, %v1161
    %v1171 = vmul.f32 %v1091, %v1161
    %v1172 = vmul.f32 %v1092, %v1161
    %v1173 = vmul.f32 %v1093, %v1161
    %v1174 = vmul.f32 %v1094, %v1161
    %v1175 = vmul.f32 %v1095, %v1161
    %v1176 = vmul.f32 %v1096, %v1161
    %v1177 = vmul.f32 %v1097, %v1161
    %v1178 = vld [vmem:[%s3] sm:$0x1]
    %v1180 = vlaneseq
    %v1181 = vshrl.u32 %v1180, 7
    %v1182 = vsub.s32 0, %v1181
    %v1183 = vrot.slane %v1178, %v1182
    %v1185 = vmul.f32 %v1162, %v1183
    %v1186 = vmul.f32 %v1163, %v1183
    %v1187 = vmul.f32 %v1164, %v1183
    %v1188 = vmul.f32 %v1165, %v1183
    %v1189 = vmul.f32 %v1166, %v1183
    %v1190 = vmul.f32 %v1167, %v1183
    %v1191 = vmul.f32 %v1168, %v1183
    %v1192 = vmul.f32 %v1169, %v1183
    %v1193 = vmul.f32 %v1170, %v1183
    %v1194 = vmul.f32 %v1171, %v1183
    %v1195 = vmul.f32 %v1172, %v1183
    %v1196 = vmul.f32 %v1173, %v1183
    %v1197 = vmul.f32 %v1174, %v1183
    %v1198 = vmul.f32 %v1175, %v1183
    %v1199 = vmul.f32 %v1176, %v1183
    %v1200 = vmul.f32 %v1177, %v1183
    %v1201 = vld [vmem:[%s4] sm:$0x1]
    %v1203 = vlaneseq
    %v1204 = vshrl.u32 %v1203, 7
    %v1205 = vsub.s32 0, %v1204
    %v1206 = vrot.slane %v1201, %v1205
    %v1208 = vadd.f32 %v1185, %v1206
    %v1209 = vadd.f32 %v1186, %v1206
    %v1210 = vadd.f32 %v1187, %v1206
    %v1211 = vadd.f32 %v1188, %v1206
    %v1212 = vadd.f32 %v1189, %v1206
    %v1213 = vadd.f32 %v1190, %v1206
    %v1214 = vadd.f32 %v1191, %v1206
    %v1215 = vadd.f32 %v1192, %v1206
    %v1216 = vadd.f32 %v1193, %v1206
    %v1217 = vadd.f32 %v1194, %v1206
    %v1218 = vadd.f32 %v1195, %v1206
    %v1219 = vadd.f32 %v1196, %v1206
    %v1220 = vadd.f32 %v1197, %v1206
    %v1221 = vadd.f32 %v1198, %v1206
    %v1222 = vadd.f32 %v1199, %v1206
    %v1223 = vadd.f32 %v1200, %v1206
    %v1224 = vmax.f32 %v1208, 0.0
    %v1225 = vmax.f32 %v1209, 0.0
    %v1226 = vmax.f32 %v1210, 0.0
    %v1227 = vmax.f32 %v1211, 0.0
    %v1228 = vmax.f32 %v1212, 0.0
    %v1229 = vmax.f32 %v1213, 0.0
    %v1230 = vmax.f32 %v1214, 0.0
    %v1231 = vmax.f32 %v1215, 0.0
    %v1232 = vmax.f32 %v1216, 0.0
    %v1233 = vmax.f32 %v1217, 0.0
    %v1234 = vmax.f32 %v1218, 0.0
    %v1235 = vmax.f32 %v1219, 0.0
    %v1236 = vmax.f32 %v1220, 0.0
    %v1237 = vmax.f32 %v1221, 0.0
    %v1238 = vmax.f32 %v1222, 0.0
    %v1239 = vmax.f32 %v1223, 0.0
    %v1240 = vld [vmem:[%s6] sm:$0xff]
    %v1241 = vld [vmem:[%s6 + $0x8] sm:$0xff]
    %vm1242 = vcmask 64512
    %v1244 = vsel %vm1242, %v1240, 0
    %v1247 = vsel %vm1242, %v1241, 0
    %1249 = vmatprep.subr.mxu0 0.0
    %1250 = vmatpush1.msra.mxu0 %v1224
    %1251 = vmatprep.subr.mxu0 0.0
    %1252 = vmatpush1.msra.mxu0 0.0
    %1253 = vmatprep.subr.mxu0 0.0
    %1254 = vmatpush1.msra.mxu0 0.0
    %1255 = vmatprep.subr.mxu0 0.0
    %1256 = vmatpush1.msra.mxu0 0.0
    %1257 = vmatprep.subr.mxu0 0.0
    %1258 = vmatpush1.msra.mxu0 0.0
    %1259 = vmatprep.subr.mxu0 0.0
    %1260 = vmatpush1.msra.mxu0 0.0
    %1261 = vmatprep.subr.mxu0 0.0
    %1262 = vmatpush1.msra.mxu0 0.0
    %1263 = vmatprep.subr.mxu0 0.0
    %1264 = vmatpush1.msra.mxu0 0.0
    %1265 = vmatprep.subr.mxu0 0.0
    %1266 = vmatpush1.msra.mxu0 0.0
    %1267 = vmatprep.subr.mxu0 0.0
    %1268 = vmatpush1.msra.mxu0 0.0
    %1269 = vmatprep.subr.mxu0 0.0
    %1270 = vmatpush1.msra.mxu0 0.0
    %1271 = vmatprep.subr.mxu0 0.0
    %1272 = vmatpush1.msra.mxu0 0.0
    %1273 = vmatprep.subr.mxu0 0.0
    %1274 = vmatpush1.msra.mxu0 0.0
    %1275 = vmatprep.subr.mxu0 0.0
    %1276 = vmatpush1.msra.mxu0 0.0
    %1277 = vmatprep.subr.mxu0 0.0
    %1278 = vmatpush1.msra.mxu0 0.0
    %1279 = vmatprep.subr.mxu0 0.0
    %1280 = vmatpush1.msra.mxu0 0.0
    %1281 = vmatprep.subr.mxu0 0.0
    %1282 = vmatpush1.msra.mxu0 0.0
    %1283 = vmatprep.subr.mxu0 0.0
    %1284 = vmatpush1.msra.mxu0 0.0
    %1285 = vmatprep.subr.mxu0 0.0
    %1286 = vmatpush1.msra.mxu0 0.0
    %1287 = vmatprep.subr.mxu0 0.0
    %1288 = vmatpush1.msra.mxu0 0.0
    %1289 = vmatprep.subr.mxu0 0.0
    %1290 = vmatpush1.msra.mxu0 0.0
    %1291 = vmatprep.subr.mxu0 0.0
    %1292 = vmatpush1.msra.mxu0 0.0
    %1293 = vmatprep.subr.mxu0 0.0
    %1294 = vmatpush1.msra.mxu0 0.0
    %1295 = vmatprep.subr.mxu0 0.0
    %1296 = vmatpush1.msra.mxu0 0.0
    %1297 = vmatprep.subr.mxu0 0.0
    %1298 = vmatpush1.msra.mxu0 0.0
    %1299 = vmatprep.subr.mxu0 0.0
    %1300 = vmatpush1.msra.mxu0 0.0
    %1301 = vmatprep.subr.mxu0 0.0
    %1302 = vmatpush1.msra.mxu0 0.0
    %1303 = vmatprep.subr.mxu0 0.0
    %1304 = vmatpush1.msra.mxu0 0.0
    %1305 = vmatprep.subr.mxu0 0.0
    %1306 = vmatpush1.msra.mxu0 0.0
    %1307 = vmatprep.subr.mxu0 0.0
    %1308 = vmatpush1.msra.mxu0 0.0
    %1309 = vmatprep.subr.mxu0 0.0
    %1310 = vmatpush1.msra.mxu0 0.0
    %1311 = vmatprep.subr.mxu0 0.0
    %1312 = vmatpush1.msra.mxu0 0.0
    %1313 = vmatprep.mubr.f32.mxu0 0.0
    %1314 = vmatmul.mubr.f32.gmra.mrb[0].mxu0 %v1244
    %v1315 = vpop.f32.mrb[0].mxu0
    %v1316 = vadd.f32 0.0, %v1315
    %v1317 = vpop.f32.mrb[0].mxu0
    %1318 = vmatprep.mubr.f32.mxu0 0.0
    %1319 = vmatmul.mubr.f32.gmra.mrb[0].mxu0 %v1247
    %v1320 = vpop.f32.mrb[0].mxu0
    %v1321 = vadd.f32 0.0, %v1320
    %v1322 = vpop.f32.mrb[0].mxu0
    %1323 = vdwg.mxu0
    %1324 = vmatprep.subr.mxu0 0.0
    %1325 = vmatpush1.msra.mxu0 %v1225
    %1326 = vmatprep.subr.mxu0 0.0
    %1327 = vmatpush1.msra.mxu0 0.0
    %1328 = vmatprep.subr.mxu0 0.0
    %1329 = vmatpush1.msra.mxu0 0.0
    %1330 = vmatprep.subr.mxu0 0.0
    %1331 = vmatpush1.msra.mxu0 0.0
    %1332 = vmatprep.subr.mxu0 0.0
    %1333 = vmatpush1.msra.mxu0 0.0
    %1334 = vmatprep.subr.mxu0 0.0
    %1335 = vmatpush1.msra.mxu0 0.0
    %1336 = vmatprep.subr.mxu0 0.0
    %1337 = vmatpush1.msra.mxu0 0.0
    %1338 = vmatprep.subr.mxu0 0.0
    %1339 = vmatpush1.msra.mxu0 0.0
    %1340 = vmatprep.subr.mxu0 0.0
    %1341 = vmatpush1.msra.mxu0 0.0
    %1342 = vmatprep.subr.mxu0 0.0
    %1343 = vmatpush1.msra.mxu0 0.0
    %1344 = vmatprep.subr.mxu0 0.0
    %1345 = vmatpush1.msra.mxu0 0.0
    %1346 = vmatprep.subr.mxu0 0.0
    %1347 = vmatpush1.msra.mxu0 0.0
    %1348 = vmatprep.subr.mxu0 0.0
    %1349 = vmatpush1.msra.mxu0 0.0
    %1350 = vmatprep.subr.mxu0 0.0
    %1351 = vmatpush1.msra.mxu0 0.0
    %1352 = vmatprep.subr.mxu0 0.0
    %1353 = vmatpush1.msra.mxu0 0.0
    %1354 = vmatprep.subr.mxu0 0.0
    %1355 = vmatpush1.msra.mxu0 0.0
    %1356 = vmatprep.subr.mxu0 0.0
    %1357 = vmatpush1.msra.mxu0 0.0
    %1358 = vmatprep.subr.mxu0 0.0
    %1359 = vmatpush1.msra.mxu0 0.0
    %1360 = vmatprep.subr.mxu0 0.0
    %1361 = vmatpush1.msra.mxu0 0.0
    %1362 = vmatprep.subr.mxu0 0.0
    %1363 = vmatpush1.msra.mxu0 0.0
    %1364 = vmatprep.subr.mxu0 0.0
    %1365 = vmatpush1.msra.mxu0 0.0
    %1366 = vmatprep.subr.mxu0 0.0
    %1367 = vmatpush1.msra.mxu0 0.0
    %1368 = vmatprep.subr.mxu0 0.0
    %1369 = vmatpush1.msra.mxu0 0.0
    %1370 = vmatprep.subr.mxu0 0.0
    %1371 = vmatpush1.msra.mxu0 0.0
    %1372 = vmatprep.subr.mxu0 0.0
    %1373 = vmatpush1.msra.mxu0 0.0
    %1374 = vmatprep.subr.mxu0 0.0
    %1375 = vmatpush1.msra.mxu0 0.0
    %1376 = vmatprep.subr.mxu0 0.0
    %1377 = vmatpush1.msra.mxu0 0.0
    %1378 = vmatprep.subr.mxu0 0.0
    %1379 = vmatpush1.msra.mxu0 0.0
    %1380 = vmatprep.subr.mxu0 0.0
    %1381 = vmatpush1.msra.mxu0 0.0
    %1382 = vmatprep.subr.mxu0 0.0
    %1383 = vmatpush1.msra.mxu0 0.0
    %1384 = vmatprep.subr.mxu0 0.0
    %1385 = vmatpush1.msra.mxu0 0.0
    %1386 = vmatprep.subr.mxu0 0.0
    %1387 = vmatpush1.msra.mxu0 0.0
    %1388 = vmatprep.mubr.f32.mxu0 0.0
    %1389 = vmatmul.mubr.f32.gmra.mrb[0].mxu0 %v1244
    %v1390 = vpop.f32.mrb[0].mxu0
    %v1391 = vadd.f32 0.0, %v1390
    %v1392 = vpop.f32.mrb[0].mxu0
    %1393 = vmatprep.mubr.f32.mxu0 0.0
    %1394 = vmatmul.mubr.f32.gmra.mrb[0].mxu0 %v1247
    %v1395 = vpop.f32.mrb[0].mxu0
    %v1396 = vadd.f32 0.0, %v1395
    %v1397 = vpop.f32.mrb[0].mxu0
    %1398 = vdwg.mxu0
    %1399 = vmatprep.subr.mxu0 0.0
    %1400 = vmatpush1.msra.mxu0 %v1226
    %1401 = vmatprep.subr.mxu0 0.0
    %1402 = vmatpush1.msra.mxu0 0.0
    %1403 = vmatprep.subr.mxu0 0.0
    %1404 = vmatpush1.msra.mxu0 0.0
    %1405 = vmatprep.subr.mxu0 0.0
    %1406 = vmatpush1.msra.mxu0 0.0
    %1407 = vmatprep.subr.mxu0 0.0
    %1408 = vmatpush1.msra.mxu0 0.0
    %1409 = vmatprep.subr.mxu0 0.0
    %1410 = vmatpush1.msra.mxu0 0.0
    %1411 = vmatprep.subr.mxu0 0.0
    %1412 = vmatpush1.msra.mxu0 0.0
    %1413 = vmatprep.subr.mxu0 0.0
    %1414 = vmatpush1.msra.mxu0 0.0
    %1415 = vmatprep.subr.mxu0 0.0
    %1416 = vmatpush1.msra.mxu0 0.0
    %1417 = vmatprep.subr.mxu0 0.0
    %1418 = vmatpush1.msra.mxu0 0.0
    %1419 = vmatprep.subr.mxu0 0.0
    %1420 = vmatpush1.msra.mxu0 0.0
    %1421 = vmatprep.subr.mxu0 0.0
    %1422 = vmatpush1.msra.mxu0 0.0
    %1423 = vmatprep.subr.mxu0 0.0
    %1424 = vmatpush1.msra.mxu0 0.0
    %1425 = vmatprep.subr.mxu0 0.0
    %1426 = vmatpush1.msra.mxu0 0.0
    %1427 = vmatprep.subr.mxu0 0.0
    %1428 = vmatpush1.msra.mxu0 0.0
    %1429 = vmatprep.subr.mxu0 0.0
    %1430 = vmatpush1.msra.mxu0 0.0
    %1431 = vmatprep.subr.mxu0 0.0
    %1432 = vmatpush1.msra.mxu0 0.0
    %1433 = vmatprep.subr.mxu0 0.0
    %1434 = vmatpush1.msra.mxu0 0.0
    %1435 = vmatprep.subr.mxu0 0.0
    %1436 = vmatpush1.msra.mxu0 0.0
    %1437 = vmatprep.subr.mxu0 0.0
    %1438 = vmatpush1.msra.mxu0 0.0
    %1439 = vmatprep.subr.mxu0 0.0
    %1440 = vmatpush1.msra.mxu0 0.0
    %1441 = vmatprep.subr.mxu0 0.0
    %1442 = vmatpush1.msra.mxu0 0.0
    %1443 = vmatprep.subr.mxu0 0.0
    %1444 = vmatpush1.msra.mxu0 0.0
    %1445 = vmatprep.subr.mxu0 0.0
    %1446 = vmatpush1.msra.mxu0 0.0
    %1447 = vmatprep.subr.mxu0 0.0
    %1448 = vmatpush1.msra.mxu0 0.0
    %1449 = vmatprep.subr.mxu0 0.0
    %1450 = vmatpush1.msra.mxu0 0.0
    %1451 = vmatprep.subr.mxu0 0.0
    %1452 = vmatpush1.msra.mxu0 0.0
    %1453 = vmatprep.subr.mxu0 0.0
    %1454 = vmatpush1.msra.mxu0 0.0
    %1455 = vmatprep.subr.mxu0 0.0
    %1456 = vmatpush1.msra.mxu0 0.0
    %1457 = vmatprep.subr.mxu0 0.0
    %1458 = vmatpush1.msra.mxu0 0.0
    %1459 = vmatprep.subr.mxu0 0.0
    %1460 = vmatpush1.msra.mxu0 0.0
    %1461 = vmatprep.subr.mxu0 0.0
    %1462 = vmatpush1.msra.mxu0 0.0
    %1463 = vmatprep.mubr.f32.mxu0 0.0
    %1464 = vmatmul.mubr.f32.gmra.mrb[0].mxu0 %v1244
    %v1465 = vpop.f32.mrb[0].mxu0
    %v1466 = vadd.f32 0.0, %v1465
    %v1467 = vpop.f32.mrb[0].mxu0
    %1468 = vmatprep.mubr.f32.mxu0 0.0
    %1469 = vmatmul.mubr.f32.gmra.mrb[0].mxu0 %v1247
    %v1470 = vpop.f32.mrb[0].mxu0
    %v1471 = vadd.f32 0.0, %v1470
    %v1472 = vpop.f32.mrb[0].mxu0
    %1473 = vdwg.mxu0
    %1474 = vmatprep.subr.mxu0 0.0
    %1475 = vmatpush1.msra.mxu0 %v1227
    %1476 = vmatprep.subr.mxu0 0.0
    %1477 = vmatpush1.msra.mxu0 0.0
    %1478 = vmatprep.subr.mxu0 0.0
    %1479 = vmatpush1.msra.mxu0 0.0
    %1480 = vmatprep.subr.mxu0 0.0
    %1481 = vmatpush1.msra.mxu0 0.0
    %1482 = vmatprep.subr.mxu0 0.0
    %1483 = vmatpush1.msra.mxu0 0.0
    %1484 = vmatprep.subr.mxu0 0.0
    %1485 = vmatpush1.msra.mxu0 0.0
    %1486 = vmatprep.subr.mxu0 0.0
    %1487 = vmatpush1.msra.mxu0 0.0
    %1488 = vmatprep.subr.mxu0 0.0
    %1489 = vmatpush1.msra.mxu0 0.0
    %1490 = vmatprep.subr.mxu0 0.0
    %1491 = vmatpush1.msra.mxu0 0.0
    %1492 = vmatprep.subr.mxu0 0.0
    %1493 = vmatpush1.msra.mxu0 0.0
    %1494 = vmatprep.subr.mxu0 0.0
    %1495 = vmatpush1.msra.mxu0 0.0
    %1496 = vmatprep.subr.mxu0 0.0
    %1497 = vmatpush1.msra.mxu0 0.0
    %1498 = vmatprep.subr.mxu0 0.0
    %1499 = vmatpush1.msra.mxu0 0.0
    %1500 = vmatprep.subr.mxu0 0.0
    %1501 = vmatpush1.msra.mxu0 0.0
    %1502 = vmatprep.subr.mxu0 0.0
    %1503 = vmatpush1.msra.mxu0 0.0
    %1504 = vmatprep.subr.mxu0 0.0
    %1505 = vmatpush1.msra.mxu0 0.0
    %1506 = vmatprep.subr.mxu0 0.0
    %1507 = vmatpush1.msra.mxu0 0.0
    %1508 = vmatprep.subr.mxu0 0.0
    %1509 = vmatpush1.msra.mxu0 0.0
    %1510 = vmatprep.subr.mxu0 0.0
    %1511 = vmatpush1.msra.mxu0 0.0
    %1512 = vmatprep.subr.mxu0 0.0
    %1513 = vmatpush1.msra.mxu0 0.0
    %1514 = vmatprep.subr.mxu0 0.0
    %1515 = vmatpush1.msra.mxu0 0.0
    %1516 = vmatprep.subr.mxu0 0.0
    %1517 = vmatpush1.msra.mxu0 0.0
    %1518 = vmatprep.subr.mxu0 0.0
    %1519 = vmatpush1.msra.mxu0 0.0
    %1520 = vmatprep.subr.mxu0 0.0
    %1521 = vmatpush1.msra.mxu0 0.0
    %1522 = vmatprep.subr.mxu0 0.0
    %1523 = vmatpush1.msra.mxu0 0.0
    %1524 = vmatprep.subr.mxu0 0.0
    %1525 = vmatpush1.msra.mxu0 0.0
    %1526 = vmatprep.subr.mxu0 0.0
    %1527 = vmatpush1.msra.mxu0 0.0
    %1528 = vmatprep.subr.mxu0 0.0
    %1529 = vmatpush1.msra.mxu0 0.0
    %1530 = vmatprep.subr.mxu0 0.0
    %1531 = vmatpush1.msra.mxu0 0.0
    %1532 = vmatprep.subr.mxu0 0.0
    %1533 = vmatpush1.msra.mxu0 0.0
    %1534 = vmatprep.subr.mxu0 0.0
    %1535 = vmatpush1.msra.mxu0 0.0
    %1536 = vmatprep.subr.mxu0 0.0
    %1537 = vmatpush1.msra.mxu0 0.0
    %1538 = vmatprep.mubr.f32.mxu0 0.0
    %1539 = vmatmul.mubr.f32.gmra.mrb[0].mxu0 %v1244
    %v1540 = vpop.f32.mrb[0].mxu0
    %v1541 = vadd.f32 0.0, %v1540
    %v1542 = vpop.f32.mrb[0].mxu0
    %1543 = vmatprep.mubr.f32.mxu0 0.0
    %1544 = vmatmul.mubr.f32.gmra.mrb[0].mxu0 %v1247
    %v1545 = vpop.f32.mrb[0].mxu0
    %v1546 = vadd.f32 0.0, %v1545
    %v1547 = vpop.f32.mrb[0].mxu0
    %1548 = vdwg.mxu0
    %1549 = vmatprep.subr.mxu0 0.0
    %1550 = vmatpush1.msra.mxu0 %v1228
    %1551 = vmatprep.subr.mxu0 0.0
    %1552 = vmatpush1.msra.mxu0 0.0
    %1553 = vmatprep.subr.mxu0 0.0
    %1554 = vmatpush1.msra.mxu0 0.0
    %1555 = vmatprep.subr.mxu0 0.0
    %1556 = vmatpush1.msra.mxu0 0.0
    %1557 = vmatprep.subr.mxu0 0.0
    %1558 = vmatpush1.msra.mxu0 0.0
    %1559 = vmatprep.subr.mxu0 0.0
    %1560 = vmatpush1.msra.mxu0 0.0
    %1561 = vmatprep.subr.mxu0 0.0
    %1562 = vmatpush1.msra.mxu0 0.0
    %1563 = vmatprep.subr.mxu0 0.0
    %1564 = vmatpush1.msra.mxu0 0.0
    %1565 = vmatprep.subr.mxu0 0.0
    %1566 = vmatpush1.msra.mxu0 0.0
    %1567 = vmatprep.subr.mxu0 0.0
    %1568 = vmatpush1.msra.mxu0 0.0
    %1569 = vmatprep.subr.mxu0 0.0
    %1570 = vmatpush1.msra.mxu0 0.0
    %1571 = vmatprep.subr.mxu0 0.0
    %1572 = vmatpush1.msra.mxu0 0.0
    %1573 = vmatprep.subr.mxu0 0.0
    %1574 = vmatpush1.msra.mxu0 0.0
    %1575 = vmatprep.subr.mxu0 0.0
    %1576 = vmatpush1.msra.mxu0 0.0
    %1577 = vmatprep.subr.mxu0 0.0
    %1578 = vmatpush1.msra.mxu0 0.0
    %1579 = vmatprep.subr.mxu0 0.0
    %1580 = vmatpush1.msra.mxu0 0.0
    %1581 = vmatprep.subr.mxu0 0.0
    %1582 = vmatpush1.msra.mxu0 0.0
    %1583 = vmatprep.subr.mxu0 0.0
    %1584 = vmatpush1.msra.mxu0 0.0
    %1585 = vmatprep.subr.mxu0 0.0
    %1586 = vmatpush1.msra.mxu0 0.0
    %1587 = vmatprep.subr.mxu0 0.0
    %1588 = vmatpush1.msra.mxu0 0.0
    %1589 = vmatprep.subr.mxu0 0.0
    %1590 = vmatpush1.msra.mxu0 0.0
    %1591 = vmatprep.subr.mxu0 0.0
    %1592 = vmatpush1.msra.mxu0 0.0
    %1593 = vmatprep.subr.mxu0 0.0
    %1594 = vmatpush1.msra.mxu0 0.0
    %1595 = vmatprep.subr.mxu0 0.0
    %1596 = vmatpush1.msra.mxu0 0.0
    %1597 = vmatprep.subr.mxu0 0.0
    %1598 = vmatpush1.msra.mxu0 0.0
    %1599 = vmatprep.subr.mxu0 0.0
    %1600 = vmatpush1.msra.mxu0 0.0
    %1601 = vmatprep.subr.mxu0 0.0
    %1602 = vmatpush1.msra.mxu0 0.0
    %1603 = vmatprep.subr.mxu0 0.0
    %1604 = vmatpush1.msra.mxu0 0.0
    %1605 = vmatprep.subr.mxu0 0.0
    %1606 = vmatpush1.msra.mxu0 0.0
    %1607 = vmatprep.subr.mxu0 0.0
    %1608 = vmatpush1.msra.mxu0 0.0
    %1609 = vmatprep.subr.mxu0 0.0
    %1610 = vmatpush1.msra.mxu0 0.0
    %1611 = vmatprep.subr.mxu0 0.0
    %1612 = vmatpush1.msra.mxu0 0.0
    %1613 = vmatprep.mubr.f32.mxu0 0.0
    %1614 = vmatmul.mubr.f32.gmra.mrb[0].mxu0 %v1244
    %v1615 = vpop.f32.mrb[0].mxu0
    %v1616 = vadd.f32 0.0, %v1615
    %v1617 = vpop.f32.mrb[0].mxu0
    %1618 = vmatprep.mubr.f32.mxu0 0.0
    %1619 = vmatmul.mubr.f32.gmra.mrb[0].mxu0 %v1247
    %v1620 = vpop.f32.mrb[0].mxu0
    %v1621 = vadd.f32 0.0, %v1620
    %v1622 = vpop.f32.mrb[0].mxu0
    %1623 = vdwg.mxu0
    %1624 = vmatprep.subr.mxu0 0.0
    %1625 = vmatpush1.msra.mxu0 %v1229
    %1626 = vmatprep.subr.mxu0 0.0
    %1627 = vmatpush1.msra.mxu0 0.0
    %1628 = vmatprep.subr.mxu0 0.0
    %1629 = vmatpush1.msra.mxu0 0.0
    %1630 = vmatprep.subr.mxu0 0.0
    %1631 = vmatpush1.msra.mxu0 0.0
    %1632 = vmatprep.subr.mxu0 0.0
    %1633 = vmatpush1.msra.mxu0 0.0
    %1634 = vmatprep.subr.mxu0 0.0
    %1635 = vmatpush1.msra.mxu0 0.0
    %1636 = vmatprep.subr.mxu0 0.0
    %1637 = vmatpush1.msra.mxu0 0.0
    %1638 = vmatprep.subr.mxu0 0.0
    %1639 = vmatpush1.msra.mxu0 0.0
    %1640 = vmatprep.subr.mxu0 0.0
    %1641 = vmatpush1.msra.mxu0 0.0
    %1642 = vmatprep.subr.mxu0 0.0
    %1643 = vmatpush1.msra.mxu0 0.0
    %1644 = vmatprep.subr.mxu0 0.0
    %1645 = vmatpush1.msra.mxu0 0.0
    %1646 = vmatprep.subr.mxu0 0.0
    %1647 = vmatpush1.msra.mxu0 0.0
    %1648 = vmatprep.subr.mxu0 0.0
    %1649 = vmatpush1.msra.mxu0 0.0
    %1650 = vmatprep.subr.mxu0 0.0
    %1651 = vmatpush1.msra.mxu0 0.0
    %1652 = vmatprep.subr.mxu0 0.0
    %1653 = vmatpush1.msra.mxu0 0.0
    %1654 = vmatprep.subr.mxu0 0.0
    %1655 = vmatpush1.msra.mxu0 0.0
    %1656 = vmatprep.subr.mxu0 0.0
    %1657 = vmatpush1.msra.mxu0 0.0
    %1658 = vmatprep.subr.mxu0 0.0
    %1659 = vmatpush1.msra.mxu0 0.0
    %1660 = vmatprep.subr.mxu0 0.0
    %1661 = vmatpush1.msra.mxu0 0.0
    %1662 = vmatprep.subr.mxu0 0.0
    %1663 = vmatpush1.msra.mxu0 0.0
    %1664 = vmatprep.subr.mxu0 0.0
    %1665 = vmatpush1.msra.mxu0 0.0
    %1666 = vmatprep.subr.mxu0 0.0
    %1667 = vmatpush1.msra.mxu0 0.0
    %1668 = vmatprep.subr.mxu0 0.0
    %1669 = vmatpush1.msra.mxu0 0.0
    %1670 = vmatprep.subr.mxu0 0.0
    %1671 = vmatpush1.msra.mxu0 0.0
    %1672 = vmatprep.subr.mxu0 0.0
    %1673 = vmatpush1.msra.mxu0 0.0
    %1674 = vmatprep.subr.mxu0 0.0
    %1675 = vmatpush1.msra.mxu0 0.0
    %1676 = vmatprep.subr.mxu0 0.0
    %1677 = vmatpush1.msra.mxu0 0.0
    %1678 = vmatprep.subr.mxu0 0.0
    %1679 = vmatpush1.msra.mxu0 0.0
    %1680 = vmatprep.subr.mxu0 0.0
    %1681 = vmatpush1.msra.mxu0 0.0
    %1682 = vmatprep.subr.mxu0 0.0
    %1683 = vmatpush1.msra.mxu0 0.0
    %1684 = vmatprep.subr.mxu0 0.0
    %1685 = vmatpush1.msra.mxu0 0.0
    %1686 = vmatprep.subr.mxu0 0.0
    %1687 = vmatpush1.msra.mxu0 0.0
    %1688 = vmatprep.mubr.f32.mxu0 0.0
    %1689 = vmatmul.mubr.f32.gmra.mrb[0].mxu0 %v1244
    %v1690 = vpop.f32.mrb[0].mxu0
    %v1691 = vadd.f32 0.0, %v1690
    %v1692 = vpop.f32.mrb[0].mxu0
    %1693 = vmatprep.mubr.f32.mxu0 0.0
    %1694 = vmatmul.mubr.f32.gmra.mrb[0].mxu0 %v1247
    %v1695 = vpop.f32.mrb[0].mxu0
    %v1696 = vadd.f32 0.0, %v1695
    %v1697 = vpop.f32.mrb[0].mxu0
    %1698 = vdwg.mxu0
    %1699 = vmatprep.subr.mxu0 0.0
    %1700 = vmatpush1.msra.mxu0 %v1230
    %1701 = vmatprep.subr.mxu0 0.0
    %1702 = vmatpush1.msra.mxu0 0.0
    %1703 = vmatprep.subr.mxu0 0.0
    %1704 = vmatpush1.msra.mxu0 0.0
    %1705 = vmatprep.subr.mxu0 0.0
    %1706 = vmatpush1.msra.mxu0 0.0
    %1707 = vmatprep.subr.mxu0 0.0
    %1708 = vmatpush1.msra.mxu0 0.0
    %1709 = vmatprep.subr.mxu0 0.0
    %1710 = vmatpush1.msra.mxu0 0.0
    %1711 = vmatprep.subr.mxu0 0.0
    %1712 = vmatpush1.msra.mxu0 0.0
    %1713 = vmatprep.subr.mxu0 0.0
    %1714 = vmatpush1.msra.mxu0 0.0
    %1715 = vmatprep.subr.mxu0 0.0
    %1716 = vmatpush1.msra.mxu0 0.0
    %1717 = vmatprep.subr.mxu0 0.0
    %1718 = vmatpush1.msra.mxu0 0.0
    %1719 = vmatprep.subr.mxu0 0.0
    %1720 = vmatpush1.msra.mxu0 0.0
    %1721 = vmatprep.subr.mxu0 0.0
    %1722 = vmatpush1.msra.mxu0 0.0
    %1723 = vmatprep.subr.mxu0 0.0
    %1724 = vmatpush1.msra.mxu0 0.0
    %1725 = vmatprep.subr.mxu0 0.0
    %1726 = vmatpush1.msra.mxu0 0.0
    %1727 = vmatprep.subr.mxu0 0.0
    %1728 = vmatpush1.msra.mxu0 0.0
    %1729 = vmatprep.subr.mxu0 0.0
    %1730 = vmatpush1.msra.mxu0 0.0
    %1731 = vmatprep.subr.mxu0 0.0
    %1732 = vmatpush1.msra.mxu0 0.0
    %1733 = vmatprep.subr.mxu0 0.0
    %1734 = vmatpush1.msra.mxu0 0.0
    %1735 = vmatprep.subr.mxu0 0.0
    %1736 = vmatpush1.msra.mxu0 0.0
    %1737 = vmatprep.subr.mxu0 0.0
    %1738 = vmatpush1.msra.mxu0 0.0
    %1739 = vmatprep.subr.mxu0 0.0
    %1740 = vmatpush1.msra.mxu0 0.0
    %1741 = vmatprep.subr.mxu0 0.0
    %1742 = vmatpush1.msra.mxu0 0.0
    %1743 = vmatprep.subr.mxu0 0.0
    %1744 = vmatpush1.msra.mxu0 0.0
    %1745 = vmatprep.subr.mxu0 0.0
    %1746 = vmatpush1.msra.mxu0 0.0
    %1747 = vmatprep.subr.mxu0 0.0
    %1748 = vmatpush1.msra.mxu0 0.0
    %1749 = vmatprep.subr.mxu0 0.0
    %1750 = vmatpush1.msra.mxu0 0.0
    %1751 = vmatprep.subr.mxu0 0.0
    %1752 = vmatpush1.msra.mxu0 0.0
    %1753 = vmatprep.subr.mxu0 0.0
    %1754 = vmatpush1.msra.mxu0 0.0
    %1755 = vmatprep.subr.mxu0 0.0
    %1756 = vmatpush1.msra.mxu0 0.0
    %1757 = vmatprep.subr.mxu0 0.0
    %1758 = vmatpush1.msra.mxu0 0.0
    %1759 = vmatprep.subr.mxu0 0.0
    %1760 = vmatpush1.msra.mxu0 0.0
    %1761 = vmatprep.subr.mxu0 0.0
    %1762 = vmatpush1.msra.mxu0 0.0
    %1763 = vmatprep.mubr.f32.mxu0 0.0
    %1764 = vmatmul.mubr.f32.gmra.mrb[0].mxu0 %v1244
    %v1765 = vpop.f32.mrb[0].mxu0
    %v1766 = vadd.f32 0.0, %v1765
    %v1767 = vpop.f32.mrb[0].mxu0
    %1768 = vmatprep.mubr.f32.mxu0 0.0
    %1769 = vmatmul.mubr.f32.gmra.mrb[0].mxu0 %v1247
    %v1770 = vpop.f32.mrb[0].mxu0
    %v1771 = vadd.f32 0.0, %v1770
    %v1772 = vpop.f32.mrb[0].mxu0
    %1773 = vdwg.mxu0
    %1774 = vmatprep.subr.mxu0 0.0
    %1775 = vmatpush1.msra.mxu0 %v1231
    %1776 = vmatprep.subr.mxu0 0.0
    %1777 = vmatpush1.msra.mxu0 0.0
    %1778 = vmatprep.subr.mxu0 0.0
    %1779 = vmatpush1.msra.mxu0 0.0
    %1780 = vmatprep.subr.mxu0 0.0
    %1781 = vmatpush1.msra.mxu0 0.0
    %1782 = vmatprep.subr.mxu0 0.0
    %1783 = vmatpush1.msra.mxu0 0.0
    %1784 = vmatprep.subr.mxu0 0.0
    %1785 = vmatpush1.msra.mxu0 0.0
    %1786 = vmatprep.subr.mxu0 0.0
    %1787 = vmatpush1.msra.mxu0 0.0
    %1788 = vmatprep.subr.mxu0 0.0
    %1789 = vmatpush1.msra.mxu0 0.0
    %1790 = vmatprep.subr.mxu0 0.0
    %1791 = vmatpush1.msra.mxu0 0.0
    %1792 = vmatprep.subr.mxu0 0.0
    %1793 = vmatpush1.msra.mxu0 0.0
    %1794 = vmatprep.subr.mxu0 0.0
    %1795 = vmatpush1.msra.mxu0 0.0
    %1796 = vmatprep.subr.mxu0 0.0
    %1797 = vmatpush1.msra.mxu0 0.0
    %1798 = vmatprep.subr.mxu0 0.0
    %1799 = vmatpush1.msra.mxu0 0.0
    %1800 = vmatprep.subr.mxu0 0.0
    %1801 = vmatpush1.msra.mxu0 0.0
    %1802 = vmatprep.subr.mxu0 0.0
    %1803 = vmatpush1.msra.mxu0 0.0
    %1804 = vmatprep.subr.mxu0 0.0
    %1805 = vmatpush1.msra.mxu0 0.0
    %1806 = vmatprep.subr.mxu0 0.0
    %1807 = vmatpush1.msra.mxu0 0.0
    %1808 = vmatprep.subr.mxu0 0.0
    %1809 = vmatpush1.msra.mxu0 0.0
    %1810 = vmatprep.subr.mxu0 0.0
    %1811 = vmatpush1.msra.mxu0 0.0
    %1812 = vmatprep.subr.mxu0 0.0
    %1813 = vmatpush1.msra.mxu0 0.0
    %1814 = vmatprep.subr.mxu0 0.0
    %1815 = vmatpush1.msra.mxu0 0.0
    %1816 = vmatprep.subr.mxu0 0.0
    %1817 = vmatpush1.msra.mxu0 0.0
    %1818 = vmatprep.subr.mxu0 0.0
    %1819 = vmatpush1.msra.mxu0 0.0
    %1820 = vmatprep.subr.mxu0 0.0
    %1821 = vmatpush1.msra.mxu0 0.0
    %1822 = vmatprep.subr.mxu0 0.0
    %1823 = vmatpush1.msra.mxu0 0.0
    %1824 = vmatprep.subr.mxu0 0.0
    %1825 = vmatpush1.msra.mxu0 0.0
    %1826 = vmatprep.subr.mxu0 0.0
    %1827 = vmatpush1.msra.mxu0 0.0
    %1828 = vmatprep.subr.mxu0 0.0
    %1829 = vmatpush1.msra.mxu0 0.0
    %1830 = vmatprep.subr.mxu0 0.0
    %1831 = vmatpush1.msra.mxu0 0.0
    %1832 = vmatprep.subr.mxu0 0.0
    %1833 = vmatpush1.msra.mxu0 0.0
    %1834 = vmatprep.subr.mxu0 0.0
    %1835 = vmatpush1.msra.mxu0 0.0
    %1836 = vmatprep.subr.mxu0 0.0
    %1837 = vmatpush1.msra.mxu0 0.0
    %1838 = vmatprep.mubr.f32.mxu0 0.0
    %1839 = vmatmul.mubr.f32.gmra.mrb[0].mxu0 %v1244
    %v1840 = vpop.f32.mrb[0].mxu0
    %v1841 = vadd.f32 0.0, %v1840
    %v1842 = vpop.f32.mrb[0].mxu0
    %1843 = vmatprep.mubr.f32.mxu0 0.0
    %1844 = vmatmul.mubr.f32.gmra.mrb[0].mxu0 %v1247
    %v1845 = vpop.f32.mrb[0].mxu0
    %v1846 = vadd.f32 0.0, %v1845
    %v1847 = vpop.f32.mrb[0].mxu0
    %1848 = vdwg.mxu0
    %1849 = vmatprep.subr.mxu0 0.0
    %1850 = vmatpush1.msra.mxu0 %v1232
    %1851 = vmatprep.subr.mxu0 0.0
    %1852 = vmatpush1.msra.mxu0 0.0
    %1853 = vmatprep.subr.mxu0 0.0
    %1854 = vmatpush1.msra.mxu0 0.0
    %1855 = vmatprep.subr.mxu0 0.0
    %1856 = vmatpush1.msra.mxu0 0.0
    %1857 = vmatprep.subr.mxu0 0.0
    %1858 = vmatpush1.msra.mxu0 0.0
    %1859 = vmatprep.subr.mxu0 0.0
    %1860 = vmatpush1.msra.mxu0 0.0
    %1861 = vmatprep.subr.mxu0 0.0
    %1862 = vmatpush1.msra.mxu0 0.0
    %1863 = vmatprep.subr.mxu0 0.0
    %1864 = vmatpush1.msra.mxu0 0.0
    %1865 = vmatprep.subr.mxu0 0.0
    %1866 = vmatpush1.msra.mxu0 0.0
    %1867 = vmatprep.subr.mxu0 0.0
    %1868 = vmatpush1.msra.mxu0 0.0
    %1869 = vmatprep.subr.mxu0 0.0
    %1870 = vmatpush1.msra.mxu0 0.0
    %1871 = vmatprep.subr.mxu0 0.0
    %1872 = vmatpush1.msra.mxu0 0.0
    %1873 = vmatprep.subr.mxu0 0.0
    %1874 = vmatpush1.msra.mxu0 0.0
    %1875 = vmatprep.subr.mxu0 0.0
    %1876 = vmatpush1.msra.mxu0 0.0
    %1877 = vmatprep.subr.mxu0 0.0
    %1878 = vmatpush1.msra.mxu0 0.0
    %1879 = vmatprep.subr.mxu0 0.0
    %1880 = vmatpush1.msra.mxu0 0.0
    %1881 = vmatprep.subr.mxu0 0.0
    %1882 = vmatpush1.msra.mxu0 0.0
    %1883 = vmatprep.subr.mxu0 0.0
    %1884 = vmatpush1.msra.mxu0 0.0
    %1885 = vmatprep.subr.mxu0 0.0
    %1886 = vmatpush1.msra.mxu0 0.0
    %1887 = vmatprep.subr.mxu0 0.0
    %1888 = vmatpush1.msra.mxu0 0.0
    %1889 = vmatprep.subr.mxu0 0.0
    %1890 = vmatpush1.msra.mxu0 0.0
    %1891 = vmatprep.subr.mxu0 0.0
    %1892 = vmatpush1.msra.mxu0 0.0
    %1893 = vmatprep.subr.mxu0 0.0
    %1894 = vmatpush1.msra.mxu0 0.0
    %1895 = vmatprep.subr.mxu0 0.0
    %1896 = vmatpush1.msra.mxu0 0.0
    %1897 = vmatprep.subr.mxu0 0.0
    %1898 = vmatpush1.msra.mxu0 0.0
    %1899 = vmatprep.subr.mxu0 0.0
    %1900 = vmatpush1.msra.mxu0 0.0
    %1901 = vmatprep.subr.mxu0 0.0
    %1902 = vmatpush1.msra.mxu0 0.0
    %1903 = vmatprep.subr.mxu0 0.0
    %1904 = vmatpush1.msra.mxu0 0.0
    %1905 = vmatprep.subr.mxu0 0.0
    %1906 = vmatpush1.msra.mxu0 0.0
    %1907 = vmatprep.subr.mxu0 0.0
    %1908 = vmatpush1.msra.mxu0 0.0
    %1909 = vmatprep.subr.mxu0 0.0
    %1910 = vmatpush1.msra.mxu0 0.0
    %1911 = vmatprep.subr.mxu0 0.0
    %1912 = vmatpush1.msra.mxu0 0.0
    %1913 = vmatprep.mubr.f32.mxu0 0.0
    %1914 = vmatmul.mubr.f32.gmra.mrb[0].mxu0 %v1244
    %v1915 = vpop.f32.mrb[0].mxu0
    %v1916 = vadd.f32 0.0, %v1915
    %v1917 = vpop.f32.mrb[0].mxu0
    %1918 = vmatprep.mubr.f32.mxu0 0.0
    %1919 = vmatmul.mubr.f32.gmra.mrb[0].mxu0 %v1247
    %v1920 = vpop.f32.mrb[0].mxu0
    %v1921 = vadd.f32 0.0, %v1920
    %v1922 = vpop.f32.mrb[0].mxu0
    %1923 = vdwg.mxu0
    %1924 = vmatprep.subr.mxu0 0.0
    %1925 = vmatpush1.msra.mxu0 %v1233
    %1926 = vmatprep.subr.mxu0 0.0
    %1927 = vmatpush1.msra.mxu0 0.0
    %1928 = vmatprep.subr.mxu0 0.0
    %1929 = vmatpush1.msra.mxu0 0.0
    %1930 = vmatprep.subr.mxu0 0.0
    %1931 = vmatpush1.msra.mxu0 0.0
    %1932 = vmatprep.subr.mxu0 0.0
    %1933 = vmatpush1.msra.mxu0 0.0
    %1934 = vmatprep.subr.mxu0 0.0
    %1935 = vmatpush1.msra.mxu0 0.0
    %1936 = vmatprep.subr.mxu0 0.0
    %1937 = vmatpush1.msra.mxu0 0.0
    %1938 = vmatprep.subr.mxu0 0.0
    %1939 = vmatpush1.msra.mxu0 0.0
    %1940 = vmatprep.subr.mxu0 0.0
    %1941 = vmatpush1.msra.mxu0 0.0
    %1942 = vmatprep.subr.mxu0 0.0
    %1943 = vmatpush1.msra.mxu0 0.0
    %1944 = vmatprep.subr.mxu0 0.0
    %1945 = vmatpush1.msra.mxu0 0.0
    %1946 = vmatprep.subr.mxu0 0.0
    %1947 = vmatpush1.msra.mxu0 0.0
    %1948 = vmatprep.subr.mxu0 0.0
    %1949 = vmatpush1.msra.mxu0 0.0
    %1950 = vmatprep.subr.mxu0 0.0
    %1951 = vmatpush1.msra.mxu0 0.0
    %1952 = vmatprep.subr.mxu0 0.0
    %1953 = vmatpush1.msra.mxu0 0.0
    %1954 = vmatprep.subr.mxu0 0.0
    %1955 = vmatpush1.msra.mxu0 0.0
    %1956 = vmatprep.subr.mxu0 0.0
    %1957 = vmatpush1.msra.mxu0 0.0
    %1958 = vmatprep.subr.mxu0 0.0
    %1959 = vmatpush1.msra.mxu0 0.0
    %1960 = vmatprep.subr.mxu0 0.0
    %1961 = vmatpush1.msra.mxu0 0.0
    %1962 = vmatprep.subr.mxu0 0.0
    %1963 = vmatpush1.msra.mxu0 0.0
    %1964 = vmatprep.subr.mxu0 0.0
    %1965 = vmatpush1.msra.mxu0 0.0
    %1966 = vmatprep.subr.mxu0 0.0
    %1967 = vmatpush1.msra.mxu0 0.0
    %1968 = vmatprep.subr.mxu0 0.0
    %1969 = vmatpush1.msra.mxu0 0.0
    %1970 = vmatprep.subr.mxu0 0.0
    %1971 = vmatpush1.msra.mxu0 0.0
    %1972 = vmatprep.subr.mxu0 0.0
    %1973 = vmatpush1.msra.mxu0 0.0
    %1974 = vmatprep.subr.mxu0 0.0
    %1975 = vmatpush1.msra.mxu0 0.0
    %1976 = vmatprep.subr.mxu0 0.0
    %1977 = vmatpush1.msra.mxu0 0.0
    %1978 = vmatprep.subr.mxu0 0.0
    %1979 = vmatpush1.msra.mxu0 0.0
    %1980 = vmatprep.subr.mxu0 0.0
    %1981 = vmatpush1.msra.mxu0 0.0
    %1982 = vmatprep.subr.mxu0 0.0
    %1983 = vmatpush1.msra.mxu0 0.0
    %1984 = vmatprep.subr.mxu0 0.0
    %1985 = vmatpush1.msra.mxu0 0.0
    %1986 = vmatprep.subr.mxu0 0.0
    %1987 = vmatpush1.msra.mxu0 0.0
    %1988 = vmatprep.mubr.f32.mxu0 0.0
    %1989 = vmatmul.mubr.f32.gmra.mrb[0].mxu0 %v1244
    %v1990 = vpop.f32.mrb[0].mxu0
    %v1991 = vadd.f32 0.0, %v1990
    %v1992 = vpop.f32.mrb[0].mxu0
    %1993 = vmatprep.mubr.f32.mxu0 0.0
    %1994 = vmatmul.mubr.f32.gmra.mrb[0].mxu0 %v1247
    %v1995 = vpop.f32.mrb[0].mxu0
    %v1996 = vadd.f32 0.0, %v1995
    %v1997 = vpop.f32.mrb[0].mxu0
    %1998 = vdwg.mxu0
    %1999 = vmatprep.subr.mxu0 0.0
    %2000 = vmatpush1.msra.mxu0 %v1234
    %2001 = vmatprep.subr.mxu0 0.0
    %2002 = vmatpush1.msra.mxu0 0.0
    %2003 = vmatprep.subr.mxu0 0.0
    %2004 = vmatpush1.msra.mxu0 0.0
    %2005 = vmatprep.subr.mxu0 0.0
    %2006 = vmatpush1.msra.mxu0 0.0
    %2007 = vmatprep.subr.mxu0 0.0
    %2008 = vmatpush1.msra.mxu0 0.0
    %2009 = vmatprep.subr.mxu0 0.0
    %2010 = vmatpush1.msra.mxu0 0.0
    %2011 = vmatprep.subr.mxu0 0.0
    %2012 = vmatpush1.msra.mxu0 0.0
    %2013 = vmatprep.subr.mxu0 0.0
    %2014 = vmatpush1.msra.mxu0 0.0
    %2015 = vmatprep.subr.mxu0 0.0
    %2016 = vmatpush1.msra.mxu0 0.0
    %2017 = vmatprep.subr.mxu0 0.0
    %2018 = vmatpush1.msra.mxu0 0.0
    %2019 = vmatprep.subr.mxu0 0.0
    %2020 = vmatpush1.msra.mxu0 0.0
    %2021 = vmatprep.subr.mxu0 0.0
    %2022 = vmatpush1.msra.mxu0 0.0
    %2023 = vmatprep.subr.mxu0 0.0
    %2024 = vmatpush1.msra.mxu0 0.0
    %2025 = vmatprep.subr.mxu0 0.0
    %2026 = vmatpush1.msra.mxu0 0.0
    %2027 = vmatprep.subr.mxu0 0.0
    %2028 = vmatpush1.msra.mxu0 0.0
    %2029 = vmatprep.subr.mxu0 0.0
    %2030 = vmatpush1.msra.mxu0 0.0
    %2031 = vmatprep.subr.mxu0 0.0
    %2032 = vmatpush1.msra.mxu0 0.0
    %2033 = vmatprep.subr.mxu0 0.0
    %2034 = vmatpush1.msra.mxu0 0.0
    %2035 = vmatprep.subr.mxu0 0.0
    %2036 = vmatpush1.msra.mxu0 0.0
    %2037 = vmatprep.subr.mxu0 0.0
    %2038 = vmatpush1.msra.mxu0 0.0
    %2039 = vmatprep.subr.mxu0 0.0
    %2040 = vmatpush1.msra.mxu0 0.0
    %2041 = vmatprep.subr.mxu0 0.0
    %2042 = vmatpush1.msra.mxu0 0.0
    %2043 = vmatprep.subr.mxu0 0.0
    %2044 = vmatpush1.msra.mxu0 0.0
    %2045 = vmatprep.subr.mxu0 0.0
    %2046 = vmatpush1.msra.mxu0 0.0
    %2047 = vmatprep.subr.mxu0 0.0
    %2048 = vmatpush1.msra.mxu0 0.0
    %2049 = vmatprep.subr.mxu0 0.0
    %2050 = vmatpush1.msra.mxu0 0.0
    %2051 = vmatprep.subr.mxu0 0.0
    %2052 = vmatpush1.msra.mxu0 0.0
    %2053 = vmatprep.subr.mxu0 0.0
    %2054 = vmatpush1.msra.mxu0 0.0
    %2055 = vmatprep.subr.mxu0 0.0
    %2056 = vmatpush1.msra.mxu0 0.0
    %2057 = vmatprep.subr.mxu0 0.0
    %2058 = vmatpush1.msra.mxu0 0.0
    %2059 = vmatprep.subr.mxu0 0.0
    %2060 = vmatpush1.msra.mxu0 0.0
    %2061 = vmatprep.subr.mxu0 0.0
    %2062 = vmatpush1.msra.mxu0 0.0
    %2063 = vmatprep.mubr.f32.mxu0 0.0
    %2064 = vmatmul.mubr.f32.gmra.mrb[0].mxu0 %v1244
    %v2065 = vpop.f32.mrb[0].mxu0
    %v2066 = vadd.f32 0.0, %v2065
    %v2067 = vpop.f32.mrb[0].mxu0
    %2068 = vmatprep.mubr.f32.mxu0 0.0
    %2069 = vmatmul.mubr.f32.gmra.mrb[0].mxu0 %v1247
    %v2070 = vpop.f32.mrb[0].mxu0
    %v2071 = vadd.f32 0.0, %v2070
    %v2072 = vpop.f32.mrb[0].mxu0
    %2073 = vdwg.mxu0
    %2074 = vmatprep.subr.mxu0 0.0
    %2075 = vmatpush1.msra.mxu0 %v1235
    %2076 = vmatprep.subr.mxu0 0.0
    %2077 = vmatpush1.msra.mxu0 0.0
    %2078 = vmatprep.subr.mxu0 0.0
    %2079 = vmatpush1.msra.mxu0 0.0
    %2080 = vmatprep.subr.mxu0 0.0
    %2081 = vmatpush1.msra.mxu0 0.0
    %2082 = vmatprep.subr.mxu0 0.0
    %2083 = vmatpush1.msra.mxu0 0.0
    %2084 = vmatprep.subr.mxu0 0.0
    %2085 = vmatpush1.msra.mxu0 0.0
    %2086 = vmatprep.subr.mxu0 0.0
    %2087 = vmatpush1.msra.mxu0 0.0
    %2088 = vmatprep.subr.mxu0 0.0
    %2089 = vmatpush1.msra.mxu0 0.0
    %2090 = vmatprep.subr.mxu0 0.0
    %2091 = vmatpush1.msra.mxu0 0.0
    %2092 = vmatprep.subr.mxu0 0.0
    %2093 = vmatpush1.msra.mxu0 0.0
    %2094 = vmatprep.subr.mxu0 0.0
    %2095 = vmatpush1.msra.mxu0 0.0
    %2096 = vmatprep.subr.mxu0 0.0
    %2097 = vmatpush1.msra.mxu0 0.0
    %2098 = vmatprep.subr.mxu0 0.0
    %2099 = vmatpush1.msra.mxu0 0.0
    %2100 = vmatprep.subr.mxu0 0.0
    %2101 = vmatpush1.msra.mxu0 0.0
    %2102 = vmatprep.subr.mxu0 0.0
    %2103 = vmatpush1.msra.mxu0 0.0
    %2104 = vmatprep.subr.mxu0 0.0
    %2105 = vmatpush1.msra.mxu0 0.0
    %2106 = vmatprep.subr.mxu0 0.0
    %2107 = vmatpush1.msra.mxu0 0.0
    %2108 = vmatprep.subr.mxu0 0.0
    %2109 = vmatpush1.msra.mxu0 0.0
    %2110 = vmatprep.subr.mxu0 0.0
    %2111 = vmatpush1.msra.mxu0 0.0
    %2112 = vmatprep.subr.mxu0 0.0
    %2113 = vmatpush1.msra.mxu0 0.0
    %2114 = vmatprep.subr.mxu0 0.0
    %2115 = vmatpush1.msra.mxu0 0.0
    %2116 = vmatprep.subr.mxu0 0.0
    %2117 = vmatpush1.msra.mxu0 0.0
    %2118 = vmatprep.subr.mxu0 0.0
    %2119 = vmatpush1.msra.mxu0 0.0
    %2120 = vmatprep.subr.mxu0 0.0
    %2121 = vmatpush1.msra.mxu0 0.0
    %2122 = vmatprep.subr.mxu0 0.0
    %2123 = vmatpush1.msra.mxu0 0.0
    %2124 = vmatprep.subr.mxu0 0.0
    %2125 = vmatpush1.msra.mxu0 0.0
    %2126 = vmatprep.subr.mxu0 0.0
    %2127 = vmatpush1.msra.mxu0 0.0
    %2128 = vmatprep.subr.mxu0 0.0
    %2129 = vmatpush1.msra.mxu0 0.0
    %2130 = vmatprep.subr.mxu0 0.0
    %2131 = vmatpush1.msra.mxu0 0.0
    %2132 = vmatprep.subr.mxu0 0.0
    %2133 = vmatpush1.msra.mxu0 0.0
    %2134 = vmatprep.subr.mxu0 0.0
    %2135 = vmatpush1.msra.mxu0 0.0
    %2136 = vmatprep.subr.mxu0 0.0
    %2137 = vmatpush1.msra.mxu0 0.0
    %2138 = vmatprep.mubr.f32.mxu0 0.0
    %2139 = vmatmul.mubr.f32.gmra.mrb[0].mxu0 %v1244
    %v2140 = vpop.f32.mrb[0].mxu0
    %v2141 = vadd.f32 0.0, %v2140
    %v2142 = vpop.f32.mrb[0].mxu0
    %2143 = vmatprep.mubr.f32.mxu0 0.0
    %2144 = vmatmul.mubr.f32.gmra.mrb[0].mxu0 %v1247
    %v2145 = vpop.f32.mrb[0].mxu0
    %v2146 = vadd.f32 0.0, %v2145
    %v2147 = vpop.f32.mrb[0].mxu0
    %2148 = vdwg.mxu0
    %2149 = vmatprep.subr.mxu0 0.0
    %2150 = vmatpush1.msra.mxu0 %v1236
    %2151 = vmatprep.subr.mxu0 0.0
    %2152 = vmatpush1.msra.mxu0 0.0
    %2153 = vmatprep.subr.mxu0 0.0
    %2154 = vmatpush1.msra.mxu0 0.0
    %2155 = vmatprep.subr.mxu0 0.0
    %2156 = vmatpush1.msra.mxu0 0.0
    %2157 = vmatprep.subr.mxu0 0.0
    %2158 = vmatpush1.msra.mxu0 0.0
    %2159 = vmatprep.subr.mxu0 0.0
    %2160 = vmatpush1.msra.mxu0 0.0
    %2161 = vmatprep.subr.mxu0 0.0
    %2162 = vmatpush1.msra.mxu0 0.0
    %2163 = vmatprep.subr.mxu0 0.0
    %2164 = vmatpush1.msra.mxu0 0.0
    %2165 = vmatprep.subr.mxu0 0.0
    %2166 = vmatpush1.msra.mxu0 0.0
    %2167 = vmatprep.subr.mxu0 0.0
    %2168 = vmatpush1.msra.mxu0 0.0
    %2169 = vmatprep.subr.mxu0 0.0
    %2170 = vmatpush1.msra.mxu0 0.0
    %2171 = vmatprep.subr.mxu0 0.0
    %2172 = vmatpush1.msra.mxu0 0.0
    %2173 = vmatprep.subr.mxu0 0.0
    %2174 = vmatpush1.msra.mxu0 0.0
    %2175 = vmatprep.subr.mxu0 0.0
    %2176 = vmatpush1.msra.mxu0 0.0
    %2177 = vmatprep.subr.mxu0 0.0
    %2178 = vmatpush1.msra.mxu0 0.0
    %2179 = vmatprep.subr.mxu0 0.0
    %2180 = vmatpush1.msra.mxu0 0.0
    %2181 = vmatprep.subr.mxu0 0.0
    %2182 = vmatpush1.msra.mxu0 0.0
    %2183 = vmatprep.subr.mxu0 0.0
    %2184 = vmatpush1.msra.mxu0 0.0
    %2185 = vmatprep.subr.mxu0 0.0
    %2186 = vmatpush1.msra.mxu0 0.0
    %2187 = vmatprep.subr.mxu0 0.0
    %2188 = vmatpush1.msra.mxu0 0.0
    %2189 = vmatprep.subr.mxu0 0.0
    %2190 = vmatpush1.msra.mxu0 0.0
    %2191 = vmatprep.subr.mxu0 0.0
    %2192 = vmatpush1.msra.mxu0 0.0
    %2193 = vmatprep.subr.mxu0 0.0
    %2194 = vmatpush1.msra.mxu0 0.0
    %2195 = vmatprep.subr.mxu0 0.0
    %2196 = vmatpush1.msra.mxu0 0.0
    %2197 = vmatprep.subr.mxu0 0.0
    %2198 = vmatpush1.msra.mxu0 0.0
    %2199 = vmatprep.subr.mxu0 0.0
    %2200 = vmatpush1.msra.mxu0 0.0
    %2201 = vmatprep.subr.mxu0 0.0
    %2202 = vmatpush1.msra.mxu0 0.0
    %2203 = vmatprep.subr.mxu0 0.0
    %2204 = vmatpush1.msra.mxu0 0.0
    %2205 = vmatprep.subr.mxu0 0.0
    %2206 = vmatpush1.msra.mxu0 0.0
    %2207 = vmatprep.subr.mxu0 0.0
    %2208 = vmatpush1.msra.mxu0 0.0
    %2209 = vmatprep.subr.mxu0 0.0
    %2210 = vmatpush1.msra.mxu0 0.0
    %2211 = vmatprep.subr.mxu0 0.0
    %2212 = vmatpush1.msra.mxu0 0.0
    %2213 = vmatprep.mubr.f32.mxu0 0.0
    %2214 = vmatmul.mubr.f32.gmra.mrb[0].mxu0 %v1244
    %v2215 = vpop.f32.mrb[0].mxu0
    %v2216 = vadd.f32 0.0, %v2215
    %v2217 = vpop.f32.mrb[0].mxu0
    %2218 = vmatprep.mubr.f32.mxu0 0.0
    %2219 = vmatmul.mubr.f32.gmra.mrb[0].mxu0 %v1247
    %v2220 = vpop.f32.mrb[0].mxu0
    %v2221 = vadd.f32 0.0, %v2220
    %v2222 = vpop.f32.mrb[0].mxu0
    %2223 = vdwg.mxu0
    %2224 = vmatprep.subr.mxu0 0.0
    %2225 = vmatpush1.msra.mxu0 %v1237
    %2226 = vmatprep.subr.mxu0 0.0
    %2227 = vmatpush1.msra.mxu0 0.0
    %2228 = vmatprep.subr.mxu0 0.0
    %2229 = vmatpush1.msra.mxu0 0.0
    %2230 = vmatprep.subr.mxu0 0.0
    %2231 = vmatpush1.msra.mxu0 0.0
    %2232 = vmatprep.subr.mxu0 0.0
    %2233 = vmatpush1.msra.mxu0 0.0
    %2234 = vmatprep.subr.mxu0 0.0
    %2235 = vmatpush1.msra.mxu0 0.0
    %2236 = vmatprep.subr.mxu0 0.0
    %2237 = vmatpush1.msra.mxu0 0.0
    %2238 = vmatprep.subr.mxu0 0.0
    %2239 = vmatpush1.msra.mxu0 0.0
    %2240 = vmatprep.subr.mxu0 0.0
    %2241 = vmatpush1.msra.mxu0 0.0
    %2242 = vmatprep.subr.mxu0 0.0
    %2243 = vmatpush1.msra.mxu0 0.0
    %2244 = vmatprep.subr.mxu0 0.0
    %2245 = vmatpush1.msra.mxu0 0.0
    %2246 = vmatprep.subr.mxu0 0.0
    %2247 = vmatpush1.msra.mxu0 0.0
    %2248 = vmatprep.subr.mxu0 0.0
    %2249 = vmatpush1.msra.mxu0 0.0
    %2250 = vmatprep.subr.mxu0 0.0
    %2251 = vmatpush1.msra.mxu0 0.0
    %2252 = vmatprep.subr.mxu0 0.0
    %2253 = vmatpush1.msra.mxu0 0.0
    %2254 = vmatprep.subr.mxu0 0.0
    %2255 = vmatpush1.msra.mxu0 0.0
    %2256 = vmatprep.subr.mxu0 0.0
    %2257 = vmatpush1.msra.mxu0 0.0
    %2258 = vmatprep.subr.mxu0 0.0
    %2259 = vmatpush1.msra.mxu0 0.0
    %2260 = vmatprep.subr.mxu0 0.0
    %2261 = vmatpush1.msra.mxu0 0.0
    %2262 = vmatprep.subr.mxu0 0.0
    %2263 = vmatpush1.msra.mxu0 0.0
    %2264 = vmatprep.subr.mxu0 0.0
    %2265 = vmatpush1.msra.mxu0 0.0
    %2266 = vmatprep.subr.mxu0 0.0
    %2267 = vmatpush1.msra.mxu0 0.0
    %2268 = vmatprep.subr.mxu0 0.0
    %2269 = vmatpush1.msra.mxu0 0.0
    %2270 = vmatprep.subr.mxu0 0.0
    %2271 = vmatpush1.msra.mxu0 0.0
    %2272 = vmatprep.subr.mxu0 0.0
    %2273 = vmatpush1.msra.mxu0 0.0
    %2274 = vmatprep.subr.mxu0 0.0
    %2275 = vmatpush1.msra.mxu0 0.0
    %2276 = vmatprep.subr.mxu0 0.0
    %2277 = vmatpush1.msra.mxu0 0.0
    %2278 = vmatprep.subr.mxu0 0.0
    %2279 = vmatpush1.msra.mxu0 0.0
    %2280 = vmatprep.subr.mxu0 0.0
    %2281 = vmatpush1.msra.mxu0 0.0
    %2282 = vmatprep.subr.mxu0 0.0
    %2283 = vmatpush1.msra.mxu0 0.0
    %2284 = vmatprep.subr.mxu0 0.0
    %2285 = vmatpush1.msra.mxu0 0.0
    %2286 = vmatprep.subr.mxu0 0.0
    %2287 = vmatpush1.msra.mxu0 0.0
    %2288 = vmatprep.mubr.f32.mxu0 0.0
    %2289 = vmatmul.mubr.f32.gmra.mrb[0].mxu0 %v1244
    %v2290 = vpop.f32.mrb[0].mxu0
    %v2291 = vadd.f32 0.0, %v2290
    %v2292 = vpop.f32.mrb[0].mxu0
    %2293 = vmatprep.mubr.f32.mxu0 0.0
    %2294 = vmatmul.mubr.f32.gmra.mrb[0].mxu0 %v1247
    %v2295 = vpop.f32.mrb[0].mxu0
    %v2296 = vadd.f32 0.0, %v2295
    %v2297 = vpop.f32.mrb[0].mxu0
    %2298 = vdwg.mxu0
    %2299 = vmatprep.subr.mxu0 0.0
    %2300 = vmatpush1.msra.mxu0 %v1238
    %2301 = vmatprep.subr.mxu0 0.0
    %2302 = vmatpush1.msra.mxu0 0.0
    %2303 = vmatprep.subr.mxu0 0.0
    %2304 = vmatpush1.msra.mxu0 0.0
    %2305 = vmatprep.subr.mxu0 0.0
    %2306 = vmatpush1.msra.mxu0 0.0
    %2307 = vmatprep.subr.mxu0 0.0
    %2308 = vmatpush1.msra.mxu0 0.0
    %2309 = vmatprep.subr.mxu0 0.0
    %2310 = vmatpush1.msra.mxu0 0.0
    %2311 = vmatprep.subr.mxu0 0.0
    %2312 = vmatpush1.msra.mxu0 0.0
    %2313 = vmatprep.subr.mxu0 0.0
    %2314 = vmatpush1.msra.mxu0 0.0
    %2315 = vmatprep.subr.mxu0 0.0
    %2316 = vmatpush1.msra.mxu0 0.0
    %2317 = vmatprep.subr.mxu0 0.0
    %2318 = vmatpush1.msra.mxu0 0.0
    %2319 = vmatprep.subr.mxu0 0.0
    %2320 = vmatpush1.msra.mxu0 0.0
    %2321 = vmatprep.subr.mxu0 0.0
    %2322 = vmatpush1.msra.mxu0 0.0
    %2323 = vmatprep.subr.mxu0 0.0
    %2324 = vmatpush1.msra.mxu0 0.0
    %2325 = vmatprep.subr.mxu0 0.0
    %2326 = vmatpush1.msra.mxu0 0.0
    %2327 = vmatprep.subr.mxu0 0.0
    %2328 = vmatpush1.msra.mxu0 0.0
    %2329 = vmatprep.subr.mxu0 0.0
    %2330 = vmatpush1.msra.mxu0 0.0
    %2331 = vmatprep.subr.mxu0 0.0
    %2332 = vmatpush1.msra.mxu0 0.0
    %2333 = vmatprep.subr.mxu0 0.0
    %2334 = vmatpush1.msra.mxu0 0.0
    %2335 = vmatprep.subr.mxu0 0.0
    %2336 = vmatpush1.msra.mxu0 0.0
    %2337 = vmatprep.subr.mxu0 0.0
    %2338 = vmatpush1.msra.mxu0 0.0
    %2339 = vmatprep.subr.mxu0 0.0
    %2340 = vmatpush1.msra.mxu0 0.0
    %2341 = vmatprep.subr.mxu0 0.0
    %2342 = vmatpush1.msra.mxu0 0.0
    %2343 = vmatprep.subr.mxu0 0.0
    %2344 = vmatpush1.msra.mxu0 0.0
    %2345 = vmatprep.subr.mxu0 0.0
    %2346 = vmatpush1.msra.mxu0 0.0
    %2347 = vmatprep.subr.mxu0 0.0
    %2348 = vmatpush1.msra.mxu0 0.0
    %2349 = vmatprep.subr.mxu0 0.0
    %2350 = vmatpush1.msra.mxu0 0.0
    %2351 = vmatprep.subr.mxu0 0.0
    %2352 = vmatpush1.msra.mxu0 0.0
    %2353 = vmatprep.subr.mxu0 0.0
    %2354 = vmatpush1.msra.mxu0 0.0
    %2355 = vmatprep.subr.mxu0 0.0
    %2356 = vmatpush1.msra.mxu0 0.0
    %2357 = vmatprep.subr.mxu0 0.0
    %2358 = vmatpush1.msra.mxu0 0.0
    %2359 = vmatprep.subr.mxu0 0.0
    %2360 = vmatpush1.msra.mxu0 0.0
    %2361 = vmatprep.subr.mxu0 0.0
    %2362 = vmatpush1.msra.mxu0 0.0
    %2363 = vmatprep.mubr.f32.mxu0 0.0
    %2364 = vmatmul.mubr.f32.gmra.mrb[0].mxu0 %v1244
    %v2365 = vpop.f32.mrb[0].mxu0
    %v2366 = vadd.f32 0.0, %v2365
    %v2367 = vpop.f32.mrb[0].mxu0
    %2368 = vmatprep.mubr.f32.mxu0 0.0
    %2369 = vmatmul.mubr.f32.gmra.mrb[0].mxu0 %v1247
    %v2370 = vpop.f32.mrb[0].mxu0
    %v2371 = vadd.f32 0.0, %v2370
    %v2372 = vpop.f32.mrb[0].mxu0
    %2373 = vdwg.mxu0
    %2374 = vmatprep.subr.mxu0 0.0
    %2375 = vmatpush1.msra.mxu0 %v1239
    %2376 = vmatprep.subr.mxu0 0.0
    %2377 = vmatpush1.msra.mxu0 0.0
    %2378 = vmatprep.subr.mxu0 0.0
    %2379 = vmatpush1.msra.mxu0 0.0
    %2380 = vmatprep.subr.mxu0 0.0
    %2381 = vmatpush1.msra.mxu0 0.0
    %2382 = vmatprep.subr.mxu0 0.0
    %2383 = vmatpush1.msra.mxu0 0.0
    %2384 = vmatprep.subr.mxu0 0.0
    %2385 = vmatpush1.msra.mxu0 0.0
    %2386 = vmatprep.subr.mxu0 0.0
    %2387 = vmatpush1.msra.mxu0 0.0
    %2388 = vmatprep.subr.mxu0 0.0
    %2389 = vmatpush1.msra.mxu0 0.0
    %2390 = vmatprep.subr.mxu0 0.0
    %2391 = vmatpush1.msra.mxu0 0.0
    %2392 = vmatprep.subr.mxu0 0.0
    %2393 = vmatpush1.msra.mxu0 0.0
    %2394 = vmatprep.subr.mxu0 0.0
    %2395 = vmatpush1.msra.mxu0 0.0
    %2396 = vmatprep.subr.mxu0 0.0
    %2397 = vmatpush1.msra.mxu0 0.0
    %2398 = vmatprep.subr.mxu0 0.0
    %2399 = vmatpush1.msra.mxu0 0.0
    %2400 = vmatprep.subr.mxu0 0.0
    %2401 = vmatpush1.msra.mxu0 0.0
    %2402 = vmatprep.subr.mxu0 0.0
    %2403 = vmatpush1.msra.mxu0 0.0
    %2404 = vmatprep.subr.mxu0 0.0
    %2405 = vmatpush1.msra.mxu0 0.0
    %2406 = vmatprep.subr.mxu0 0.0
    %2407 = vmatpush1.msra.mxu0 0.0
    %2408 = vmatprep.subr.mxu0 0.0
    %2409 = vmatpush1.msra.mxu0 0.0
    %2410 = vmatprep.subr.mxu0 0.0
    %2411 = vmatpush1.msra.mxu0 0.0
    %2412 = vmatprep.subr.mxu0 0.0
    %2413 = vmatpush1.msra.mxu0 0.0
    %2414 = vmatprep.subr.mxu0 0.0
    %2415 = vmatpush1.msra.mxu0 0.0
    %2416 = vmatprep.subr.mxu0 0.0
    %2417 = vmatpush1.msra.mxu0 0.0
    %2418 = vmatprep.subr.mxu0 0.0
    %2419 = vmatpush1.msra.mxu0 0.0
    %2420 = vmatprep.subr.mxu0 0.0
    %2421 = vmatpush1.msra.mxu0 0.0
    %2422 = vmatprep.subr.mxu0 0.0
    %2423 = vmatpush1.msra.mxu0 0.0
    %2424 = vmatprep.subr.mxu0 0.0
    %2425 = vmatpush1.msra.mxu0 0.0
    %2426 = vmatprep.subr.mxu0 0.0
    %2427 = vmatpush1.msra.mxu0 0.0
    %2428 = vmatprep.subr.mxu0 0.0
    %2429 = vmatpush1.msra.mxu0 0.0
    %2430 = vmatprep.subr.mxu0 0.0
    %2431 = vmatpush1.msra.mxu0 0.0
    %2432 = vmatprep.subr.mxu0 0.0
    %2433 = vmatpush1.msra.mxu0 0.0
    %2434 = vmatprep.subr.mxu0 0.0
    %2435 = vmatpush1.msra.mxu0 0.0
    %2436 = vmatprep.subr.mxu0 0.0
    %2437 = vmatpush1.msra.mxu0 0.0
    %2438 = vmatprep.mubr.f32.mxu0 0.0
    %2439 = vmatmul.mubr.f32.gmra.mrb[0].mxu0 %v1244
    %v2440 = vpop.f32.mrb[0].mxu0
    %v2441 = vadd.f32 0.0, %v2440
    %v2442 = vpop.f32.mrb[0].mxu0
    %2443 = vmatprep.mubr.f32.mxu0 0.0
    %2444 = vmatmul.mubr.f32.gmra.mrb[0].mxu0 %v1247
    %v2445 = vpop.f32.mrb[0].mxu0
    %v2446 = vadd.f32 0.0, %v2445
    %v2447 = vpop.f32.mrb[0].mxu0
    %2448 = vdwg.mxu0
    %v2449 = vcombine.low %v1316, %v1466
    %v2450 = vcombine.high %v1316, %v1466
    %v2452 = vunpack.c.l.s4 1983009808
    %v2453 = vunpack.c.0.s8 %v2452
    %v2454 = vlaneseq
    %v2455 = vshrl.u32 %v2454, 7
    %v2456 = vsub.s32 %v2453, %v2455
    %v2457 = vrot.slane %v2449, %v2456
    %v2459 = vunpack.c.l.s4 1983009808
    %v2460 = vunpack.c.0.s8 %v2459
    %v2461 = vlaneseq
    %v2462 = vshrl.u32 %v2461, 7
    %v2463 = vsub.s32 %v2460, %v2462
    %v2464 = vrot.slane %v2450, %v2463
    %v2465 = vcombine.low %v1391, %v1541
    %v2466 = vcombine.high %v1391, %v1541
    %v2468 = vunpack.c.l.s4 1983009808
    %v2469 = vunpack.c.0.s8 %v2468
    %v2470 = vlaneseq
    %v2471 = vshrl.u32 %v2470, 7
    %v2472 = vsub.s32 %v2469, %v2471
    %v2473 = vrot.slane %v2465, %v2472
    %v2475 = vunpack.c.l.s4 1983009808
    %v2476 = vunpack.c.0.s8 %v2475
    %v2477 = vlaneseq
    %v2478 = vshrl.u32 %v2477, 7
    %v2479 = vsub.s32 %v2476, %v2478
    %v2480 = vrot.slane %v2466, %v2479
    %v2481 = vcombine.low %v1616, %v1766
    %v2482 = vcombine.high %v1616, %v1766
    %v2484 = vunpack.c.l.s4 1983009808
    %v2485 = vunpack.c.0.s8 %v2484
    %v2486 = vlaneseq
    %v2487 = vshrl.u32 %v2486, 7
    %v2488 = vsub.s32 %v2485, %v2487
    %v2489 = vrot.slane %v2481, %v2488
    %v2491 = vunpack.c.l.s4 1983009808
    %v2492 = vunpack.c.0.s8 %v2491
    %v2493 = vlaneseq
    %v2494 = vshrl.u32 %v2493, 7
    %v2495 = vsub.s32 %v2492, %v2494
    %v2496 = vrot.slane %v2482, %v2495
    %v2497 = vcombine.low %v1691, %v1841
    %v2498 = vcombine.high %v1691, %v1841
    %v2500 = vunpack.c.l.s4 1983009808
    %v2501 = vunpack.c.0.s8 %v2500
    %v2502 = vlaneseq
    %v2503 = vshrl.u32 %v2502, 7
    %v2504 = vsub.s32 %v2501, %v2503
    %v2505 = vrot.slane %v2497, %v2504
    %v2507 = vunpack.c.l.s4 1983009808
    %v2508 = vunpack.c.0.s8 %v2507
    %v2509 = vlaneseq
    %v2510 = vshrl.u32 %v2509, 7
    %v2511 = vsub.s32 %v2508, %v2510
    %v2512 = vrot.slane %v2498, %v2511
    %v2513 = vcombine.low %v2457, %v2473
    %v2514 = vcombine.high %v2457, %v2473
    %v2516 = vunpack.c.l.s4 1934713408
    %v2517 = vunpack.c.0.s8 %v2516
    %v2518 = vlaneseq
    %v2519 = vshrl.u32 %v2518, 7
    %v2520 = vsub.s32 %v2517, %v2519
    %v2521 = vrot.slane %v2513, %v2520
    %v2523 = vunpack.c.l.s4 1934713408
    %v2524 = vunpack.c.0.s8 %v2523
    %v2525 = vlaneseq
    %v2526 = vshrl.u32 %v2525, 7
    %v2527 = vsub.s32 %v2524, %v2526
    %v2528 = vrot.slane %v2514, %v2527
    %v2529 = vcombine.low %v2464, %v2480
    %v2530 = vcombine.high %v2464, %v2480
    %v2532 = vunpack.c.l.s4 1934713408
    %v2533 = vunpack.c.0.s8 %v2532
    %v2534 = vlaneseq
    %v2535 = vshrl.u32 %v2534, 7
    %v2536 = vsub.s32 %v2533, %v2535
    %v2537 = vrot.slane %v2529, %v2536
    %v2539 = vunpack.c.l.s4 1934713408
    %v2540 = vunpack.c.0.s8 %v2539
    %v2541 = vlaneseq
    %v2542 = vshrl.u32 %v2541, 7
    %v2543 = vsub.s32 %v2540, %v2542
    %v2544 = vrot.slane %v2530, %v2543
    %v2545 = vcombine.low %v2489, %v2505
    %v2546 = vcombine.high %v2489, %v2505
    %v2548 = vunpack.c.l.s4 1934713408
    %v2549 = vunpack.c.0.s8 %v2548
    %v2550 = vlaneseq
    %v2551 = vshrl.u32 %v2550, 7
    %v2552 = vsub.s32 %v2549, %v2551
    %v2553 = vrot.slane %v2545, %v2552
    %v2555 = vunpack.c.l.s4 1934713408
    %v2556 = vunpack.c.0.s8 %v2555
    %v2557 = vlaneseq
    %v2558 = vshrl.u32 %v2557, 7
    %v2559 = vsub.s32 %v2556, %v2558
    %v2560 = vrot.slane %v2546, %v2559
    %v2561 = vcombine.low %v2496, %v2512
    %v2562 = vcombine.high %v2496, %v2512
    %v2564 = vunpack.c.l.s4 1934713408
    %v2565 = vunpack.c.0.s8 %v2564
    %v2566 = vlaneseq
    %v2567 = vshrl.u32 %v2566, 7
    %v2568 = vsub.s32 %v2565, %v2567
    %v2569 = vrot.slane %v2561, %v2568
    %v2571 = vunpack.c.l.s4 1934713408
    %v2572 = vunpack.c.0.s8 %v2571
    %v2573 = vlaneseq
    %v2574 = vshrl.u32 %v2573, 7
    %v2575 = vsub.s32 %v2572, %v2574
    %v2576 = vrot.slane %v2562, %v2575
    %v2577 = vcombine.low %v2521, %v2553
    %v2578 = vcombine.high %v2521, %v2553
    %v2579 = vcombine.low %v2528, %v2560
    %v2580 = vcombine.high %v2528, %v2560
    %v2581 = vcombine.low %v2537, %v2569
    %v2582 = vcombine.high %v2537, %v2569
    %v2583 = vcombine.low %v2544, %v2576
    %v2584 = vcombine.high %v2544, %v2576
    %v2585 = vcombine.low %v1321, %v1471
    %v2586 = vcombine.high %v1321, %v1471
    %v2588 = vunpack.c.l.s4 1983009808
    %v2589 = vunpack.c.0.s8 %v2588
    %v2590 = vlaneseq
    %v2591 = vshrl.u32 %v2590, 7
    %v2592 = vsub.s32 %v2589, %v2591
    %v2593 = vrot.slane %v2585, %v2592
    %v2595 = vunpack.c.l.s4 1983009808
    %v2596 = vunpack.c.0.s8 %v2595
    %v2597 = vlaneseq
    %v2598 = vshrl.u32 %v2597, 7
    %v2599 = vsub.s32 %v2596, %v2598
    %v2600 = vrot.slane %v2586, %v2599
    %v2601 = vcombine.low %v1396, %v1546
    %v2602 = vcombine.high %v1396, %v1546
    %v2604 = vunpack.c.l.s4 1983009808
    %v2605 = vunpack.c.0.s8 %v2604
    %v2606 = vlaneseq
    %v2607 = vshrl.u32 %v2606, 7
    %v2608 = vsub.s32 %v2605, %v2607
    %v2609 = vrot.slane %v2601, %v2608
    %v2611 = vunpack.c.l.s4 1983009808
    %v2612 = vunpack.c.0.s8 %v2611
    %v2613 = vlaneseq
    %v2614 = vshrl.u32 %v2613, 7
    %v2615 = vsub.s32 %v2612, %v2614
    %v2616 = vrot.slane %v2602, %v2615
    %v2617 = vcombine.low %v1621, %v1771
    %v2618 = vcombine.high %v1621, %v1771
    %v2620 = vunpack.c.l.s4 1983009808
    %v2621 = vunpack.c.0.s8 %v2620
    %v2622 = vlaneseq
    %v2623 = vshrl.u32 %v2622, 7
    %v2624 = vsub.s32 %v2621, %v2623
    %v2625 = vrot.slane %v2617, %v2624
    %v2627 = vunpack.c.l.s4 1983009808
    %v2628 = vunpack.c.0.s8 %v2627
    %v2629 = vlaneseq
    %v2630 = vshrl.u32 %v2629, 7
    %v2631 = vsub.s32 %v2628, %v2630
    %v2632 = vrot.slane %v2618, %v2631
    %v2633 = vcombine.low %v1696, %v1846
    %v2634 = vcombine.high %v1696, %v1846
    %v2636 = vunpack.c.l.s4 1983009808
    %v2637 = vunpack.c.0.s8 %v2636
    %v2638 = vlaneseq
    %v2639 = vshrl.u32 %v2638, 7
    %v2640 = vsub.s32 %v2637, %v2639
    %v2641 = vrot.slane %v2633, %v2640
    %v2643 = vunpack.c.l.s4 1983009808
    %v2644 = vunpack.c.0.s8 %v2643
    %v2645 = vlaneseq
    %v2646 = vshrl.u32 %v2645, 7
    %v2647 = vsub.s32 %v2644, %v2646
    %v2648 = vrot.slane %v2634, %v2647
    %v2649 = vcombine.low %v2593, %v2609
    %v2650 = vcombine.high %v2593, %v2609
    %v2652 = vunpack.c.l.s4 1934713408
    %v2653 = vunpack.c.0.s8 %v2652
    %v2654 = vlaneseq
    %v2655 = vshrl.u32 %v2654, 7
    %v2656 = vsub.s32 %v2653, %v2655
    %v2657 = vrot.slane %v2649, %v2656
    %v2659 = vunpack.c.l.s4 1934713408
    %v2660 = vunpack.c.0.s8 %v2659
    %v2661 = vlaneseq
    %v2662 = vshrl.u32 %v2661, 7
    %v2663 = vsub.s32 %v2660, %v2662
    %v2664 = vrot.slane %v2650, %v2663
    %v2665 = vcombine.low %v2600, %v2616
    %v2666 = vcombine.high %v2600, %v2616
    %v2668 = vunpack.c.l.s4 1934713408
    %v2669 = vunpack.c.0.s8 %v2668
    %v2670 = vlaneseq
    %v2671 = vshrl.u32 %v2670, 7
    %v2672 = vsub.s32 %v2669, %v2671
    %v2673 = vrot.slane %v2665, %v2672
    %v2675 = vunpack.c.l.s4 1934713408
    %v2676 = vunpack.c.0.s8 %v2675
    %v2677 = vlaneseq
    %v2678 = vshrl.u32 %v2677, 7
    %v2679 = vsub.s32 %v2676, %v2678
    %v2680 = vrot.slane %v2666, %v2679
    %v2681 = vcombine.low %v2625, %v2641
    %v2682 = vcombine.high %v2625, %v2641
    %v2684 = vunpack.c.l.s4 1934713408
    %v2685 = vunpack.c.0.s8 %v2684
    %v2686 = vlaneseq
    %v2687 = vshrl.u32 %v2686, 7
    %v2688 = vsub.s32 %v2685, %v2687
    %v2689 = vrot.slane %v2681, %v2688
    %v2691 = vunpack.c.l.s4 1934713408
    %v2692 = vunpack.c.0.s8 %v2691
    %v2693 = vlaneseq
    %v2694 = vshrl.u32 %v2693, 7
    %v2695 = vsub.s32 %v2692, %v2694
    %v2696 = vrot.slane %v2682, %v2695
    %v2697 = vcombine.low %v2632, %v2648
    %v2698 = vcombine.high %v2632, %v2648
    %v2700 = vunpack.c.l.s4 1934713408
    %v2701 = vunpack.c.0.s8 %v2700
    %v2702 = vlaneseq
    %v2703 = vshrl.u32 %v2702, 7
    %v2704 = vsub.s32 %v2701, %v2703
    %v2705 = vrot.slane %v2697, %v2704
    %v2707 = vunpack.c.l.s4 1934713408
    %v2708 = vunpack.c.0.s8 %v2707
    %v2709 = vlaneseq
    %v2710 = vshrl.u32 %v2709, 7
    %v2711 = vsub.s32 %v2708, %v2710
    %v2712 = vrot.slane %v2698, %v2711
    %v2713 = vcombine.low %v2657, %v2689
    %v2714 = vcombine.high %v2657, %v2689
    %v2715 = vcombine.low %v2664, %v2696
    %v2716 = vcombine.high %v2664, %v2696
    %v2717 = vcombine.low %v2673, %v2705
    %v2718 = vcombine.high %v2673, %v2705
    %v2719 = vcombine.low %v2680, %v2712
    %v2720 = vcombine.high %v2680, %v2712
    %v2721 = vcombine.low %v1916, %v2066
    %v2722 = vcombine.high %v1916, %v2066
    %v2724 = vunpack.c.l.s4 1983009808
    %v2725 = vunpack.c.0.s8 %v2724
    %v2726 = vlaneseq
    %v2727 = vshrl.u32 %v2726, 7
    %v2728 = vsub.s32 %v2725, %v2727
    %v2729 = vrot.slane %v2721, %v2728
    %v2731 = vunpack.c.l.s4 1983009808
    %v2732 = vunpack.c.0.s8 %v2731
    %v2733 = vlaneseq
    %v2734 = vshrl.u32 %v2733, 7
    %v2735 = vsub.s32 %v2732, %v2734
    %v2736 = vrot.slane %v2722, %v2735
    %v2737 = vcombine.low %v1991, %v2141
    %v2738 = vcombine.high %v1991, %v2141
    %v2740 = vunpack.c.l.s4 1983009808
    %v2741 = vunpack.c.0.s8 %v2740
    %v2742 = vlaneseq
    %v2743 = vshrl.u32 %v2742, 7
    %v2744 = vsub.s32 %v2741, %v2743
    %v2745 = vrot.slane %v2737, %v2744
    %v2747 = vunpack.c.l.s4 1983009808
    %v2748 = vunpack.c.0.s8 %v2747
    %v2749 = vlaneseq
    %v2750 = vshrl.u32 %v2749, 7
    %v2751 = vsub.s32 %v2748, %v2750
    %v2752 = vrot.slane %v2738, %v2751
    %v2753 = vcombine.low %v2216, %v2366
    %v2754 = vcombine.high %v2216, %v2366
    %v2756 = vunpack.c.l.s4 1983009808
    %v2757 = vunpack.c.0.s8 %v2756
    %v2758 = vlaneseq
    %v2759 = vshrl.u32 %v2758, 7
    %v2760 = vsub.s32 %v2757, %v2759
    %v2761 = vrot.slane %v2753, %v2760
    %v2763 = vunpack.c.l.s4 1983009808
    %v2764 = vunpack.c.0.s8 %v2763
    %v2765 = vlaneseq
    %v2766 = vshrl.u32 %v2765, 7
    %v2767 = vsub.s32 %v2764, %v2766
    %v2768 = vrot.slane %v2754, %v2767
    %v2769 = vcombine.low %v2291, %v2441
    %v2770 = vcombine.high %v2291, %v2441
    %v2772 = vunpack.c.l.s4 1983009808
    %v2773 = vunpack.c.0.s8 %v2772
    %v2774 = vlaneseq
    %v2775 = vshrl.u32 %v2774, 7
    %v2776 = vsub.s32 %v2773, %v2775
    %v2777 = vrot.slane %v2769, %v2776
    %v2779 = vunpack.c.l.s4 1983009808
    %v2780 = vunpack.c.0.s8 %v2779
    %v2781 = vlaneseq
    %v2782 = vshrl.u32 %v2781, 7
    %v2783 = vsub.s32 %v2780, %v2782
    %v2784 = vrot.slane %v2770, %v2783
    %v2785 = vcombine.low %v2729, %v2745
    %v2786 = vcombine.high %v2729, %v2745
    %v2788 = vunpack.c.l.s4 1934713408
    %v2789 = vunpack.c.0.s8 %v2788
    %v2790 = vlaneseq
    %v2791 = vshrl.u32 %v2790, 7
    %v2792 = vsub.s32 %v2789, %v2791
    %v2793 = vrot.slane %v2785, %v2792
    %v2795 = vunpack.c.l.s4 1934713408
    %v2796 = vunpack.c.0.s8 %v2795
    %v2797 = vlaneseq
    %v2798 = vshrl.u32 %v2797, 7
    %v2799 = vsub.s32 %v2796, %v2798
    %v2800 = vrot.slane %v2786, %v2799
    %v2801 = vcombine.low %v2736, %v2752
    %v2802 = vcombine.high %v2736, %v2752
    %v2804 = vunpack.c.l.s4 1934713408
    %v2805 = vunpack.c.0.s8 %v2804
    %v2806 = vlaneseq
    %v2807 = vshrl.u32 %v2806, 7
    %v2808 = vsub.s32 %v2805, %v2807
    %v2809 = vrot.slane %v2801, %v2808
    %v2811 = vunpack.c.l.s4 1934713408
    %v2812 = vunpack.c.0.s8 %v2811
    %v2813 = vlaneseq
    %v2814 = vshrl.u32 %v2813, 7
    %v2815 = vsub.s32 %v2812, %v2814
    %v2816 = vrot.slane %v2802, %v2815
    %v2817 = vcombine.low %v2761, %v2777
    %v2818 = vcombine.high %v2761, %v2777
    %v2820 = vunpack.c.l.s4 1934713408
    %v2821 = vunpack.c.0.s8 %v2820
    %v2822 = vlaneseq
    %v2823 = vshrl.u32 %v2822, 7
    %v2824 = vsub.s32 %v2821, %v2823
    %v2825 = vrot.slane %v2817, %v2824
    %v2827 = vunpack.c.l.s4 1934713408
    %v2828 = vunpack.c.0.s8 %v2827
    %v2829 = vlaneseq
    %v2830 = vshrl.u32 %v2829, 7
    %v2831 = vsub.s32 %v2828, %v2830
    %v2832 = vrot.slane %v2818, %v2831
    %v2833 = vcombine.low %v2768, %v2784
    %v2834 = vcombine.high %v2768, %v2784
    %v2836 = vunpack.c.l.s4 1934713408
    %v2837 = vunpack.c.0.s8 %v2836
    %v2838 = vlaneseq
    %v2839 = vshrl.u32 %v2838, 7
    %v2840 = vsub.s32 %v2837, %v2839
    %v2841 = vrot.slane %v2833, %v2840
    %v2843 = vunpack.c.l.s4 1934713408
    %v2844 = vunpack.c.0.s8 %v2843
    %v2845 = vlaneseq
    %v2846 = vshrl.u32 %v2845, 7
    %v2847 = vsub.s32 %v2844, %v2846
    %v2848 = vrot.slane %v2834, %v2847
    %v2849 = vcombine.low %v2793, %v2825
    %v2850 = vcombine.high %v2793, %v2825
    %v2851 = vcombine.low %v2800, %v2832
    %v2852 = vcombine.high %v2800, %v2832
    %v2853 = vcombine.low %v2809, %v2841
    %v2854 = vcombine.high %v2809, %v2841
    %v2855 = vcombine.low %v2816, %v2848
    %v2856 = vcombine.high %v2816, %v2848
    %v2857 = vcombine.low %v1921, %v2071
    %v2858 = vcombine.high %v1921, %v2071
    %v2860 = vunpack.c.l.s4 1983009808
    %v2861 = vunpack.c.0.s8 %v2860
    %v2862 = vlaneseq
    %v2863 = vshrl.u32 %v2862, 7
    %v2864 = vsub.s32 %v2861, %v2863
    %v2865 = vrot.slane %v2857, %v2864
    %v2867 = vunpack.c.l.s4 1983009808
    %v2868 = vunpack.c.0.s8 %v2867
    %v2869 = vlaneseq
    %v2870 = vshrl.u32 %v2869, 7
    %v2871 = vsub.s32 %v2868, %v2870
    %v2872 = vrot.slane %v2858, %v2871
    %v2873 = vcombine.low %v1996, %v2146
    %v2874 = vcombine.high %v1996, %v2146
    %v2876 = vunpack.c.l.s4 1983009808
    %v2877 = vunpack.c.0.s8 %v2876
    %v2878 = vlaneseq
    %v2879 = vshrl.u32 %v2878, 7
    %v2880 = vsub.s32 %v2877, %v2879
    %v2881 = vrot.slane %v2873, %v2880
    %v2883 = vunpack.c.l.s4 1983009808
    %v2884 = vunpack.c.0.s8 %v2883
    %v2885 = vlaneseq
    %v2886 = vshrl.u32 %v2885, 7
    %v2887 = vsub.s32 %v2884, %v2886
    %v2888 = vrot.slane %v2874, %v2887
    %v2889 = vcombine.low %v2221, %v2371
    %v2890 = vcombine.high %v2221, %v2371
    %v2892 = vunpack.c.l.s4 1983009808
    %v2893 = vunpack.c.0.s8 %v2892
    %v2894 = vlaneseq
    %v2895 = vshrl.u32 %v2894, 7
    %v2896 = vsub.s32 %v2893, %v2895
    %v2897 = vrot.slane %v2889, %v2896
    %v2899 = vunpack.c.l.s4 1983009808
    %v2900 = vunpack.c.0.s8 %v2899
    %v2901 = vlaneseq
    %v2902 = vshrl.u32 %v2901, 7
    %v2903 = vsub.s32 %v2900, %v2902
    %v2904 = vrot.slane %v2890, %v2903
    %v2905 = vcombine.low %v2296, %v2446
    %v2906 = vcombine.high %v2296, %v2446
    %v2908 = vunpack.c.l.s4 1983009808
    %v2909 = vunpack.c.0.s8 %v2908
    %v2910 = vlaneseq
    %v2911 = vshrl.u32 %v2910, 7
    %v2912 = vsub.s32 %v2909, %v2911
    %v2913 = vrot.slane %v2905, %v2912
    %v2915 = vunpack.c.l.s4 1983009808
    %v2916 = vunpack.c.0.s8 %v2915
    %v2917 = vlaneseq
    %v2918 = vshrl.u32 %v2917, 7
    %v2919 = vsub.s32 %v2916, %v2918
    %v2920 = vrot.slane %v2906, %v2919
    %v2921 = vcombine.low %v2865, %v2881
    %v2922 = vcombine.high %v2865, %v2881
    %v2924 = vunpack.c.l.s4 1934713408
    %v2925 = vunpack.c.0.s8 %v2924
    %v2926 = vlaneseq
    %v2927 = vshrl.u32 %v2926, 7
    %v2928 = vsub.s32 %v2925, %v2927
    %v2929 = vrot.slane %v2921, %v2928
    %v2931 = vunpack.c.l.s4 1934713408
    %v2932 = vunpack.c.0.s8 %v2931
    %v2933 = vlaneseq
    %v2934 = vshrl.u32 %v2933, 7
    %v2935 = vsub.s32 %v2932, %v2934
    %v2936 = vrot.slane %v2922, %v2935
    %v2937 = vcombine.low %v2872, %v2888
    %v2938 = vcombine.high %v2872, %v2888
    %v2940 = vunpack.c.l.s4 1934713408
    %v2941 = vunpack.c.0.s8 %v2940
    %v2942 = vlaneseq
    %v2943 = vshrl.u32 %v2942, 7
    %v2944 = vsub.s32 %v2941, %v2943
    %v2945 = vrot.slane %v2937, %v2944
    %v2947 = vunpack.c.l.s4 1934713408
    %v2948 = vunpack.c.0.s8 %v2947
    %v2949 = vlaneseq
    %v2950 = vshrl.u32 %v2949, 7
    %v2951 = vsub.s32 %v2948, %v2950
    %v2952 = vrot.slane %v2938, %v2951
    %v2953 = vcombine.low %v2897, %v2913
    %v2954 = vcombine.high %v2897, %v2913
    %v2956 = vunpack.c.l.s4 1934713408
    %v2957 = vunpack.c.0.s8 %v2956
    %v2958 = vlaneseq
    %v2959 = vshrl.u32 %v2958, 7
    %v2960 = vsub.s32 %v2957, %v2959
    %v2961 = vrot.slane %v2953, %v2960
    %v2963 = vunpack.c.l.s4 1934713408
    %v2964 = vunpack.c.0.s8 %v2963
    %v2965 = vlaneseq
    %v2966 = vshrl.u32 %v2965, 7
    %v2967 = vsub.s32 %v2964, %v2966
    %v2968 = vrot.slane %v2954, %v2967
    %v2969 = vcombine.low %v2904, %v2920
    %v2970 = vcombine.high %v2904, %v2920
    %v2972 = vunpack.c.l.s4 1934713408
    %v2973 = vunpack.c.0.s8 %v2972
    %v2974 = vlaneseq
    %v2975 = vshrl.u32 %v2974, 7
    %v2976 = vsub.s32 %v2973, %v2975
    %v2977 = vrot.slane %v2969, %v2976
    %v2979 = vunpack.c.l.s4 1934713408
    %v2980 = vunpack.c.0.s8 %v2979
    %v2981 = vlaneseq
    %v2982 = vshrl.u32 %v2981, 7
    %v2983 = vsub.s32 %v2980, %v2982
    %v2984 = vrot.slane %v2970, %v2983
    %v2985 = vcombine.low %v2929, %v2961
    %v2986 = vcombine.high %v2929, %v2961
    %v2987 = vcombine.low %v2936, %v2968
    %v2988 = vcombine.high %v2936, %v2968
    %v2989 = vcombine.low %v2945, %v2977
    %v2990 = vcombine.high %v2945, %v2977
    %v2991 = vcombine.low %v2952, %v2984
    %v2992 = vcombine.high %v2952, %v2984
    %2995 = vrot.lane.b32.xlu0 %v2578, 32
    %v2996 = vpop.permute.xlu0 %2995
    %2997 = vrot.lane.b32.xlu0 %v2850, 32
    %v2998 = vpop.permute.xlu0 %2997
    %3003 = vrot.lane.b32.xlu0 %v2579, 64
    %v3004 = vpop.permute.xlu0 %3003
    %3005 = vrot.lane.b32.xlu0 %v2851, 64
    %v3006 = vpop.permute.xlu0 %3005
    %3011 = vrot.lane.b32.xlu0 %v2580, 96
    %v3012 = vpop.permute.xlu0 %3011
    %3013 = vrot.lane.b32.xlu0 %v2852, 96
    %v3014 = vpop.permute.xlu0 %3013
    %3019 = vrot.lane.b32.xlu0 %v2582, 32
    %v3020 = vpop.permute.xlu0 %3019
    %3021 = vrot.lane.b32.xlu0 %v2854, 32
    %v3022 = vpop.permute.xlu0 %3021
    %3027 = vrot.lane.b32.xlu0 %v2583, 64
    %v3028 = vpop.permute.xlu0 %3027
    %3029 = vrot.lane.b32.xlu0 %v2855, 64
    %v3030 = vpop.permute.xlu0 %3029
    %3035 = vrot.lane.b32.xlu0 %v2584, 96
    %v3036 = vpop.permute.xlu0 %3035
    %3037 = vrot.lane.b32.xlu0 %v2856, 96
    %v3038 = vpop.permute.xlu0 %3037
    %3043 = vrot.lane.b32.xlu0 %v2714, 32
    %v3044 = vpop.permute.xlu0 %3043
    %3045 = vrot.lane.b32.xlu0 %v2986, 32
    %v3046 = vpop.permute.xlu0 %3045
    %3051 = vrot.lane.b32.xlu0 %v2715, 64
    %v3052 = vpop.permute.xlu0 %3051
    %3053 = vrot.lane.b32.xlu0 %v2987, 64
    %v3054 = vpop.permute.xlu0 %3053
    %3059 = vrot.lane.b32.xlu0 %v2716, 96
    %v3060 = vpop.permute.xlu0 %3059
    %3061 = vrot.lane.b32.xlu0 %v2988, 96
    %v3062 = vpop.permute.xlu0 %3061
    %3067 = vrot.lane.b32.xlu0 %v2718, 32
    %v3068 = vpop.permute.xlu0 %3067
    %3069 = vrot.lane.b32.xlu0 %v2990, 32
    %v3070 = vpop.permute.xlu0 %3069
    %3075 = vrot.lane.b32.xlu0 %v2719, 64
    %v3076 = vpop.permute.xlu0 %3075
    %3077 = vrot.lane.b32.xlu0 %v2991, 64
    %v3078 = vpop.permute.xlu0 %3077
    %3083 = vrot.lane.b32.xlu0 %v2720, 96
    %v3084 = vpop.permute.xlu0 %3083
    %3085 = vrot.lane.b32.xlu0 %v2992, 96
    %v3086 = vpop.permute.xlu0 %3085
    %v3089 = vsel %vm557, %v2577, %v2996
    %v3090 = vsel %vm557, %v2849, %v2998
    %v3091 = vsel %vm574, %v3089, %v3004
    %v3092 = vsel %vm574, %v3090, %v3006
    %v3093 = vsel %vm591, %v3091, %v3012
    %v3094 = vsel %vm591, %v3092, %v3014
    %v3095 = vsel %vm557, %v2581, %v3020
    %v3096 = vsel %vm557, %v2853, %v3022
    %v3097 = vsel %vm574, %v3095, %v3028
    %v3098 = vsel %vm574, %v3096, %v3030
    %v3099 = vsel %vm591, %v3097, %v3036
    %v3100 = vsel %vm591, %v3098, %v3038
    %v3101 = vsel %vm557, %v2713, %v3044
    %v3102 = vsel %vm557, %v2985, %v3046
    %v3103 = vsel %vm574, %v3101, %v3052
    %v3104 = vsel %vm574, %v3102, %v3054
    %v3105 = vsel %vm591, %v3103, %v3060
    %v3106 = vsel %vm591, %v3104, %v3062
    %v3107 = vsel %vm557, %v2717, %v3068
    %v3108 = vsel %vm557, %v2989, %v3070
    %v3109 = vsel %vm574, %v3107, %v3076
    %v3110 = vsel %vm574, %v3108, %v3078
    %v3111 = vsel %vm591, %v3109, %v3084
    %v3112 = vsel %vm591, %v3110, %v3086
    %v3113 = vld [vmem:[%s5] sm:$0xff]
    %v3114 = vld [vmem:[%s5 + $0x8] sm:$0xff]
    %v3116 = vsel %vm1242, %v3113, 0
    %v3119 = vsel %vm1242, %v3114, 0
    %3121 = vmatprep.subr.mxu0 %v3099
    %3122 = vmatpush1.msra.mxu0 %v3093
    %3123 = vmatprep.subr.mxu0 0.0
    %3124 = vmatpush1.msra.mxu0 0.0
    %3125 = vmatprep.subr.mxu0 0.0
    %3126 = vmatpush1.msra.mxu0 0.0
    %3127 = vmatprep.subr.mxu0 0.0
    %3128 = vmatpush1.msra.mxu0 0.0
    %3129 = vmatprep.subr.mxu0 0.0
    %3130 = vmatpush1.msra.mxu0 0.0
    %3131 = vmatprep.subr.mxu0 0.0
    %3132 = vmatpush1.msra.mxu0 0.0
    %3133 = vmatprep.subr.mxu0 0.0
    %3134 = vmatpush1.msra.mxu0 0.0
    %3135 = vmatprep.subr.mxu0 0.0
    %3136 = vmatpush1.msra.mxu0 0.0
    %3137 = vmatprep.subr.mxu0 0.0
    %3138 = vmatpush1.msra.mxu0 0.0
    %3139 = vmatprep.subr.mxu0 0.0
    %3140 = vmatpush1.msra.mxu0 0.0
    %3141 = vmatprep.subr.mxu0 0.0
    %3142 = vmatpush1.msra.mxu0 0.0
    %3143 = vmatprep.subr.mxu0 0.0
    %3144 = vmatpush1.msra.mxu0 0.0
    %3145 = vmatprep.subr.mxu0 0.0
    %3146 = vmatpush1.msra.mxu0 0.0
    %3147 = vmatprep.subr.mxu0 0.0
    %3148 = vmatpush1.msra.mxu0 0.0
    %3149 = vmatprep.subr.mxu0 0.0
    %3150 = vmatpush1.msra.mxu0 0.0
    %3151 = vmatprep.subr.mxu0 0.0
    %3152 = vmatpush1.msra.mxu0 0.0
    %3153 = vmatprep.subr.mxu0 0.0
    %3154 = vmatpush1.msra.mxu0 0.0
    %3155 = vmatprep.subr.mxu0 0.0
    %3156 = vmatpush1.msra.mxu0 0.0
    %3157 = vmatprep.subr.mxu0 0.0
    %3158 = vmatpush1.msra.mxu0 0.0
    %3159 = vmatprep.subr.mxu0 0.0
    %3160 = vmatpush1.msra.mxu0 0.0
    %3161 = vmatprep.subr.mxu0 0.0
    %3162 = vmatpush1.msra.mxu0 0.0
    %3163 = vmatprep.subr.mxu0 0.0
    %3164 = vmatpush1.msra.mxu0 0.0
    %3165 = vmatprep.subr.mxu0 0.0
    %3166 = vmatpush1.msra.mxu0 0.0
    %3167 = vmatprep.subr.mxu0 0.0
    %3168 = vmatpush1.msra.mxu0 0.0
    %3169 = vmatprep.subr.mxu0 0.0
    %3170 = vmatpush1.msra.mxu0 0.0
    %3171 = vmatprep.subr.mxu0 0.0
    %3172 = vmatpush1.msra.mxu0 0.0
    %3173 = vmatprep.subr.mxu0 0.0
    %3174 = vmatpush1.msra.mxu0 0.0
    %3175 = vmatprep.subr.mxu0 0.0
    %3176 = vmatpush1.msra.mxu0 0.0
    %3177 = vmatprep.subr.mxu0 0.0
    %3178 = vmatpush1.msra.mxu0 0.0
    %3179 = vmatprep.subr.mxu0 0.0
    %3180 = vmatpush1.msra.mxu0 0.0
    %3181 = vmatprep.subr.mxu0 0.0
    %3182 = vmatpush1.msra.mxu0 0.0
    %3183 = vmatprep.subr.mxu0 0.0
    %3184 = vmatpush1.msra.mxu0 0.0
    %3185 = vmatprep.mubr.f32.mxu0 0.0
    %3186 = vmatmul.mubr.f32.gmra.mrb[0].mxu0 %v3116
    %v3187 = vpop.f32.mrb[0].mxu0
    %v3188 = vadd.f32 0.0, %v3187
    %v3189 = vpop.f32.mrb[0].mxu0
    %v3190 = vadd.f32 0.0, %v3189
    %3191 = vmatprep.mubr.f32.mxu0 0.0
    %3192 = vmatmul.mubr.f32.gmra.mrb[0].mxu0 %v3119
    %v3193 = vpop.f32.mrb[0].mxu0
    %v3194 = vadd.f32 0.0, %v3193
    %v3195 = vpop.f32.mrb[0].mxu0
    %v3196 = vadd.f32 0.0, %v3195
    %3197 = vdwg.mxu0
    %3198 = vmatprep.subr.mxu0 %v3111
    %3199 = vmatpush1.msra.mxu0 %v3105
    %3200 = vmatprep.subr.mxu0 0.0
    %3201 = vmatpush1.msra.mxu0 0.0
    %3202 = vmatprep.subr.mxu0 0.0
    %3203 = vmatpush1.msra.mxu0 0.0
    %3204 = vmatprep.subr.mxu0 0.0
    %3205 = vmatpush1.msra.mxu0 0.0
    %3206 = vmatprep.subr.mxu0 0.0
    %3207 = vmatpush1.msra.mxu0 0.0
    %3208 = vmatprep.subr.mxu0 0.0
    %3209 = vmatpush1.msra.mxu0 0.0
    %3210 = vmatprep.subr.mxu0 0.0
    %3211 = vmatpush1.msra.mxu0 0.0
    %3212 = vmatprep.subr.mxu0 0.0
    %3213 = vmatpush1.msra.mxu0 0.0
    %3214 = vmatprep.subr.mxu0 0.0
    %3215 = vmatpush1.msra.mxu0 0.0
    %3216 = vmatprep.subr.mxu0 0.0
    %3217 = vmatpush1.msra.mxu0 0.0
    %3218 = vmatprep.subr.mxu0 0.0
    %3219 = vmatpush1.msra.mxu0 0.0
    %3220 = vmatprep.subr.mxu0 0.0
    %3221 = vmatpush1.msra.mxu0 0.0
    %3222 = vmatprep.subr.mxu0 0.0
    %3223 = vmatpush1.msra.mxu0 0.0
    %3224 = vmatprep.subr.mxu0 0.0
    %3225 = vmatpush1.msra.mxu0 0.0
    %3226 = vmatprep.subr.mxu0 0.0
    %3227 = vmatpush1.msra.mxu0 0.0
    %3228 = vmatprep.subr.mxu0 0.0
    %3229 = vmatpush1.msra.mxu0 0.0
    %3230 = vmatprep.subr.mxu0 0.0
    %3231 = vmatpush1.msra.mxu0 0.0
    %3232 = vmatprep.subr.mxu0 0.0
    %3233 = vmatpush1.msra.mxu0 0.0
    %3234 = vmatprep.subr.mxu0 0.0
    %3235 = vmatpush1.msra.mxu0 0.0
    %3236 = vmatprep.subr.mxu0 0.0
    %3237 = vmatpush1.msra.mxu0 0.0
    %3238 = vmatprep.subr.mxu0 0.0
    %3239 = vmatpush1.msra.mxu0 0.0
    %3240 = vmatprep.subr.mxu0 0.0
    %3241 = vmatpush1.msra.mxu0 0.0
    %3242 = vmatprep.subr.mxu0 0.0
    %3243 = vmatpush1.msra.mxu0 0.0
    %3244 = vmatprep.subr.mxu0 0.0
    %3245 = vmatpush1.msra.mxu0 0.0
    %3246 = vmatprep.subr.mxu0 0.0
    %3247 = vmatpush1.msra.mxu0 0.0
    %3248 = vmatprep.subr.mxu0 0.0
    %3249 = vmatpush1.msra.mxu0 0.0
    %3250 = vmatprep.subr.mxu0 0.0
    %3251 = vmatpush1.msra.mxu0 0.0
    %3252 = vmatprep.subr.mxu0 0.0
    %3253 = vmatpush1.msra.mxu0 0.0
    %3254 = vmatprep.subr.mxu0 0.0
    %3255 = vmatpush1.msra.mxu0 0.0
    %3256 = vmatprep.subr.mxu0 0.0
    %3257 = vmatpush1.msra.mxu0 0.0
    %3258 = vmatprep.subr.mxu0 0.0
    %3259 = vmatpush1.msra.mxu0 0.0
    %3260 = vmatprep.subr.mxu0 0.0
    %3261 = vmatpush1.msra.mxu0 0.0
    %3262 = vmatprep.mubr.f32.mxu0 0.0
    %3263 = vmatmul.mubr.f32.gmra.mrb[0].mxu0 %v3116
    %v3264 = vpop.f32.mrb[0].mxu0
    %v3265 = vadd.f32 0.0, %v3264
    %v3266 = vpop.f32.mrb[0].mxu0
    %v3267 = vadd.f32 0.0, %v3266
    %3268 = vmatprep.mubr.f32.mxu0 0.0
    %3269 = vmatmul.mubr.f32.gmra.mrb[0].mxu0 %v3119
    %v3270 = vpop.f32.mrb[0].mxu0
    %v3271 = vadd.f32 0.0, %v3270
    %v3272 = vpop.f32.mrb[0].mxu0
    %v3273 = vadd.f32 0.0, %v3272
    %3274 = vdwg.mxu0
    %3275 = vmatprep.subr.mxu0 %v3100
    %3276 = vmatpush1.msra.mxu0 %v3094
    %3277 = vmatprep.subr.mxu0 0.0
    %3278 = vmatpush1.msra.mxu0 0.0
    %3279 = vmatprep.subr.mxu0 0.0
    %3280 = vmatpush1.msra.mxu0 0.0
    %3281 = vmatprep.subr.mxu0 0.0
    %3282 = vmatpush1.msra.mxu0 0.0
    %3283 = vmatprep.subr.mxu0 0.0
    %3284 = vmatpush1.msra.mxu0 0.0
    %3285 = vmatprep.subr.mxu0 0.0
    %3286 = vmatpush1.msra.mxu0 0.0
    %3287 = vmatprep.subr.mxu0 0.0
    %3288 = vmatpush1.msra.mxu0 0.0
    %3289 = vmatprep.subr.mxu0 0.0
    %3290 = vmatpush1.msra.mxu0 0.0
    %3291 = vmatprep.subr.mxu0 0.0
    %3292 = vmatpush1.msra.mxu0 0.0
    %3293 = vmatprep.subr.mxu0 0.0
    %3294 = vmatpush1.msra.mxu0 0.0
    %3295 = vmatprep.subr.mxu0 0.0
    %3296 = vmatpush1.msra.mxu0 0.0
    %3297 = vmatprep.subr.mxu0 0.0
    %3298 = vmatpush1.msra.mxu0 0.0
    %3299 = vmatprep.subr.mxu0 0.0
    %3300 = vmatpush1.msra.mxu0 0.0
    %3301 = vmatprep.subr.mxu0 0.0
    %3302 = vmatpush1.msra.mxu0 0.0
    %3303 = vmatprep.subr.mxu0 0.0
    %3304 = vmatpush1.msra.mxu0 0.0
    %3305 = vmatprep.subr.mxu0 0.0
    %3306 = vmatpush1.msra.mxu0 0.0
    %3307 = vmatprep.subr.mxu0 0.0
    %3308 = vmatpush1.msra.mxu0 0.0
    %3309 = vmatprep.subr.mxu0 0.0
    %3310 = vmatpush1.msra.mxu0 0.0
    %3311 = vmatprep.subr.mxu0 0.0
    %3312 = vmatpush1.msra.mxu0 0.0
    %3313 = vmatprep.subr.mxu0 0.0
    %3314 = vmatpush1.msra.mxu0 0.0
    %3315 = vmatprep.subr.mxu0 0.0
    %3316 = vmatpush1.msra.mxu0 0.0
    %3317 = vmatprep.subr.mxu0 0.0
    %3318 = vmatpush1.msra.mxu0 0.0
    %3319 = vmatprep.subr.mxu0 0.0
    %3320 = vmatpush1.msra.mxu0 0.0
    %3321 = vmatprep.subr.mxu0 0.0
    %3322 = vmatpush1.msra.mxu0 0.0
    %3323 = vmatprep.subr.mxu0 0.0
    %3324 = vmatpush1.msra.mxu0 0.0
    %3325 = vmatprep.subr.mxu0 0.0
    %3326 = vmatpush1.msra.mxu0 0.0
    %3327 = vmatprep.subr.mxu0 0.0
    %3328 = vmatpush1.msra.mxu0 0.0
    %3329 = vmatprep.subr.mxu0 0.0
    %3330 = vmatpush1.msra.mxu0 0.0
    %3331 = vmatprep.subr.mxu0 0.0
    %3332 = vmatpush1.msra.mxu0 0.0
    %3333 = vmatprep.subr.mxu0 0.0
    %3334 = vmatpush1.msra.mxu0 0.0
    %3335 = vmatprep.subr.mxu0 0.0
    %3336 = vmatpush1.msra.mxu0 0.0
    %3337 = vmatprep.subr.mxu0 0.0
    %3338 = vmatpush1.msra.mxu0 0.0
    %3339 = vmatprep.mubr.f32.mxu0 0.0
    %3340 = vmatmul.mubr.f32.gmra.mrb[0].mxu0 %v3116
    %v3341 = vpop.f32.mrb[0].mxu0
    %v3342 = vadd.f32 0.0, %v3341
    %v3343 = vpop.f32.mrb[0].mxu0
    %v3344 = vadd.f32 0.0, %v3343
    %3345 = vmatprep.mubr.f32.mxu0 0.0
    %3346 = vmatmul.mubr.f32.gmra.mrb[0].mxu0 %v3119
    %v3347 = vpop.f32.mrb[0].mxu0
    %v3348 = vadd.f32 0.0, %v3347
    %v3349 = vpop.f32.mrb[0].mxu0
    %v3350 = vadd.f32 0.0, %v3349
    %3351 = vdwg.mxu0
    %3352 = vmatprep.subr.mxu0 %v3112
    %3353 = vmatpush1.msra.mxu0 %v3106
    %3354 = vmatprep.subr.mxu0 0.0
    %3355 = vmatpush1.msra.mxu0 0.0
    %3356 = vmatprep.subr.mxu0 0.0
    %3357 = vmatpush1.msra.mxu0 0.0
    %3358 = vmatprep.subr.mxu0 0.0
    %3359 = vmatpush1.msra.mxu0 0.0
    %3360 = vmatprep.subr.mxu0 0.0
    %3361 = vmatpush1.msra.mxu0 0.0
    %3362 = vmatprep.subr.mxu0 0.0
    %3363 = vmatpush1.msra.mxu0 0.0
    %3364 = vmatprep.subr.mxu0 0.0
    %3365 = vmatpush1.msra.mxu0 0.0
    %3366 = vmatprep.subr.mxu0 0.0
    %3367 = vmatpush1.msra.mxu0 0.0
    %3368 = vmatprep.subr.mxu0 0.0
    %3369 = vmatpush1.msra.mxu0 0.0
    %3370 = vmatprep.subr.mxu0 0.0
    %3371 = vmatpush1.msra.mxu0 0.0
    %3372 = vmatprep.subr.mxu0 0.0
    %3373 = vmatpush1.msra.mxu0 0.0
    %3374 = vmatprep.subr.mxu0 0.0
    %3375 = vmatpush1.msra.mxu0 0.0
    %3376 = vmatprep.subr.mxu0 0.0
    %3377 = vmatpush1.msra.mxu0 0.0
    %3378 = vmatprep.subr.mxu0 0.0
    %3379 = vmatpush1.msra.mxu0 0.0
    %3380 = vmatprep.subr.mxu0 0.0
    %3381 = vmatpush1.msra.mxu0 0.0
    %3382 = vmatprep.subr.mxu0 0.0
    %3383 = vmatpush1.msra.mxu0 0.0
    %3384 = vmatprep.subr.mxu0 0.0
    %3385 = vmatpush1.msra.mxu0 0.0
    %3386 = vmatprep.subr.mxu0 0.0
    %3387 = vmatpush1.msra.mxu0 0.0
    %3388 = vmatprep.subr.mxu0 0.0
    %3389 = vmatpush1.msra.mxu0 0.0
    %3390 = vmatprep.subr.mxu0 0.0
    %3391 = vmatpush1.msra.mxu0 0.0
    %3392 = vmatprep.subr.mxu0 0.0
    %3393 = vmatpush1.msra.mxu0 0.0
    %3394 = vmatprep.subr.mxu0 0.0
    %3395 = vmatpush1.msra.mxu0 0.0
    %3396 = vmatprep.subr.mxu0 0.0
    %3397 = vmatpush1.msra.mxu0 0.0
    %3398 = vmatprep.subr.mxu0 0.0
    %3399 = vmatpush1.msra.mxu0 0.0
    %3400 = vmatprep.subr.mxu0 0.0
    %3401 = vmatpush1.msra.mxu0 0.0
    %3402 = vmatprep.subr.mxu0 0.0
    %3403 = vmatpush1.msra.mxu0 0.0
    %3404 = vmatprep.subr.mxu0 0.0
    %3405 = vmatpush1.msra.mxu0 0.0
    %3406 = vmatprep.subr.mxu0 0.0
    %3407 = vmatpush1.msra.mxu0 0.0
    %3408 = vmatprep.subr.mxu0 0.0
    %3409 = vmatpush1.msra.mxu0 0.0
    %3410 = vmatprep.subr.mxu0 0.0
    %3411 = vmatpush1.msra.mxu0 0.0
    %3412 = vmatprep.subr.mxu0 0.0
    %3413 = vmatpush1.msra.mxu0 0.0
    %3414 = vmatprep.subr.mxu0 0.0
    %3415 = vmatpush1.msra.mxu0 0.0
    %3416 = vmatprep.mubr.f32.mxu0 0.0
    %3417 = vmatmul.mubr.f32.gmra.mrb[0].mxu0 %v3116
    %v3418 = vpop.f32.mrb[0].mxu0
    %v3419 = vadd.f32 0.0, %v3418
    %v3420 = vpop.f32.mrb[0].mxu0
    %v3421 = vadd.f32 0.0, %v3420
    %3422 = vmatprep.mubr.f32.mxu0 0.0
    %3423 = vmatmul.mubr.f32.gmra.mrb[0].mxu0 %v3119
    %v3424 = vpop.f32.mrb[0].mxu0
    %v3425 = vadd.f32 0.0, %v3424
    %v3426 = vpop.f32.mrb[0].mxu0
    %v3427 = vadd.f32 0.0, %v3426
    %3428 = vdwg.mxu0
    %3433 = vrot.lane.b32.xlu0 %v3188, 96
    %v3434 = vpop.permute.xlu0 %3433
    %3435 = vrot.lane.b32.xlu0 %v3194, 96
    %v3436 = vpop.permute.xlu0 %3435
    %3437 = vrot.lane.b32.xlu0 %v3342, 96
    %v3438 = vpop.permute.xlu0 %3437
    %3439 = vrot.lane.b32.xlu0 %v3348, 96
    %v3440 = vpop.permute.xlu0 %3439
    %3445 = vrot.lane.b32.xlu0 %v3188, 64
    %v3446 = vpop.permute.xlu0 %3445
    %3447 = vrot.lane.b32.xlu0 %v3194, 64
    %v3448 = vpop.permute.xlu0 %3447
    %3449 = vrot.lane.b32.xlu0 %v3342, 64
    %v3450 = vpop.permute.xlu0 %3449
    %3451 = vrot.lane.b32.xlu0 %v3348, 64
    %v3452 = vpop.permute.xlu0 %3451
    %3457 = vrot.lane.b32.xlu0 %v3188, 32
    %v3458 = vpop.permute.xlu0 %3457
    %3459 = vrot.lane.b32.xlu0 %v3194, 32
    %v3460 = vpop.permute.xlu0 %3459
    %3461 = vrot.lane.b32.xlu0 %v3342, 32
    %v3462 = vpop.permute.xlu0 %3461
    %3463 = vrot.lane.b32.xlu0 %v3348, 32
    %v3464 = vpop.permute.xlu0 %3463
    %3473 = vrot.lane.b32.xlu0 %v3190, 96
    %v3474 = vpop.permute.xlu0 %3473
    %3475 = vrot.lane.b32.xlu0 %v3196, 96
    %v3476 = vpop.permute.xlu0 %3475
    %3477 = vrot.lane.b32.xlu0 %v3344, 96
    %v3478 = vpop.permute.xlu0 %3477
    %3479 = vrot.lane.b32.xlu0 %v3350, 96
    %v3480 = vpop.permute.xlu0 %3479
    %3485 = vrot.lane.b32.xlu0 %v3190, 64
    %v3486 = vpop.permute.xlu0 %3485
    %3487 = vrot.lane.b32.xlu0 %v3196, 64
    %v3488 = vpop.permute.xlu0 %3487
    %3489 = vrot.lane.b32.xlu0 %v3344, 64
    %v3490 = vpop.permute.xlu0 %3489
    %3491 = vrot.lane.b32.xlu0 %v3350, 64
    %v3492 = vpop.permute.xlu0 %3491
    %3497 = vrot.lane.b32.xlu0 %v3190, 32
    %v3498 = vpop.permute.xlu0 %3497
    %3499 = vrot.lane.b32.xlu0 %v3196, 32
    %v3500 = vpop.permute.xlu0 %3499
    %3501 = vrot.lane.b32.xlu0 %v3344, 32
    %v3502 = vpop.permute.xlu0 %3501
    %3503 = vrot.lane.b32.xlu0 %v3350, 32
    %v3504 = vpop.permute.xlu0 %3503
    %3513 = vrot.lane.b32.xlu0 %v3265, 96
    %v3514 = vpop.permute.xlu0 %3513
    %3515 = vrot.lane.b32.xlu0 %v3271, 96
    %v3516 = vpop.permute.xlu0 %3515
    %3517 = vrot.lane.b32.xlu0 %v3419, 96
    %v3518 = vpop.permute.xlu0 %3517
    %3519 = vrot.lane.b32.xlu0 %v3425, 96
    %v3520 = vpop.permute.xlu0 %3519
    %3525 = vrot.lane.b32.xlu0 %v3265, 64
    %v3526 = vpop.permute.xlu0 %3525
    %3527 = vrot.lane.b32.xlu0 %v3271, 64
    %v3528 = vpop.permute.xlu0 %3527
    %3529 = vrot.lane.b32.xlu0 %v3419, 64
    %v3530 = vpop.permute.xlu0 %3529
    %3531 = vrot.lane.b32.xlu0 %v3425, 64
    %v3532 = vpop.permute.xlu0 %3531
    %3537 = vrot.lane.b32.xlu0 %v3265, 32
    %v3538 = vpop.permute.xlu0 %3537
    %3539 = vrot.lane.b32.xlu0 %v3271, 32
    %v3540 = vpop.permute.xlu0 %3539
    %3541 = vrot.lane.b32.xlu0 %v3419, 32
    %v3542 = vpop.permute.xlu0 %3541
    %3543 = vrot.lane.b32.xlu0 %v3425, 32
    %v3544 = vpop.permute.xlu0 %3543
    %3553 = vrot.lane.b32.xlu0 %v3267, 96
    %v3554 = vpop.permute.xlu0 %3553
    %3555 = vrot.lane.b32.xlu0 %v3273, 96
    %v3556 = vpop.permute.xlu0 %3555
    %3557 = vrot.lane.b32.xlu0 %v3421, 96
    %v3558 = vpop.permute.xlu0 %3557
    %3559 = vrot.lane.b32.xlu0 %v3427, 96
    %v3560 = vpop.permute.xlu0 %3559
    %3565 = vrot.lane.b32.xlu0 %v3267, 64
    %v3566 = vpop.permute.xlu0 %3565
    %3567 = vrot.lane.b32.xlu0 %v3273, 64
    %v3568 = vpop.permute.xlu0 %3567
    %3569 = vrot.lane.b32.xlu0 %v3421, 64
    %v3570 = vpop.permute.xlu0 %3569
    %3571 = vrot.lane.b32.xlu0 %v3427, 64
    %v3572 = vpop.permute.xlu0 %3571
    %3577 = vrot.lane.b32.xlu0 %v3267, 32
    %v3578 = vpop.permute.xlu0 %3577
    %3579 = vrot.lane.b32.xlu0 %v3273, 32
    %v3580 = vpop.permute.xlu0 %3579
    %3581 = vrot.lane.b32.xlu0 %v3421, 32
    %v3582 = vpop.permute.xlu0 %3581
    %3583 = vrot.lane.b32.xlu0 %v3427, 32
    %v3584 = vpop.permute.xlu0 %3583
    %v3589 = vcombine.low %v3188, %v3446
    %v3590 = vcombine.high %v3188, %v3446
    %v3592 = vunpack.c.l.s4 1983009808
    %v3593 = vunpack.c.0.s8 %v3592
    %v3594 = vlaneseq
    %v3595 = vshrl.u32 %v3594, 7
    %v3596 = vsub.s32 %v3593, %v3595
    %v3597 = vrot.slane %v3589, %v3596
    %v3599 = vunpack.c.l.s4 1983009808
    %v3600 = vunpack.c.0.s8 %v3599
    %v3601 = vlaneseq
    %v3602 = vshrl.u32 %v3601, 7
    %v3603 = vsub.s32 %v3600, %v3602
    %v3604 = vrot.slane %v3590, %v3603
    %v3605 = vcombine.low %v3434, %v3458
    %v3606 = vcombine.high %v3434, %v3458
    %v3608 = vunpack.c.l.s4 1983009808
    %v3609 = vunpack.c.0.s8 %v3608
    %v3610 = vlaneseq
    %v3611 = vshrl.u32 %v3610, 7
    %v3612 = vsub.s32 %v3609, %v3611
    %v3613 = vrot.slane %v3605, %v3612
    %v3615 = vunpack.c.l.s4 1983009808
    %v3616 = vunpack.c.0.s8 %v3615
    %v3617 = vlaneseq
    %v3618 = vshrl.u32 %v3617, 7
    %v3619 = vsub.s32 %v3616, %v3618
    %v3620 = vrot.slane %v3606, %v3619
    %v3621 = vcombine.low %v3190, %v3486
    %v3622 = vcombine.high %v3190, %v3486
    %v3624 = vunpack.c.l.s4 1983009808
    %v3625 = vunpack.c.0.s8 %v3624
    %v3626 = vlaneseq
    %v3627 = vshrl.u32 %v3626, 7
    %v3628 = vsub.s32 %v3625, %v3627
    %v3629 = vrot.slane %v3621, %v3628
    %v3631 = vunpack.c.l.s4 1983009808
    %v3632 = vunpack.c.0.s8 %v3631
    %v3633 = vlaneseq
    %v3634 = vshrl.u32 %v3633, 7
    %v3635 = vsub.s32 %v3632, %v3634
    %v3636 = vrot.slane %v3622, %v3635
    %v3637 = vcombine.low %v3474, %v3498
    %v3638 = vcombine.high %v3474, %v3498
    %v3640 = vunpack.c.l.s4 1983009808
    %v3641 = vunpack.c.0.s8 %v3640
    %v3642 = vlaneseq
    %v3643 = vshrl.u32 %v3642, 7
    %v3644 = vsub.s32 %v3641, %v3643
    %v3645 = vrot.slane %v3637, %v3644
    %v3647 = vunpack.c.l.s4 1983009808
    %v3648 = vunpack.c.0.s8 %v3647
    %v3649 = vlaneseq
    %v3650 = vshrl.u32 %v3649, 7
    %v3651 = vsub.s32 %v3648, %v3650
    %v3652 = vrot.slane %v3638, %v3651
    %v3653 = vcombine.low %v3597, %v3613
    %v3654 = vcombine.high %v3597, %v3613
    %v3656 = vunpack.c.l.s4 1934713408
    %v3657 = vunpack.c.0.s8 %v3656
    %v3658 = vlaneseq
    %v3659 = vshrl.u32 %v3658, 7
    %v3660 = vsub.s32 %v3657, %v3659
    %v3661 = vrot.slane %v3653, %v3660
    %v3663 = vunpack.c.l.s4 1934713408
    %v3664 = vunpack.c.0.s8 %v3663
    %v3665 = vlaneseq
    %v3666 = vshrl.u32 %v3665, 7
    %v3667 = vsub.s32 %v3664, %v3666
    %v3668 = vrot.slane %v3654, %v3667
    %v3669 = vcombine.low %v3604, %v3620
    %v3670 = vcombine.high %v3604, %v3620
    %v3672 = vunpack.c.l.s4 1934713408
    %v3673 = vunpack.c.0.s8 %v3672
    %v3674 = vlaneseq
    %v3675 = vshrl.u32 %v3674, 7
    %v3676 = vsub.s32 %v3673, %v3675
    %v3677 = vrot.slane %v3669, %v3676
    %v3679 = vunpack.c.l.s4 1934713408
    %v3680 = vunpack.c.0.s8 %v3679
    %v3681 = vlaneseq
    %v3682 = vshrl.u32 %v3681, 7
    %v3683 = vsub.s32 %v3680, %v3682
    %v3684 = vrot.slane %v3670, %v3683
    %v3685 = vcombine.low %v3629, %v3645
    %v3686 = vcombine.high %v3629, %v3645
    %v3688 = vunpack.c.l.s4 1934713408
    %v3689 = vunpack.c.0.s8 %v3688
    %v3690 = vlaneseq
    %v3691 = vshrl.u32 %v3690, 7
    %v3692 = vsub.s32 %v3689, %v3691
    %v3693 = vrot.slane %v3685, %v3692
    %v3695 = vunpack.c.l.s4 1934713408
    %v3696 = vunpack.c.0.s8 %v3695
    %v3697 = vlaneseq
    %v3698 = vshrl.u32 %v3697, 7
    %v3699 = vsub.s32 %v3696, %v3698
    %v3700 = vrot.slane %v3686, %v3699
    %v3701 = vcombine.low %v3636, %v3652
    %v3702 = vcombine.high %v3636, %v3652
    %v3704 = vunpack.c.l.s4 1934713408
    %v3705 = vunpack.c.0.s8 %v3704
    %v3706 = vlaneseq
    %v3707 = vshrl.u32 %v3706, 7
    %v3708 = vsub.s32 %v3705, %v3707
    %v3709 = vrot.slane %v3701, %v3708
    %v3711 = vunpack.c.l.s4 1934713408
    %v3712 = vunpack.c.0.s8 %v3711
    %v3713 = vlaneseq
    %v3714 = vshrl.u32 %v3713, 7
    %v3715 = vsub.s32 %v3712, %v3714
    %v3716 = vrot.slane %v3702, %v3715
    %v3717 = vcombine.low %v3661, %v3693
    %v3718 = vcombine.high %v3661, %v3693
    %v3719 = vcombine.low %v3668, %v3700
    %v3720 = vcombine.high %v3668, %v3700
    %v3721 = vcombine.low %v3677, %v3709
    %v3722 = vcombine.high %v3677, %v3709
    %v3723 = vcombine.low %v3684, %v3716
    %v3724 = vcombine.high %v3684, %v3716
    %v3725 = vcombine.low %v3265, %v3526
    %v3726 = vcombine.high %v3265, %v3526
    %v3728 = vunpack.c.l.s4 1983009808
    %v3729 = vunpack.c.0.s8 %v3728
    %v3730 = vlaneseq
    %v3731 = vshrl.u32 %v3730, 7
    %v3732 = vsub.s32 %v3729, %v3731
    %v3733 = vrot.slane %v3725, %v3732
    %v3735 = vunpack.c.l.s4 1983009808
    %v3736 = vunpack.c.0.s8 %v3735
    %v3737 = vlaneseq
    %v3738 = vshrl.u32 %v3737, 7
    %v3739 = vsub.s32 %v3736, %v3738
    %v3740 = vrot.slane %v3726, %v3739
    %v3741 = vcombine.low %v3514, %v3538
    %v3742 = vcombine.high %v3514, %v3538
    %v3744 = vunpack.c.l.s4 1983009808
    %v3745 = vunpack.c.0.s8 %v3744
    %v3746 = vlaneseq
    %v3747 = vshrl.u32 %v3746, 7
    %v3748 = vsub.s32 %v3745, %v3747
    %v3749 = vrot.slane %v3741, %v3748
    %v3751 = vunpack.c.l.s4 1983009808
    %v3752 = vunpack.c.0.s8 %v3751
    %v3753 = vlaneseq
    %v3754 = vshrl.u32 %v3753, 7
    %v3755 = vsub.s32 %v3752, %v3754
    %v3756 = vrot.slane %v3742, %v3755
    %v3757 = vcombine.low %v3267, %v3566
    %v3758 = vcombine.high %v3267, %v3566
    %v3760 = vunpack.c.l.s4 1983009808
    %v3761 = vunpack.c.0.s8 %v3760
    %v3762 = vlaneseq
    %v3763 = vshrl.u32 %v3762, 7
    %v3764 = vsub.s32 %v3761, %v3763
    %v3765 = vrot.slane %v3757, %v3764
    %v3767 = vunpack.c.l.s4 1983009808
    %v3768 = vunpack.c.0.s8 %v3767
    %v3769 = vlaneseq
    %v3770 = vshrl.u32 %v3769, 7
    %v3771 = vsub.s32 %v3768, %v3770
    %v3772 = vrot.slane %v3758, %v3771
    %v3773 = vcombine.low %v3554, %v3578
    %v3774 = vcombine.high %v3554, %v3578
    %v3776 = vunpack.c.l.s4 1983009808
    %v3777 = vunpack.c.0.s8 %v3776
    %v3778 = vlaneseq
    %v3779 = vshrl.u32 %v3778, 7
    %v3780 = vsub.s32 %v3777, %v3779
    %v3781 = vrot.slane %v3773, %v3780
    %v3783 = vunpack.c.l.s4 1983009808
    %v3784 = vunpack.c.0.s8 %v3783
    %v3785 = vlaneseq
    %v3786 = vshrl.u32 %v3785, 7
    %v3787 = vsub.s32 %v3784, %v3786
    %v3788 = vrot.slane %v3774, %v3787
    %v3789 = vcombine.low %v3733, %v3749
    %v3790 = vcombine.high %v3733, %v3749
    %v3792 = vunpack.c.l.s4 1934713408
    %v3793 = vunpack.c.0.s8 %v3792
    %v3794 = vlaneseq
    %v3795 = vshrl.u32 %v3794, 7
    %v3796 = vsub.s32 %v3793, %v3795
    %v3797 = vrot.slane %v3789, %v3796
    %v3799 = vunpack.c.l.s4 1934713408
    %v3800 = vunpack.c.0.s8 %v3799
    %v3801 = vlaneseq
    %v3802 = vshrl.u32 %v3801, 7
    %v3803 = vsub.s32 %v3800, %v3802
    %v3804 = vrot.slane %v3790, %v3803
    %v3805 = vcombine.low %v3740, %v3756
    %v3806 = vcombine.high %v3740, %v3756
    %v3808 = vunpack.c.l.s4 1934713408
    %v3809 = vunpack.c.0.s8 %v3808
    %v3810 = vlaneseq
    %v3811 = vshrl.u32 %v3810, 7
    %v3812 = vsub.s32 %v3809, %v3811
    %v3813 = vrot.slane %v3805, %v3812
    %v3815 = vunpack.c.l.s4 1934713408
    %v3816 = vunpack.c.0.s8 %v3815
    %v3817 = vlaneseq
    %v3818 = vshrl.u32 %v3817, 7
    %v3819 = vsub.s32 %v3816, %v3818
    %v3820 = vrot.slane %v3806, %v3819
    %v3821 = vcombine.low %v3765, %v3781
    %v3822 = vcombine.high %v3765, %v3781
    %v3824 = vunpack.c.l.s4 1934713408
    %v3825 = vunpack.c.0.s8 %v3824
    %v3826 = vlaneseq
    %v3827 = vshrl.u32 %v3826, 7
    %v3828 = vsub.s32 %v3825, %v3827
    %v3829 = vrot.slane %v3821, %v3828
    %v3831 = vunpack.c.l.s4 1934713408
    %v3832 = vunpack.c.0.s8 %v3831
    %v3833 = vlaneseq
    %v3834 = vshrl.u32 %v3833, 7
    %v3835 = vsub.s32 %v3832, %v3834
    %v3836 = vrot.slane %v3822, %v3835
    %v3837 = vcombine.low %v3772, %v3788
    %v3838 = vcombine.high %v3772, %v3788
    %v3840 = vunpack.c.l.s4 1934713408
    %v3841 = vunpack.c.0.s8 %v3840
    %v3842 = vlaneseq
    %v3843 = vshrl.u32 %v3842, 7
    %v3844 = vsub.s32 %v3841, %v3843
    %v3845 = vrot.slane %v3837, %v3844
    %v3847 = vunpack.c.l.s4 1934713408
    %v3848 = vunpack.c.0.s8 %v3847
    %v3849 = vlaneseq
    %v3850 = vshrl.u32 %v3849, 7
    %v3851 = vsub.s32 %v3848, %v3850
    %v3852 = vrot.slane %v3838, %v3851
    %v3853 = vcombine.low %v3797, %v3829
    %v3854 = vcombine.high %v3797, %v3829
    %v3855 = vcombine.low %v3804, %v3836
    %v3856 = vcombine.high %v3804, %v3836
    %v3857 = vcombine.low %v3813, %v3845
    %v3858 = vcombine.high %v3813, %v3845
    %v3859 = vcombine.low %v3820, %v3852
    %v3860 = vcombine.high %v3820, %v3852
    %v3861 = vcombine.low %v3194, %v3448
    %v3862 = vcombine.high %v3194, %v3448
    %v3864 = vunpack.c.l.s4 1983009808
    %v3865 = vunpack.c.0.s8 %v3864
    %v3866 = vlaneseq
    %v3867 = vshrl.u32 %v3866, 7
    %v3868 = vsub.s32 %v3865, %v3867
    %v3869 = vrot.slane %v3861, %v3868
    %v3871 = vunpack.c.l.s4 1983009808
    %v3872 = vunpack.c.0.s8 %v3871
    %v3873 = vlaneseq
    %v3874 = vshrl.u32 %v3873, 7
    %v3875 = vsub.s32 %v3872, %v3874
    %v3876 = vrot.slane %v3862, %v3875
    %v3877 = vcombine.low %v3436, %v3460
    %v3878 = vcombine.high %v3436, %v3460
    %v3880 = vunpack.c.l.s4 1983009808
    %v3881 = vunpack.c.0.s8 %v3880
    %v3882 = vlaneseq
    %v3883 = vshrl.u32 %v3882, 7
    %v3884 = vsub.s32 %v3881, %v3883
    %v3885 = vrot.slane %v3877, %v3884
    %v3887 = vunpack.c.l.s4 1983009808
    %v3888 = vunpack.c.0.s8 %v3887
    %v3889 = vlaneseq
    %v3890 = vshrl.u32 %v3889, 7
    %v3891 = vsub.s32 %v3888, %v3890
    %v3892 = vrot.slane %v3878, %v3891
    %v3893 = vcombine.low %v3196, %v3488
    %v3894 = vcombine.high %v3196, %v3488
    %v3896 = vunpack.c.l.s4 1983009808
    %v3897 = vunpack.c.0.s8 %v3896
    %v3898 = vlaneseq
    %v3899 = vshrl.u32 %v3898, 7
    %v3900 = vsub.s32 %v3897, %v3899
    %v3901 = vrot.slane %v3893, %v3900
    %v3903 = vunpack.c.l.s4 1983009808
    %v3904 = vunpack.c.0.s8 %v3903
    %v3905 = vlaneseq
    %v3906 = vshrl.u32 %v3905, 7
    %v3907 = vsub.s32 %v3904, %v3906
    %v3908 = vrot.slane %v3894, %v3907
    %v3909 = vcombine.low %v3476, %v3500
    %v3910 = vcombine.high %v3476, %v3500
    %v3912 = vunpack.c.l.s4 1983009808
    %v3913 = vunpack.c.0.s8 %v3912
    %v3914 = vlaneseq
    %v3915 = vshrl.u32 %v3914, 7
    %v3916 = vsub.s32 %v3913, %v3915
    %v3917 = vrot.slane %v3909, %v3916
    %v3919 = vunpack.c.l.s4 1983009808
    %v3920 = vunpack.c.0.s8 %v3919
    %v3921 = vlaneseq
    %v3922 = vshrl.u32 %v3921, 7
    %v3923 = vsub.s32 %v3920, %v3922
    %v3924 = vrot.slane %v3910, %v3923
    %v3925 = vcombine.low %v3869, %v3885
    %v3926 = vcombine.high %v3869, %v3885
    %v3928 = vunpack.c.l.s4 1934713408
    %v3929 = vunpack.c.0.s8 %v3928
    %v3930 = vlaneseq
    %v3931 = vshrl.u32 %v3930, 7
    %v3932 = vsub.s32 %v3929, %v3931
    %v3933 = vrot.slane %v3925, %v3932
    %v3935 = vunpack.c.l.s4 1934713408
    %v3936 = vunpack.c.0.s8 %v3935
    %v3937 = vlaneseq
    %v3938 = vshrl.u32 %v3937, 7
    %v3939 = vsub.s32 %v3936, %v3938
    %v3940 = vrot.slane %v3926, %v3939
    %v3941 = vcombine.low %v3876, %v3892
    %v3942 = vcombine.high %v3876, %v3892
    %v3944 = vunpack.c.l.s4 1934713408
    %v3945 = vunpack.c.0.s8 %v3944
    %v3946 = vlaneseq
    %v3947 = vshrl.u32 %v3946, 7
    %v3948 = vsub.s32 %v3945, %v3947
    %v3949 = vrot.slane %v3941, %v3948
    %v3951 = vunpack.c.l.s4 1934713408
    %v3952 = vunpack.c.0.s8 %v3951
    %v3953 = vlaneseq
    %v3954 = vshrl.u32 %v3953, 7
    %v3955 = vsub.s32 %v3952, %v3954
    %v3956 = vrot.slane %v3942, %v3955
    %v3957 = vcombine.low %v3901, %v3917
    %v3958 = vcombine.high %v3901, %v3917
    %v3960 = vunpack.c.l.s4 1934713408
    %v3961 = vunpack.c.0.s8 %v3960
    %v3962 = vlaneseq
    %v3963 = vshrl.u32 %v3962, 7
    %v3964 = vsub.s32 %v3961, %v3963
    %v3965 = vrot.slane %v3957, %v3964
    %v3967 = vunpack.c.l.s4 1934713408
    %v3968 = vunpack.c.0.s8 %v3967
    %v3969 = vlaneseq
    %v3970 = vshrl.u32 %v3969, 7
    %v3971 = vsub.s32 %v3968, %v3970
    %v3972 = vrot.slane %v3958, %v3971
    %v3973 = vcombine.low %v3908, %v3924
    %v3974 = vcombine.high %v3908, %v3924
    %v3976 = vunpack.c.l.s4 1934713408
    %v3977 = vunpack.c.0.s8 %v3976
    %v3978 = vlaneseq
    %v3979 = vshrl.u32 %v3978, 7
    %v3980 = vsub.s32 %v3977, %v3979
    %v3981 = vrot.slane %v3973, %v3980
    %v3983 = vunpack.c.l.s4 1934713408
    %v3984 = vunpack.c.0.s8 %v3983
    %v3985 = vlaneseq
    %v3986 = vshrl.u32 %v3985, 7
    %v3987 = vsub.s32 %v3984, %v3986
    %v3988 = vrot.slane %v3974, %v3987
    %v3989 = vcombine.low %v3933, %v3965
    %v3990 = vcombine.high %v3933, %v3965
    %v3991 = vcombine.low %v3940, %v3972
    %v3992 = vcombine.high %v3940, %v3972
    %v3993 = vcombine.low %v3949, %v3981
    %v3994 = vcombine.high %v3949, %v3981
    %v3995 = vcombine.low %v3956, %v3988
    %v3996 = vcombine.high %v3956, %v3988
    %v3997 = vcombine.low %v3271, %v3528
    %v3998 = vcombine.high %v3271, %v3528
    %v4000 = vunpack.c.l.s4 1983009808
    %v4001 = vunpack.c.0.s8 %v4000
    %v4002 = vlaneseq
    %v4003 = vshrl.u32 %v4002, 7
    %v4004 = vsub.s32 %v4001, %v4003
    %v4005 = vrot.slane %v3997, %v4004
    %v4007 = vunpack.c.l.s4 1983009808
    %v4008 = vunpack.c.0.s8 %v4007
    %v4009 = vlaneseq
    %v4010 = vshrl.u32 %v4009, 7
    %v4011 = vsub.s32 %v4008, %v4010
    %v4012 = vrot.slane %v3998, %v4011
    %v4013 = vcombine.low %v3516, %v3540
    %v4014 = vcombine.high %v3516, %v3540
    %v4016 = vunpack.c.l.s4 1983009808
    %v4017 = vunpack.c.0.s8 %v4016
    %v4018 = vlaneseq
    %v4019 = vshrl.u32 %v4018, 7
    %v4020 = vsub.s32 %v4017, %v4019
    %v4021 = vrot.slane %v4013, %v4020
    %v4023 = vunpack.c.l.s4 1983009808
    %v4024 = vunpack.c.0.s8 %v4023
    %v4025 = vlaneseq
    %v4026 = vshrl.u32 %v4025, 7
    %v4027 = vsub.s32 %v4024, %v4026
    %v4028 = vrot.slane %v4014, %v4027
    %v4029 = vcombine.low %v3273, %v3568
    %v4030 = vcombine.high %v3273, %v3568
    %v4032 = vunpack.c.l.s4 1983009808
    %v4033 = vunpack.c.0.s8 %v4032
    %v4034 = vlaneseq
    %v4035 = vshrl.u32 %v4034, 7
    %v4036 = vsub.s32 %v4033, %v4035
    %v4037 = vrot.slane %v4029, %v4036
    %v4039 = vunpack.c.l.s4 1983009808
    %v4040 = vunpack.c.0.s8 %v4039
    %v4041 = vlaneseq
    %v4042 = vshrl.u32 %v4041, 7
    %v4043 = vsub.s32 %v4040, %v4042
    %v4044 = vrot.slane %v4030, %v4043
    %v4045 = vcombine.low %v3556, %v3580
    %v4046 = vcombine.high %v3556, %v3580
    %v4048 = vunpack.c.l.s4 1983009808
    %v4049 = vunpack.c.0.s8 %v4048
    %v4050 = vlaneseq
    %v4051 = vshrl.u32 %v4050, 7
    %v4052 = vsub.s32 %v4049, %v4051
    %v4053 = vrot.slane %v4045, %v4052
    %v4055 = vunpack.c.l.s4 1983009808
    %v4056 = vunpack.c.0.s8 %v4055
    %v4057 = vlaneseq
    %v4058 = vshrl.u32 %v4057, 7
    %v4059 = vsub.s32 %v4056, %v4058
    %v4060 = vrot.slane %v4046, %v4059
    %v4061 = vcombine.low %v4005, %v4021
    %v4062 = vcombine.high %v4005, %v4021
    %v4064 = vunpack.c.l.s4 1934713408
    %v4065 = vunpack.c.0.s8 %v4064
    %v4066 = vlaneseq
    %v4067 = vshrl.u32 %v4066, 7
    %v4068 = vsub.s32 %v4065, %v4067
    %v4069 = vrot.slane %v4061, %v4068
    %v4071 = vunpack.c.l.s4 1934713408
    %v4072 = vunpack.c.0.s8 %v4071
    %v4073 = vlaneseq
    %v4074 = vshrl.u32 %v4073, 7
    %v4075 = vsub.s32 %v4072, %v4074
    %v4076 = vrot.slane %v4062, %v4075
    %v4077 = vcombine.low %v4012, %v4028
    %v4078 = vcombine.high %v4012, %v4028
    %v4080 = vunpack.c.l.s4 1934713408
    %v4081 = vunpack.c.0.s8 %v4080
    %v4082 = vlaneseq
    %v4083 = vshrl.u32 %v4082, 7
    %v4084 = vsub.s32 %v4081, %v4083
    %v4085 = vrot.slane %v4077, %v4084
    %v4087 = vunpack.c.l.s4 1934713408
    %v4088 = vunpack.c.0.s8 %v4087
    %v4089 = vlaneseq
    %v4090 = vshrl.u32 %v4089, 7
    %v4091 = vsub.s32 %v4088, %v4090
    %v4092 = vrot.slane %v4078, %v4091
    %v4093 = vcombine.low %v4037, %v4053
    %v4094 = vcombine.high %v4037, %v4053
    %v4096 = vunpack.c.l.s4 1934713408
    %v4097 = vunpack.c.0.s8 %v4096
    %v4098 = vlaneseq
    %v4099 = vshrl.u32 %v4098, 7
    %v4100 = vsub.s32 %v4097, %v4099
    %v4101 = vrot.slane %v4093, %v4100
    %v4103 = vunpack.c.l.s4 1934713408
    %v4104 = vunpack.c.0.s8 %v4103
    %v4105 = vlaneseq
    %v4106 = vshrl.u32 %v4105, 7
    %v4107 = vsub.s32 %v4104, %v4106
    %v4108 = vrot.slane %v4094, %v4107
    %v4109 = vcombine.low %v4044, %v4060
    %v4110 = vcombine.high %v4044, %v4060
    %v4112 = vunpack.c.l.s4 1934713408
    %v4113 = vunpack.c.0.s8 %v4112
    %v4114 = vlaneseq
    %v4115 = vshrl.u32 %v4114, 7
    %v4116 = vsub.s32 %v4113, %v4115
    %v4117 = vrot.slane %v4109, %v4116
    %v4119 = vunpack.c.l.s4 1934713408
    %v4120 = vunpack.c.0.s8 %v4119
    %v4121 = vlaneseq
    %v4122 = vshrl.u32 %v4121, 7
    %v4123 = vsub.s32 %v4120, %v4122
    %v4124 = vrot.slane %v4110, %v4123
    %v4125 = vcombine.low %v4069, %v4101
    %v4126 = vcombine.high %v4069, %v4101
    %v4127 = vcombine.low %v4076, %v4108
    %v4128 = vcombine.high %v4076, %v4108
    %v4129 = vcombine.low %v4085, %v4117
    %v4130 = vcombine.high %v4085, %v4117
    %v4131 = vcombine.low %v4092, %v4124
    %v4132 = vcombine.high %v4092, %v4124
    %v4133 = vcombine.low %v3342, %v3450
    %v4134 = vcombine.high %v3342, %v3450
    %v4136 = vunpack.c.l.s4 1983009808
    %v4137 = vunpack.c.0.s8 %v4136
    %v4138 = vlaneseq
    %v4139 = vshrl.u32 %v4138, 7
    %v4140 = vsub.s32 %v4137, %v4139
    %v4141 = vrot.slane %v4133, %v4140
    %v4143 = vunpack.c.l.s4 1983009808
    %v4144 = vunpack.c.0.s8 %v4143
    %v4145 = vlaneseq
    %v4146 = vshrl.u32 %v4145, 7
    %v4147 = vsub.s32 %v4144, %v4146
    %v4148 = vrot.slane %v4134, %v4147
    %v4149 = vcombine.low %v3438, %v3462
    %v4150 = vcombine.high %v3438, %v3462
    %v4152 = vunpack.c.l.s4 1983009808
    %v4153 = vunpack.c.0.s8 %v4152
    %v4154 = vlaneseq
    %v4155 = vshrl.u32 %v4154, 7
    %v4156 = vsub.s32 %v4153, %v4155
    %v4157 = vrot.slane %v4149, %v4156
    %v4159 = vunpack.c.l.s4 1983009808
    %v4160 = vunpack.c.0.s8 %v4159
    %v4161 = vlaneseq
    %v4162 = vshrl.u32 %v4161, 7
    %v4163 = vsub.s32 %v4160, %v4162
    %v4164 = vrot.slane %v4150, %v4163
    %v4165 = vcombine.low %v3344, %v3490
    %v4166 = vcombine.high %v3344, %v3490
    %v4168 = vunpack.c.l.s4 1983009808
    %v4169 = vunpack.c.0.s8 %v4168
    %v4170 = vlaneseq
    %v4171 = vshrl.u32 %v4170, 7
    %v4172 = vsub.s32 %v4169, %v4171
    %v4173 = vrot.slane %v4165, %v4172
    %v4175 = vunpack.c.l.s4 1983009808
    %v4176 = vunpack.c.0.s8 %v4175
    %v4177 = vlaneseq
    %v4178 = vshrl.u32 %v4177, 7
    %v4179 = vsub.s32 %v4176, %v4178
    %v4180 = vrot.slane %v4166, %v4179
    %v4181 = vcombine.low %v3478, %v3502
    %v4182 = vcombine.high %v3478, %v3502
    %v4184 = vunpack.c.l.s4 1983009808
    %v4185 = vunpack.c.0.s8 %v4184
    %v4186 = vlaneseq
    %v4187 = vshrl.u32 %v4186, 7
    %v4188 = vsub.s32 %v4185, %v4187
    %v4189 = vrot.slane %v4181, %v4188
    %v4191 = vunpack.c.l.s4 1983009808
    %v4192 = vunpack.c.0.s8 %v4191
    %v4193 = vlaneseq
    %v4194 = vshrl.u32 %v4193, 7
    %v4195 = vsub.s32 %v4192, %v4194
    %v4196 = vrot.slane %v4182, %v4195
    %v4197 = vcombine.low %v4141, %v4157
    %v4198 = vcombine.high %v4141, %v4157
    %v4200 = vunpack.c.l.s4 1934713408
    %v4201 = vunpack.c.0.s8 %v4200
    %v4202 = vlaneseq
    %v4203 = vshrl.u32 %v4202, 7
    %v4204 = vsub.s32 %v4201, %v4203
    %v4205 = vrot.slane %v4197, %v4204
    %v4207 = vunpack.c.l.s4 1934713408
    %v4208 = vunpack.c.0.s8 %v4207
    %v4209 = vlaneseq
    %v4210 = vshrl.u32 %v4209, 7
    %v4211 = vsub.s32 %v4208, %v4210
    %v4212 = vrot.slane %v4198, %v4211
    %v4213 = vcombine.low %v4148, %v4164
    %v4214 = vcombine.high %v4148, %v4164
    %v4216 = vunpack.c.l.s4 1934713408
    %v4217 = vunpack.c.0.s8 %v4216
    %v4218 = vlaneseq
    %v4219 = vshrl.u32 %v4218, 7
    %v4220 = vsub.s32 %v4217, %v4219
    %v4221 = vrot.slane %v4213, %v4220
    %v4223 = vunpack.c.l.s4 1934713408
    %v4224 = vunpack.c.0.s8 %v4223
    %v4225 = vlaneseq
    %v4226 = vshrl.u32 %v4225, 7
    %v4227 = vsub.s32 %v4224, %v4226
    %v4228 = vrot.slane %v4214, %v4227
    %v4229 = vcombine.low %v4173, %v4189
    %v4230 = vcombine.high %v4173, %v4189
    %v4232 = vunpack.c.l.s4 1934713408
    %v4233 = vunpack.c.0.s8 %v4232
    %v4234 = vlaneseq
    %v4235 = vshrl.u32 %v4234, 7
    %v4236 = vsub.s32 %v4233, %v4235
    %v4237 = vrot.slane %v4229, %v4236
    %v4239 = vunpack.c.l.s4 1934713408
    %v4240 = vunpack.c.0.s8 %v4239
    %v4241 = vlaneseq
    %v4242 = vshrl.u32 %v4241, 7
    %v4243 = vsub.s32 %v4240, %v4242
    %v4244 = vrot.slane %v4230, %v4243
    %v4245 = vcombine.low %v4180, %v4196
    %v4246 = vcombine.high %v4180, %v4196
    %v4248 = vunpack.c.l.s4 1934713408
    %v4249 = vunpack.c.0.s8 %v4248
    %v4250 = vlaneseq
    %v4251 = vshrl.u32 %v4250, 7
    %v4252 = vsub.s32 %v4249, %v4251
    %v4253 = vrot.slane %v4245, %v4252
    %v4255 = vunpack.c.l.s4 1934713408
    %v4256 = vunpack.c.0.s8 %v4255
    %v4257 = vlaneseq
    %v4258 = vshrl.u32 %v4257, 7
    %v4259 = vsub.s32 %v4256, %v4258
    %v4260 = vrot.slane %v4246, %v4259
    %v4261 = vcombine.low %v4205, %v4237
    %v4262 = vcombine.high %v4205, %v4237
    %v4263 = vcombine.low %v4212, %v4244
    %v4264 = vcombine.high %v4212, %v4244
    %v4265 = vcombine.low %v4221, %v4253
    %v4266 = vcombine.high %v4221, %v4253
    %v4267 = vcombine.low %v4228, %v4260
    %v4268 = vcombine.high %v4228, %v4260
    %v4269 = vcombine.low %v3419, %v3530
    %v4270 = vcombine.high %v3419, %v3530
    %v4272 = vunpack.c.l.s4 1983009808
    %v4273 = vunpack.c.0.s8 %v4272
    %v4274 = vlaneseq
    %v4275 = vshrl.u32 %v4274, 7
    %v4276 = vsub.s32 %v4273, %v4275
    %v4277 = vrot.slane %v4269, %v4276
    %v4279 = vunpack.c.l.s4 1983009808
    %v4280 = vunpack.c.0.s8 %v4279
    %v4281 = vlaneseq
    %v4282 = vshrl.u32 %v4281, 7
    %v4283 = vsub.s32 %v4280, %v4282
    %v4284 = vrot.slane %v4270, %v4283
    %v4285 = vcombine.low %v3518, %v3542
    %v4286 = vcombine.high %v3518, %v3542
    %v4288 = vunpack.c.l.s4 1983009808
    %v4289 = vunpack.c.0.s8 %v4288
    %v4290 = vlaneseq
    %v4291 = vshrl.u32 %v4290, 7
    %v4292 = vsub.s32 %v4289, %v4291
    %v4293 = vrot.slane %v4285, %v4292
    %v4295 = vunpack.c.l.s4 1983009808
    %v4296 = vunpack.c.0.s8 %v4295
    %v4297 = vlaneseq
    %v4298 = vshrl.u32 %v4297, 7
    %v4299 = vsub.s32 %v4296, %v4298
    %v4300 = vrot.slane %v4286, %v4299
    %v4301 = vcombine.low %v3421, %v3570
    %v4302 = vcombine.high %v3421, %v3570
    %v4304 = vunpack.c.l.s4 1983009808
    %v4305 = vunpack.c.0.s8 %v4304
    %v4306 = vlaneseq
    %v4307 = vshrl.u32 %v4306, 7
    %v4308 = vsub.s32 %v4305, %v4307
    %v4309 = vrot.slane %v4301, %v4308
    %v4311 = vunpack.c.l.s4 1983009808
    %v4312 = vunpack.c.0.s8 %v4311
    %v4313 = vlaneseq
    %v4314 = vshrl.u32 %v4313, 7
    %v4315 = vsub.s32 %v4312, %v4314
    %v4316 = vrot.slane %v4302, %v4315
    %v4317 = vcombine.low %v3558, %v3582
    %v4318 = vcombine.high %v3558, %v3582
    %v4320 = vunpack.c.l.s4 1983009808
    %v4321 = vunpack.c.0.s8 %v4320
    %v4322 = vlaneseq
    %v4323 = vshrl.u32 %v4322, 7
    %v4324 = vsub.s32 %v4321, %v4323
    %v4325 = vrot.slane %v4317, %v4324
    %v4327 = vunpack.c.l.s4 1983009808
    %v4328 = vunpack.c.0.s8 %v4327
    %v4329 = vlaneseq
    %v4330 = vshrl.u32 %v4329, 7
    %v4331 = vsub.s32 %v4328, %v4330
    %v4332 = vrot.slane %v4318, %v4331
    %v4333 = vcombine.low %v4277, %v4293
    %v4334 = vcombine.high %v4277, %v4293
    %v4336 = vunpack.c.l.s4 1934713408
    %v4337 = vunpack.c.0.s8 %v4336
    %v4338 = vlaneseq
    %v4339 = vshrl.u32 %v4338, 7
    %v4340 = vsub.s32 %v4337, %v4339
    %v4341 = vrot.slane %v4333, %v4340
    %v4343 = vunpack.c.l.s4 1934713408
    %v4344 = vunpack.c.0.s8 %v4343
    %v4345 = vlaneseq
    %v4346 = vshrl.u32 %v4345, 7
    %v4347 = vsub.s32 %v4344, %v4346
    %v4348 = vrot.slane %v4334, %v4347
    %v4349 = vcombine.low %v4284, %v4300
    %v4350 = vcombine.high %v4284, %v4300
    %v4352 = vunpack.c.l.s4 1934713408
    %v4353 = vunpack.c.0.s8 %v4352
    %v4354 = vlaneseq
    %v4355 = vshrl.u32 %v4354, 7
    %v4356 = vsub.s32 %v4353, %v4355
    %v4357 = vrot.slane %v4349, %v4356
    %v4359 = vunpack.c.l.s4 1934713408
    %v4360 = vunpack.c.0.s8 %v4359
    %v4361 = vlaneseq
    %v4362 = vshrl.u32 %v4361, 7
    %v4363 = vsub.s32 %v4360, %v4362
    %v4364 = vrot.slane %v4350, %v4363
    %v4365 = vcombine.low %v4309, %v4325
    %v4366 = vcombine.high %v4309, %v4325
    %v4368 = vunpack.c.l.s4 1934713408
    %v4369 = vunpack.c.0.s8 %v4368
    %v4370 = vlaneseq
    %v4371 = vshrl.u32 %v4370, 7
    %v4372 = vsub.s32 %v4369, %v4371
    %v4373 = vrot.slane %v4365, %v4372
    %v4375 = vunpack.c.l.s4 1934713408
    %v4376 = vunpack.c.0.s8 %v4375
    %v4377 = vlaneseq
    %v4378 = vshrl.u32 %v4377, 7
    %v4379 = vsub.s32 %v4376, %v4378
    %v4380 = vrot.slane %v4366, %v4379
    %v4381 = vcombine.low %v4316, %v4332
    %v4382 = vcombine.high %v4316, %v4332
    %v4384 = vunpack.c.l.s4 1934713408
    %v4385 = vunpack.c.0.s8 %v4384
    %v4386 = vlaneseq
    %v4387 = vshrl.u32 %v4386, 7
    %v4388 = vsub.s32 %v4385, %v4387
    %v4389 = vrot.slane %v4381, %v4388
    %v4391 = vunpack.c.l.s4 1934713408
    %v4392 = vunpack.c.0.s8 %v4391
    %v4393 = vlaneseq
    %v4394 = vshrl.u32 %v4393, 7
    %v4395 = vsub.s32 %v4392, %v4394
    %v4396 = vrot.slane %v4382, %v4395
    %v4397 = vcombine.low %v4341, %v4373
    %v4398 = vcombine.high %v4341, %v4373
    %v4399 = vcombine.low %v4348, %v4380
    %v4400 = vcombine.high %v4348, %v4380
    %v4401 = vcombine.low %v4357, %v4389
    %v4402 = vcombine.high %v4357, %v4389
    %v4403 = vcombine.low %v4364, %v4396
    %v4404 = vcombine.high %v4364, %v4396
    %v4405 = vcombine.low %v3348, %v3452
    %v4406 = vcombine.high %v3348, %v3452
    %v4408 = vunpack.c.l.s4 1983009808
    %v4409 = vunpack.c.0.s8 %v4408
    %v4410 = vlaneseq
    %v4411 = vshrl.u32 %v4410, 7
    %v4412 = vsub.s32 %v4409, %v4411
    %v4413 = vrot.slane %v4405, %v4412
    %v4415 = vunpack.c.l.s4 1983009808
    %v4416 = vunpack.c.0.s8 %v4415
    %v4417 = vlaneseq
    %v4418 = vshrl.u32 %v4417, 7
    %v4419 = vsub.s32 %v4416, %v4418
    %v4420 = vrot.slane %v4406, %v4419
    %v4421 = vcombine.low %v3440, %v3464
    %v4422 = vcombine.high %v3440, %v3464
    %v4424 = vunpack.c.l.s4 1983009808
    %v4425 = vunpack.c.0.s8 %v4424
    %v4426 = vlaneseq
    %v4427 = vshrl.u32 %v4426, 7
    %v4428 = vsub.s32 %v4425, %v4427
    %v4429 = vrot.slane %v4421, %v4428
    %v4431 = vunpack.c.l.s4 1983009808
    %v4432 = vunpack.c.0.s8 %v4431
    %v4433 = vlaneseq
    %v4434 = vshrl.u32 %v4433, 7
    %v4435 = vsub.s32 %v4432, %v4434
    %v4436 = vrot.slane %v4422, %v4435
    %v4437 = vcombine.low %v3350, %v3492
    %v4438 = vcombine.high %v3350, %v3492
    %v4440 = vunpack.c.l.s4 1983009808
    %v4441 = vunpack.c.0.s8 %v4440
    %v4442 = vlaneseq
    %v4443 = vshrl.u32 %v4442, 7
    %v4444 = vsub.s32 %v4441, %v4443
    %v4445 = vrot.slane %v4437, %v4444
    %v4447 = vunpack.c.l.s4 1983009808
    %v4448 = vunpack.c.0.s8 %v4447
    %v4449 = vlaneseq
    %v4450 = vshrl.u32 %v4449, 7
    %v4451 = vsub.s32 %v4448, %v4450
    %v4452 = vrot.slane %v4438, %v4451
    %v4453 = vcombine.low %v3480, %v3504
    %v4454 = vcombine.high %v3480, %v3504
    %v4456 = vunpack.c.l.s4 1983009808
    %v4457 = vunpack.c.0.s8 %v4456
    %v4458 = vlaneseq
    %v4459 = vshrl.u32 %v4458, 7
    %v4460 = vsub.s32 %v4457, %v4459
    %v4461 = vrot.slane %v4453, %v4460
    %v4463 = vunpack.c.l.s4 1983009808
    %v4464 = vunpack.c.0.s8 %v4463
    %v4465 = vlaneseq
    %v4466 = vshrl.u32 %v4465, 7
    %v4467 = vsub.s32 %v4464, %v4466
    %v4468 = vrot.slane %v4454, %v4467
    %v4469 = vcombine.low %v4413, %v4429
    %v4470 = vcombine.high %v4413, %v4429
    %v4472 = vunpack.c.l.s4 1934713408
    %v4473 = vunpack.c.0.s8 %v4472
    %v4474 = vlaneseq
    %v4475 = vshrl.u32 %v4474, 7
    %v4476 = vsub.s32 %v4473, %v4475
    %v4477 = vrot.slane %v4469, %v4476
    %v4479 = vunpack.c.l.s4 1934713408
    %v4480 = vunpack.c.0.s8 %v4479
    %v4481 = vlaneseq
    %v4482 = vshrl.u32 %v4481, 7
    %v4483 = vsub.s32 %v4480, %v4482
    %v4484 = vrot.slane %v4470, %v4483
    %v4485 = vcombine.low %v4420, %v4436
    %v4486 = vcombine.high %v4420, %v4436
    %v4488 = vunpack.c.l.s4 1934713408
    %v4489 = vunpack.c.0.s8 %v4488
    %v4490 = vlaneseq
    %v4491 = vshrl.u32 %v4490, 7
    %v4492 = vsub.s32 %v4489, %v4491
    %v4493 = vrot.slane %v4485, %v4492
    %v4495 = vunpack.c.l.s4 1934713408
    %v4496 = vunpack.c.0.s8 %v4495
    %v4497 = vlaneseq
    %v4498 = vshrl.u32 %v4497, 7
    %v4499 = vsub.s32 %v4496, %v4498
    %v4500 = vrot.slane %v4486, %v4499
    %v4501 = vcombine.low %v4445, %v4461
    %v4502 = vcombine.high %v4445, %v4461
    %v4504 = vunpack.c.l.s4 1934713408
    %v4505 = vunpack.c.0.s8 %v4504
    %v4506 = vlaneseq
    %v4507 = vshrl.u32 %v4506, 7
    %v4508 = vsub.s32 %v4505, %v4507
    %v4509 = vrot.slane %v4501, %v4508
    %v4511 = vunpack.c.l.s4 1934713408
    %v4512 = vunpack.c.0.s8 %v4511
    %v4513 = vlaneseq
    %v4514 = vshrl.u32 %v4513, 7
    %v4515 = vsub.s32 %v4512, %v4514
    %v4516 = vrot.slane %v4502, %v4515
    %v4517 = vcombine.low %v4452, %v4468
    %v4518 = vcombine.high %v4452, %v4468
    %v4520 = vunpack.c.l.s4 1934713408
    %v4521 = vunpack.c.0.s8 %v4520
    %v4522 = vlaneseq
    %v4523 = vshrl.u32 %v4522, 7
    %v4524 = vsub.s32 %v4521, %v4523
    %v4525 = vrot.slane %v4517, %v4524
    %v4527 = vunpack.c.l.s4 1934713408
    %v4528 = vunpack.c.0.s8 %v4527
    %v4529 = vlaneseq
    %v4530 = vshrl.u32 %v4529, 7
    %v4531 = vsub.s32 %v4528, %v4530
    %v4532 = vrot.slane %v4518, %v4531
    %v4533 = vcombine.low %v4477, %v4509
    %v4534 = vcombine.high %v4477, %v4509
    %v4535 = vcombine.low %v4484, %v4516
    %v4536 = vcombine.high %v4484, %v4516
    %v4537 = vcombine.low %v4493, %v4525
    %v4538 = vcombine.high %v4493, %v4525
    %v4539 = vcombine.low %v4500, %v4532
    %v4540 = vcombine.high %v4500, %v4532
    %v4541 = vcombine.low %v3425, %v3532
    %v4542 = vcombine.high %v3425, %v3532
    %v4544 = vunpack.c.l.s4 1983009808
    %v4545 = vunpack.c.0.s8 %v4544
    %v4546 = vlaneseq
    %v4547 = vshrl.u32 %v4546, 7
    %v4548 = vsub.s32 %v4545, %v4547
    %v4549 = vrot.slane %v4541, %v4548
    %v4551 = vunpack.c.l.s4 1983009808
    %v4552 = vunpack.c.0.s8 %v4551
    %v4553 = vlaneseq
    %v4554 = vshrl.u32 %v4553, 7
    %v4555 = vsub.s32 %v4552, %v4554
    %v4556 = vrot.slane %v4542, %v4555
    %v4557 = vcombine.low %v3520, %v3544
    %v4558 = vcombine.high %v3520, %v3544
    %v4560 = vunpack.c.l.s4 1983009808
    %v4561 = vunpack.c.0.s8 %v4560
    %v4562 = vlaneseq
    %v4563 = vshrl.u32 %v4562, 7
    %v4564 = vsub.s32 %v4561, %v4563
    %v4565 = vrot.slane %v4557, %v4564
    %v4567 = vunpack.c.l.s4 1983009808
    %v4568 = vunpack.c.0.s8 %v4567
    %v4569 = vlaneseq
    %v4570 = vshrl.u32 %v4569, 7
    %v4571 = vsub.s32 %v4568, %v4570
    %v4572 = vrot.slane %v4558, %v4571
    %v4573 = vcombine.low %v3427, %v3572
    %v4574 = vcombine.high %v3427, %v3572
    %v4576 = vunpack.c.l.s4 1983009808
    %v4577 = vunpack.c.0.s8 %v4576
    %v4578 = vlaneseq
    %v4579 = vshrl.u32 %v4578, 7
    %v4580 = vsub.s32 %v4577, %v4579
    %v4581 = vrot.slane %v4573, %v4580
    %v4583 = vunpack.c.l.s4 1983009808
    %v4584 = vunpack.c.0.s8 %v4583
    %v4585 = vlaneseq
    %v4586 = vshrl.u32 %v4585, 7
    %v4587 = vsub.s32 %v4584, %v4586
    %v4588 = vrot.slane %v4574, %v4587
    %v4589 = vcombine.low %v3560, %v3584
    %v4590 = vcombine.high %v3560, %v3584
    %v4592 = vunpack.c.l.s4 1983009808
    %v4593 = vunpack.c.0.s8 %v4592
    %v4594 = vlaneseq
    %v4595 = vshrl.u32 %v4594, 7
    %v4596 = vsub.s32 %v4593, %v4595
    %v4597 = vrot.slane %v4589, %v4596
    %v4599 = vunpack.c.l.s4 1983009808
    %v4600 = vunpack.c.0.s8 %v4599
    %v4601 = vlaneseq
    %v4602 = vshrl.u32 %v4601, 7
    %v4603 = vsub.s32 %v4600, %v4602
    %v4604 = vrot.slane %v4590, %v4603
    %v4605 = vcombine.low %v4549, %v4565
    %v4606 = vcombine.high %v4549, %v4565
    %v4608 = vunpack.c.l.s4 1934713408
    %v4609 = vunpack.c.0.s8 %v4608
    %v4610 = vlaneseq
    %v4611 = vshrl.u32 %v4610, 7
    %v4612 = vsub.s32 %v4609, %v4611
    %v4613 = vrot.slane %v4605, %v4612
    %v4615 = vunpack.c.l.s4 1934713408
    %v4616 = vunpack.c.0.s8 %v4615
    %v4617 = vlaneseq
    %v4618 = vshrl.u32 %v4617, 7
    %v4619 = vsub.s32 %v4616, %v4618
    %v4620 = vrot.slane %v4606, %v4619
    %v4621 = vcombine.low %v4556, %v4572
    %v4622 = vcombine.high %v4556, %v4572
    %v4624 = vunpack.c.l.s4 1934713408
    %v4625 = vunpack.c.0.s8 %v4624
    %v4626 = vlaneseq
    %v4627 = vshrl.u32 %v4626, 7
    %v4628 = vsub.s32 %v4625, %v4627
    %v4629 = vrot.slane %v4621, %v4628
    %v4631 = vunpack.c.l.s4 1934713408
    %v4632 = vunpack.c.0.s8 %v4631
    %v4633 = vlaneseq
    %v4634 = vshrl.u32 %v4633, 7
    %v4635 = vsub.s32 %v4632, %v4634
    %v4636 = vrot.slane %v4622, %v4635
    %v4637 = vcombine.low %v4581, %v4597
    %v4638 = vcombine.high %v4581, %v4597
    %v4640 = vunpack.c.l.s4 1934713408
    %v4641 = vunpack.c.0.s8 %v4640
    %v4642 = vlaneseq
    %v4643 = vshrl.u32 %v4642, 7
    %v4644 = vsub.s32 %v4641, %v4643
    %v4645 = vrot.slane %v4637, %v4644
    %v4647 = vunpack.c.l.s4 1934713408
    %v4648 = vunpack.c.0.s8 %v4647
    %v4649 = vlaneseq
    %v4650 = vshrl.u32 %v4649, 7
    %v4651 = vsub.s32 %v4648, %v4650
    %v4652 = vrot.slane %v4638, %v4651
    %v4653 = vcombine.low %v4588, %v4604
    %v4654 = vcombine.high %v4588, %v4604
    %v4656 = vunpack.c.l.s4 1934713408
    %v4657 = vunpack.c.0.s8 %v4656
    %v4658 = vlaneseq
    %v4659 = vshrl.u32 %v4658, 7
    %v4660 = vsub.s32 %v4657, %v4659
    %v4661 = vrot.slane %v4653, %v4660
    %v4663 = vunpack.c.l.s4 1934713408
    %v4664 = vunpack.c.0.s8 %v4663
    %v4665 = vlaneseq
    %v4666 = vshrl.u32 %v4665, 7
    %v4667 = vsub.s32 %v4664, %v4666
    %v4668 = vrot.slane %v4654, %v4667
    %v4669 = vcombine.low %v4613, %v4645
    %v4670 = vcombine.high %v4613, %v4645
    %v4671 = vcombine.low %v4620, %v4652
    %v4672 = vcombine.high %v4620, %v4652
    %v4673 = vcombine.low %v4629, %v4661
    %v4674 = vcombine.high %v4629, %v4661
    %v4675 = vcombine.low %v4636, %v4668
    %v4676 = vcombine.high %v4636, %v4668
    %4677 = vst.msk [vmem:[#allocation2] sm:$0xff] %vm557, %v3717
    %4678 = vst.msk [vmem:[#allocation2 + $0x8] sm:$0xff] %vm557, %v3853
    %4679 = vst.msk [vmem:[#allocation2 + $0x10] sm:$0xff] %vm557, %v3718
    %4680 = vst.msk [vmem:[#allocation2 + $0x18] sm:$0xff] %vm557, %v3854
    %4681 = vst.msk [vmem:[#allocation2 + $0x20] sm:$0xff] %vm557, %v3719
    %4682 = vst.msk [vmem:[#allocation2 + $0x28] sm:$0xff] %vm557, %v3855
    %4683 = vst.msk [vmem:[#allocation2 + $0x30] sm:$0xff] %vm557, %v3720
    %4684 = vst.msk [vmem:[#allocation2 + $0x38] sm:$0xff] %vm557, %v3856
    %4685 = vst.msk [vmem:[#allocation2 + $0x40] sm:$0xff] %vm557, %v3721
    %4686 = vst.msk [vmem:[#allocation2 + $0x48] sm:$0xff] %vm557, %v3857
    %4687 = vst.msk [vmem:[#allocation2 + $0x50] sm:$0xff] %vm557, %v3722
    %4688 = vst.msk [vmem:[#allocation2 + $0x58] sm:$0xff] %vm557, %v3858
    %4689 = vst.msk [vmem:[#allocation2 + $0x60] sm:$0xff] %vm557, %v3723
    %4690 = vst.msk [vmem:[#allocation2 + $0x68] sm:$0xff] %vm557, %v3859
    %4691 = vst.msk [vmem:[#allocation2 + $0x70] sm:$0xff] %vm557, %v3724
    %4692 = vst.msk [vmem:[#allocation2 + $0x78] sm:$0xff] %vm557, %v3860
    %4693 = vst.msk [vmem:[#allocation2 + $0x80] sm:$0xff] %vm557, %v3989
    %4694 = vst.msk [vmem:[#allocation2 + $0x88] sm:$0xff] %vm557, %v4125
    %4695 = vst.msk [vmem:[#allocation2 + $0x90] sm:$0xff] %vm557, %v3990
    %4696 = vst.msk [vmem:[#allocation2 + $0x98] sm:$0xff] %vm557, %v4126
    %4697 = vst.msk [vmem:[#allocation2 + $0xa0] sm:$0xff] %vm557, %v3991
    %4698 = vst.msk [vmem:[#allocation2 + $0xa8] sm:$0xff] %vm557, %v4127
    %4699 = vst.msk [vmem:[#allocation2 + $0xb0] sm:$0xff] %vm557, %v3992
    %4700 = vst.msk [vmem:[#allocation2 + $0xb8] sm:$0xff] %vm557, %v4128
    %4701 = vst.msk [vmem:[#allocation2 + $0xc0] sm:$0xff] %vm557, %v3993
    %4702 = vst.msk [vmem:[#allocation2 + $0xc8] sm:$0xff] %vm557, %v4129
    %4703 = vst.msk [vmem:[#allocation2 + $0xd0] sm:$0xff] %vm557, %v3994
    %4704 = vst.msk [vmem:[#allocation2 + $0xd8] sm:$0xff] %vm557, %v4130
    %4705 = vst.msk [vmem:[#allocation2 + $0xe0] sm:$0xff] %vm557, %v3995
    %4706 = vst.msk [vmem:[#allocation2 + $0xe8] sm:$0xff] %vm557, %v4131
    %4707 = vst.msk [vmem:[#allocation2 + $0xf0] sm:$0xff] %vm557, %v3996
    %4708 = vst.msk [vmem:[#allocation2 + $0xf8] sm:$0xff] %vm557, %v4132
    %4709 = vst.msk [vmem:[#allocation2 + $0x100] sm:$0xff] %vm557, %v4261
    %4710 = vst.msk [vmem:[#allocation2 + $0x108] sm:$0xff] %vm557, %v4397
    %4711 = vst.msk [vmem:[#allocation2 + $0x110] sm:$0xff] %vm557, %v4262
    %4712 = vst.msk [vmem:[#allocation2 + $0x118] sm:$0xff] %vm557, %v4398
    %4713 = vst.msk [vmem:[#allocation2 + $0x120] sm:$0xff] %vm557, %v4263
    %4714 = vst.msk [vmem:[#allocation2 + $0x128] sm:$0xff] %vm557, %v4399
    %4715 = vst.msk [vmem:[#allocation2 + $0x130] sm:$0xff] %vm557, %v4264
    %4716 = vst.msk [vmem:[#allocation2 + $0x138] sm:$0xff] %vm557, %v4400
    %4717 = vst.msk [vmem:[#allocation2 + $0x140] sm:$0xff] %vm557, %v4265
    %4718 = vst.msk [vmem:[#allocation2 + $0x148] sm:$0xff] %vm557, %v4401
    %4719 = vst.msk [vmem:[#allocation2 + $0x150] sm:$0xff] %vm557, %v4266
    %4720 = vst.msk [vmem:[#allocation2 + $0x158] sm:$0xff] %vm557, %v4402
    %4721 = vst.msk [vmem:[#allocation2 + $0x160] sm:$0xff] %vm557, %v4267
    %4722 = vst.msk [vmem:[#allocation2 + $0x168] sm:$0xff] %vm557, %v4403
    %4723 = vst.msk [vmem:[#allocation2 + $0x170] sm:$0xff] %vm557, %v4268
    %4724 = vst.msk [vmem:[#allocation2 + $0x178] sm:$0xff] %vm557, %v4404
    %4725 = vst.msk [vmem:[#allocation2 + $0x180] sm:$0xff] %vm557, %v4533
    %4726 = vst.msk [vmem:[#allocation2 + $0x188] sm:$0xff] %vm557, %v4669
    %4727 = vst.msk [vmem:[#allocation2 + $0x190] sm:$0xff] %vm557, %v4534
    %4728 = vst.msk [vmem:[#allocation2 + $0x198] sm:$0xff] %vm557, %v4670
    %4729 = vst.msk [vmem:[#allocation2 + $0x1a0] sm:$0xff] %vm557, %v4535
    %4730 = vst.msk [vmem:[#allocation2 + $0x1a8] sm:$0xff] %vm557, %v4671
    %4731 = vst.msk [vmem:[#allocation2 + $0x1b0] sm:$0xff] %vm557, %v4536
    %4732 = vst.msk [vmem:[#allocation2 + $0x1b8] sm:$0xff] %vm557, %v4672
    %4733 = vst.msk [vmem:[#allocation2 + $0x1c0] sm:$0xff] %vm557, %v4537
    %4734 = vst.msk [vmem:[#allocation2 + $0x1c8] sm:$0xff] %vm557, %v4673
    %4735 = vst.msk [vmem:[#allocation2 + $0x1d0] sm:$0xff] %vm557, %v4538
    %4736 = vst.msk [vmem:[#allocation2 + $0x1d8] sm:$0xff] %vm557, %v4674
    %4737 = vst.msk [vmem:[#allocation2 + $0x1e0] sm:$0xff] %vm557, %v4539
    %4738 = vst.msk [vmem:[#allocation2 + $0x1e8] sm:$0xff] %vm557, %v4675
    %4739 = vst.msk [vmem:[#allocation2 + $0x1f0] sm:$0xff] %vm557, %v4540
    %4740 = vst.msk [vmem:[#allocation2 + $0x1f8] sm:$0xff] %vm557, %v4676
    // Predicated region
    $region30: #{tpu_custom_call.1} parent=1 // pred_check
      _
    $region31: #{tpu_custom_call.1} parent=1 // pred_check_branch
      %4742 = sbr.rel (0) target = $region33
    $region32: #{tpu_custom_call.1} parent=1 // pred_region
      %s4744 = ssub.s32 8192, 8192
      %4745 = vsyncadd [#allocation3], %s4744
      %s4746 = sshll.u32 [#allocation2], 4
      %s4747 = int_to_ptr.vmem [resolvable:$true] %s4746
      %4752 = dma.vmem_to_hbm [thread:$0]  %s4747, 8192, %s7, [#allocation3], 128, 128, 8
    $region33: #{tpu_custom_call.1} parent=1 // pred_fallthru
      _
    // Predicated region
    $region34: #{tpu_custom_call.1} parent=1 // pred_check
      _
    $region35: #{tpu_custom_call.1} parent=1 // pred_check_branch
      %4754 = sbr.rel (0) target = $region37
    $region36: #{tpu_custom_call.1} parent=1 // pred_region
      %4755 = dma.done [#allocation3], 8192
    $region37: #{tpu_custom_call.1} parent=1 // pred_fallthru
      _
    %4756 = vsyncpa [#allocation3], 1

</llo_original>
